<compile_context>
chip_gen: v7x
topology: tpu7x:2x2x1
jax: 0.10.0
libtpu: 0.0.40
codegen_flags: <defaults>
</compile_context>

<pallas_src>
import jax
import jax.numpy as jnp
import numpy as np
from jax import lax
from jax.experimental import pallas as pl
from jax.experimental.pallas import tpu as pltpu

jax.config.update("jax_default_matmul_precision", "highest")

BN_EPS = 1e-5
NEG_SLOPE = 0.2
DEFAULT_TILE_N = 512   # lanes per tile; small per-step VMEM (<0.5 MiB) -> safe on v5e/v6e/v7x


# ----------------------------------------------------------------------------
# Kernel A: grouped conv (block-diag matmul) + per-tile BN partial statistics
# ----------------------------------------------------------------------------
def _conv_stats_kernel(w_ref, p_ref, acc_ref, sum_ref, sq_ref):
    # (Cout, K) @ (K, TILE_N) -> (Cout, TILE_N); lane dim = spatial, fully dense.
    acc = jnp.dot(w_ref[...], p_ref[...], preferred_element_type=jnp.float32)
    acc_ref[...] = acc
    # Per-channel partial sums for BatchNorm batch statistics (zero-padded columns of the
    # patches contribute exactly zero, so padding never pollutes the stats).
    sum_ref[0, :, :] = jnp.sum(acc, axis=1, keepdims=True)
    sq_ref[0, :, :] = jnp.sum(acc * acc, axis=1, keepdims=True)


# ----------------------------------------------------------------------------
# Kernel B: folded BN (scale/shift) + LeakyReLU (+ fused resized-residual add)
# ----------------------------------------------------------------------------
def _apply_kernel(acc_ref, sc_ref, sh_ref, out_ref):
    y = acc_ref[...] * sc_ref[...] + sh_ref[...]
    out_ref[...] = jnp.where(y >= 0.0, y, NEG_SLOPE * y)


def _apply_res_kernel(acc_ref, sc_ref, sh_ref, res_ref, out_ref):
    y = acc_ref[...] * sc_ref[...] + sh_ref[...]
    y = jnp.where(y >= 0.0, y, NEG_SLOPE * y)
    out_ref[...] = y + res_ref[...]


# ----------------------------------------------------------------------------
# Stage driver: two tiled pallas_calls + tiny stats-finalize glue
# ----------------------------------------------------------------------------
def _round_up(n, m):
    return ((n + m - 1) // m) * m


def _pad_last(a, mult):
    pad = (-a.shape[-1]) % mult
    if pad:
        a = jnp.pad(a, [(0, 0)] * (a.ndim - 1) + [(0, pad)])
    return a


def conv_bn_lrelu_stage(patches_t, w_t, gamma, beta, *, res_t=None,
                        tile_n=DEFAULT_TILE_N):
    """One conv+bn+lrelu(+residual) stage.

    patches_t: (K, N) im2col patches, K = Cin*9 (rows: channel-major, then kh, kw),
               columns in (b, h, w) order.
    w_t:       (Cout, K) block-diagonal grouped-conv weight.
    res_t:     optional (Cout, N) bilinearly-resized residual to add after BN+LeakyReLU.
    Returns (Cout, N).
    """
    Cout, K = w_t.shape
    n_valid = patches_t.shape[1]
    tile_n = min(tile_n, _round_up(n_valid, 128))
    patches_p = _pad_last(patches_t, tile_n)               # zero-padded lanes
    n_pad = patches_p.shape[1]
    nt = n_pad // tile_n

    parallel = pltpu.CompilerParams(dimension_semantics=("parallel",))

    # ---- pass 1: conv + partial per-channel stats -------------------------------
    acc, sums, sqs = pl.pallas_call(
        _conv_stats_kernel,
        out_shape=(jax.ShapeDtypeStruct((Cout, n_pad), jnp.float32),
                   jax.ShapeDtypeStruct((nt, Cout, 1), jnp.float32),
                   jax.ShapeDtypeStruct((nt, Cout, 1), jnp.float32)),
        grid=(nt,),
        in_specs=[pl.BlockSpec((Cout, K), lambda i: (0, 0)),      # weights resident
                  pl.BlockSpec((K, tile_n), lambda i: (0, i))],
        out_specs=(pl.BlockSpec((Cout, tile_n), lambda i: (0, i)),
                   pl.BlockSpec((1, Cout, 1), lambda i: (i, 0, 0)),
                   pl.BlockSpec((1, Cout, 1), lambda i: (i, 0, 0))),
        compiler_params=parallel,
    )(w_t, patches_p)

    # ---- BN finalize (tiny, plain JAX). Conv bias is exactly cancelled by the mean
    # subtraction of training-mode BN, so it is dropped entirely. -------------------
    s = jnp.sum(sums[:, :, 0], axis=0)                      # (Cout,)
    sq = jnp.sum(sqs[:, :, 0], axis=0)                      # (Cout,)
    mean = s / n_valid
    var = jnp.maximum(sq / n_valid - mean * mean, 0.0)      # biased batch variance
    scale = (gamma * lax.rsqrt(var + BN_EPS)).reshape(Cout, 1).astype(jnp.float32)
    shift = (beta - mean * gamma * lax.rsqrt(var + BN_EPS)).reshape(Cout, 1) \
        .astype(jnp.float32)

    # ---- pass 2: apply scale/shift + LeakyReLU (+ residual) ----------------------
    if res_t is None:
        kern = _apply_kernel
        args = (acc, scale, shift)
        in_specs = [pl.BlockSpec((Cout, tile_n), lambda i: (0, i)),
                    pl.BlockSpec((Cout, 1), lambda i: (0, 0)),
                    pl.BlockSpec((Cout, 1), lambda i: (0, 0))]
    else:
        kern = _apply_res_kernel
        res_p = _pad_last(res_t, tile_n)
        args = (acc, scale, shift, res_p)
        in_specs = [pl.BlockSpec((Cout, tile_n), lambda i: (0, i)),
                    pl.BlockSpec((Cout, 1), lambda i: (0, 0)),
                    pl.BlockSpec((Cout, 1), lambda i: (0, 0)),
                    pl.BlockSpec((Cout, tile_n), lambda i: (0, i))]

    y = pl.pallas_call(
        kern,
        out_shape=jax.ShapeDtypeStruct((Cout, n_pad), jnp.float32),
        grid=(nt,),
        in_specs=in_specs,
        out_specs=pl.BlockSpec((Cout, tile_n), lambda i: (0, i)),
        compiler_params=parallel,
    )(*args)

    return y[:, :n_valid]


# ----------------------------------------------------------------------------
# Plain-JAX glue: im2col, weight packing, separable bilinear resize
# ----------------------------------------------------------------------------
def im2col_t(x_nhwc, stride, dilation, padding, ksize=3):
    """Patches (Cin*ksize*ksize, B*Ho*Wo); rows: (channel, kh, kw), cols: (b, ho, wo)."""
    B, H, W, C = x_nhwc.shape
    Ho = (H + 2 * padding - dilation * (ksize - 1) - 1) // stride + 1
    Wo = (W + 2 * padding - dilation * (ksize - 1) - 1) // stride + 1
    xp = jnp.pad(x_nhwc, ((0, 0), (padding, padding), (padding, padding), (0, 0)))
    taps = []
    for kh in range(ksize):
        for kw in range(ksize):
            sl = xp[:,
                    kh * dilation: kh * dilation + stride * (Ho - 1) + 1: stride,
                    kw * dilation: kw * dilation + stride * (Wo - 1) + 1: stride,
                    :]
            taps.append(sl)                                  # (B, Ho, Wo, C)
    t = jnp.stack(taps, axis=0)                              # (9, B, Ho, Wo, C)
    t = jnp.transpose(t, (4, 0, 1, 2, 3))                    # (C, 9, B, Ho, Wo)
    return t.reshape(C * ksize * ksize, B * Ho * Wo), Ho, Wo


def blockdiag_weight_t(w, groups):
    """PyTorch grouped weight (Cout, Cin/groups, 3, 3) -> dense (Cout, Cin*9) block-diag.

    Vectorized construction (no traced per-channel scatter loop). Note: the dense matmul
    does `groups`x redundant MACs over structural zeros; acceptable here because the
    stages are memory-bound at these channel counts and the weight stays VMEM-resident.
    """
    Cout, Cinp, KH, KW = w.shape
    Coutp = Cout // groups
    Kg = Cinp * KH * KW
    wf = w.reshape(Cout, Kg)                                        # (Cout, Kg)
    grp = jnp.arange(Cout) // Coutp                                 # (Cout,)
    onehot = (grp[:, None] == jnp.arange(groups)[None, :]).astype(w.dtype)  # (Cout, G)
    return (onehot[:, :, None] * wf[:, None, :]).reshape(Cout, groups * Kg)


def bilinear_matrix(out_size, in_size):
    """1-D bilinear weights matching PyTorch F.interpolate(align_corners=False)."""
    i = np.arange(out_size, dtype=np.float64)
    src = (i + 0.5) * (float(in_size) / float(out_size)) - 0.5
    src = np.maximum(src, 0.0)
    i0 = np.minimum(np.floor(src).astype(np.int64), in_size - 1)
    i1 = np.minimum(i0 + 1, in_size - 1)
    frac = src - i0
    R = np.zeros((out_size, in_size), dtype=np.float32)
    R[np.arange(out_size), i0] += (1.0 - frac).astype(np.float32)
    R[np.arange(out_size), i1] += frac.astype(np.float32)
    return jnp.asarray(R)


def upsample_nhwc(x_nhwc, Ho, Wo):
    """Separable bilinear resize (rows then cols) — replaces the dense kron interp matrix."""
    _, Hi, Wi, _ = x_nhwc.shape
    Rh = bilinear_matrix(Ho, Hi)                                    # (Ho, Hi)
    Rw = bilinear_matrix(Wo, Wi)                                    # (Wo, Wi)
    t = jnp.einsum("oh,bhwc->bowc", Rh, x_nhwc, precision=lax.Precision.HIGHEST)
    return jnp.einsum("bowc,pw->bopc", t, Rw, precision=lax.Precision.HIGHEST)


def _nhwc_to_cn(img):
    B, H, W, C = img.shape
    return jnp.transpose(img, (3, 0, 1, 2)).reshape(C, B * H * W)


# ----------------------------------------------------------------------------
# Full PUAModule forward (Pallas path)
# ----------------------------------------------------------------------------
def pua_forward(x_nchw, P, tile_n=DEFAULT_TILE_N):
    B, C, H, W = x_nchw.shape
    G = C // 2
    x_nhwc = jnp.transpose(x_nchw, (0, 2, 3, 1)).astype(jnp.float32)

    # ---- stage 1: conv1(s=2,d=1,p=1) + bn1 + lrelu + resized-x residual ----
    p1, H1, W1 = im2col_t(x_nhwc, stride=2, dilation=1, padding=1)
    res1_t = _nhwc_to_cn(upsample_nhwc(x_nhwc, H1, W1))
    y1_t = conv_bn_lrelu_stage(p1, blockdiag_weight_t(P["w1"], G),
                               P["g1"], P["be1"], res_t=res1_t, tile_n=tile_n)
    y1_img = jnp.transpose(y1_t.reshape(C, B, H1, W1), (1, 2, 3, 0))      # NHWC

    # ---- stage 2: conv2(s=1,d=2,p=1) + bn2 + lrelu ----
    p2, H2, W2 = im2col_t(y1_img, stride=1, dilation=2, padding=1)
    y2_t = conv_bn_lrelu_stage(p2, blockdiag_weight_t(P["w2"], G),
                               P["g2"], P["be2"], tile_n=tile_n)
    y2_img = jnp.transpose(y2_t.reshape(2 * C, B, H2, W2), (1, 2, 3, 0))  # NHWC

    # ---- stage 3: conv3(s=2,d=3,p=1) + bn3 + lrelu + resized-y1 residual ----
    p3, H3, W3 = im2col_t(y2_img, stride=2, dilation=3, padding=1)
    res3_t = _nhwc_to_cn(upsample_nhwc(y1_img, H3, W3))
    y3_t = conv_bn_lrelu_stage(p3, blockdiag_weight_t(P["w3"], G),
                               P["g3"], P["be3"], res_t=res3_t, tile_n=tile_n)

    return jnp.transpose(y3_t.reshape(C, B, H3, W3), (1, 0, 2, 3))        # NCHW


# ----------------------------------------------------------------------------
# Pure-JAX reference (keeps the conv bias; matches PyTorch semantics)
# ----------------------------------------------------------------------------
def reference_forward(x, P):
    G = x.shape[1] // 2

    def conv(x, w, b, stride, dil):
        y = lax.conv_general_dilated(
            x, w, window_strides=(stride, stride), padding=((1, 1), (1, 1)),
            rhs_dilation=(dil, dil),
            dimension_numbers=("NCHW", "OIHW", "NCHW"),
            feature_group_count=G, precision=lax.Precision.HIGHEST)
        return y + b[None, :, None, None]

    def bn(x, gamma, beta):
        m = jnp.mean(x, axis=(0, 2, 3), keepdims=True)
        v = jnp.mean((x - m) ** 2, axis=(0, 2, 3), keepdims=True)
        return (x - m) * lax.rsqrt(v + BN_EPS) * gamma[None, :, None, None] \
            + beta[None, :, None, None]

    def lrelu(x):
        return jnp.where(x >= 0, x, NEG_SLOPE * x)

    def upsample(src, Ht, Wt):
        Rh = bilinear_matrix(Ht, src.shape[2])
        Rw = bilinear_matrix(Wt, src.shape[3])
        t = jnp.einsum("ho,bcow->bchw", Rh, src, precision=lax.Precision.HIGHEST)
        return jnp.einsum("bchw,uw->bchu", t, Rw, precision=lax.Precision.HIGHEST)

    res = x
    y = lrelu(bn(conv(x, P["w1"], P["b1"], 2, 1), P["g1"], P["be1"]))
    y = y + upsample(res, y.shape[2], y.shape[3])
    res2 = y
    y = lrelu(bn(conv(y, P["w2"], P["b2"], 1, 2), P["g2"], P["be2"]))
    y = lrelu(bn(conv(y, P["w3"], P["b3"], 2, 3), P["g3"], P["be3"]))
    y = y + upsample(res2, y.shape[2], y.shape[3])
    return y


# ----------------------------------------------------------------------------
# Main
# ----------------------------------------------------------------------------
if __name__ == "__main__":
    B, C, H, W = 2, 4, 32, 32          # channel must be even (groups = channel // 2)
    G = C // 2

    key = jax.random.PRNGKey(0)
    ks = jax.random.split(key, 13)
    x = jax.random.normal(ks[0], (B, C, H, W), dtype=jnp.float32)

    params = {
        # conv1: Conv2d(C, C, 3, stride=2, padding=1, dilation=1, groups=C//2)
        "w1": 0.2 * jax.random.normal(ks[1], (C, C // G, 3, 3), dtype=jnp.float32),
        "b1": 0.1 * jax.random.normal(ks[2], (C,), dtype=jnp.float32),
        "g1": 1.0 + 0.1 * jax.random.normal(ks[3], (C,), dtype=jnp.float32),
        "be1": 0.1 * jax.random.normal(ks[4], (C,), dtype=jnp.float32),
        # conv2: Conv2d(C, 2C, 3, stride=1, padding=1, dilation=2, groups=C//2)
        "w2": 0.2 * jax.random.normal(ks[5], (2 * C, C // G, 3, 3), dtype=jnp.float32),
        "b2": 0.1 * jax.random.normal(ks[6], (2 * C,), dtype=jnp.float32),
        "g2": 1.0 + 0.1 * jax.random.normal(ks[7], (2 * C,), dtype=jnp.float32),
        "be2": 0.1 * jax.random.normal(ks[8], (2 * C,), dtype=jnp.float32),
        # conv3: Conv2d(2C, C, 3, stride=2, padding=1, dilation=3, groups=C//2)
        "w3": 0.2 * jax.random.normal(ks[9], (C, 2 * C // G, 3, 3), dtype=jnp.float32),
        "b3": 0.1 * jax.random.normal(ks[10], (C,), dtype=jnp.float32),
        "g3": 1.0 + 0.1 * jax.random.normal(ks[11], (C,), dtype=jnp.float32),
        "be3": 0.1 * jax.random.normal(ks[12], (C,), dtype=jnp.float32),
    }

    fwd = jax.jit(pua_forward)
    out = jax.block_until_ready(fwd(x, params))

    ref = reference_forward(x, params)
    np.testing.assert_allclose(np.asarray(out), np.asarray(ref), rtol=2e-3, atol=2e-3)

    print("KERNEL_OK")
</pallas_src>

<mosaic_0001>
module attributes {stable_mosaic.version = 11 : i64} {
  func.func @_conv_stats_kernel(%arg0: i32, %arg1: memref<4x36xf32, #tpu.memory_space<vmem>>, %arg2: memref<36x512xf32, #tpu.memory_space<vmem>>, %arg3: memref<4x512xf32, #tpu.memory_space<vmem>>, %arg4: memref<1x4x1xf32, #tpu.memory_space<vmem>>, %arg5: memref<1x4x1xf32, #tpu.memory_space<vmem>>) attributes {dimension_semantics = [#tpu.dimension_semantics<parallel>], iteration_bounds = array<i64: 1>, scalar_prefetch = 0 : i64, scratch_operands = 0 : i64, tpu.core_type = #tpu.core_type<tc>, window_params = [{pipeline_mode = #tpu.pipeline_mode<synchronous>, transform_indices = @transform_0, window_bounds = array<i64: 4, 36>}, {transform_indices = @transform_1, window_bounds = array<i64: 36, 512>}, {transform_indices = @transform_2, window_bounds = array<i64: 4, 512>}, {transform_indices = @transform_3, window_bounds = array<i64: 1, 4, 1>}, {transform_indices = @transform_4, window_bounds = array<i64: 1, 4, 1>}]} {
    %c0 = arith.constant 0 : index
    %c0_0 = arith.constant 0 : index
    %0 = vector.load %arg1[%c0, %c0_0] : memref<4x36xf32, #tpu.memory_space<vmem>>, vector<4x36xf32>
    %c0_1 = arith.constant 0 : index
    %c0_2 = arith.constant 0 : index
    %1 = vector.load %arg2[%c0_1, %c0_2] : memref<36x512xf32, #tpu.memory_space<vmem>>, vector<36x512xf32>
    %cst = arith.constant dense<0.000000e+00> : vector<4x512xf32>
    %2 = tpu.matmul %0, %1, %cst {dimension_numbers = #tpu.dot_dimension_numbers<[1], [0], [0], [1], [0, 0, 1, 1], [], []>, precision = #tpu.contract_precision<fp32>} : vector<4x36xf32>, vector<36x512xf32>, vector<4x512xf32> -> vector<4x512xf32>
    %c0_3 = arith.constant 0 : index
    %c0_4 = arith.constant 0 : index
    %3 = vector.load %arg3[%c0_3, %c0_4] : memref<4x512xf32, #tpu.memory_space<vmem>>, vector<4x512xf32>
    tpu.vector_store %arg3[%c0_3, %c0_4], %2 {strides = array<i32>} : memref<4x512xf32, #tpu.memory_space<vmem>>, vector<4x512xf32>,
    %cst_5 = arith.constant dense<0.000000e+00> : vector<4xf32>
    %4 = vector.multi_reduction <add>, %2, %cst_5 [1] : vector<4x512xf32> to vector<4xf32>
    %5 = vector.shape_cast %4 : vector<4xf32> to vector<4x1xf32>
    %c0_6 = arith.constant 0 : index
    %c0_7 = arith.constant 0 : index
    %c0_8 = arith.constant 0 : index
    %6 = vector.load %arg4[%c0_6, %c0_7, %c0_8] : memref<1x4x1xf32, #tpu.memory_space<vmem>>, vector<1x4x1xf32>
    %7 = vector.shape_cast %6 : vector<1x4x1xf32> to vector<4x1xf32>
    %8 = vector.shape_cast %5 : vector<4x1xf32> to vector<1x4x1xf32>
    tpu.vector_store %arg4[%c0_6, %c0_7, %c0_8], %8 {strides = array<i32>} : memref<1x4x1xf32, #tpu.memory_space<vmem>>, vector<1x4x1xf32>,
    %9 = arith.mulf %2, %2 : vector<4x512xf32>
    %cst_9 = arith.constant dense<0.000000e+00> : vector<4xf32>
    %10 = vector.multi_reduction <add>, %9, %cst_9 [1] : vector<4x512xf32> to vector<4xf32>
    %11 = vector.shape_cast %10 : vector<4xf32> to vector<4x1xf32>
    %c0_10 = arith.constant 0 : index
    %c0_11 = arith.constant 0 : index
    %c0_12 = arith.constant 0 : index
    %12 = vector.load %arg5[%c0_10, %c0_11, %c0_12] : memref<1x4x1xf32, #tpu.memory_space<vmem>>, vector<1x4x1xf32>
    %13 = vector.shape_cast %12 : vector<1x4x1xf32> to vector<4x1xf32>
    %14 = vector.shape_cast %11 : vector<4x1xf32> to vector<1x4x1xf32>
    tpu.vector_store %arg5[%c0_10, %c0_11, %c0_12], %14 {strides = array<i32>} : memref<1x4x1xf32, #tpu.memory_space<vmem>>, vector<1x4x1xf32>,
    return
  }
  func.func @transform_0(%arg0: i32) -> (i32, i32) {
    %c0_i32 = arith.constant 0 : i32
    %c0_i32_0 = arith.constant 0 : i32
    %c0_i32_1 = arith.constant 0 : i32
    return %c0_i32, %c0_i32_0 : i32, i32
  }
  func.func @transform_1(%arg0: i32) -> (i32, i32) {
    %c0_i32 = arith.constant 0 : i32
    %c0_i32_0 = arith.constant 0 : i32
    return %c0_i32, %arg0 : i32, i32
  }
  func.func @transform_2(%arg0: i32) -> (i32, i32) {
    %c0_i32 = arith.constant 0 : i32
    %c0_i32_0 = arith.constant 0 : i32
    return %c0_i32, %arg0 : i32, i32
  }
  func.func @transform_3(%arg0: i32) -> (i32, i32, i32) {
    %c0_i32 = arith.constant 0 : i32
    %c0_i32_0 = arith.constant 0 : i32
    %c0_i32_1 = arith.constant 0 : i32
    return %arg0, %c0_i32, %c0_i32_0 : i32, i32, i32
  }
  func.func @transform_4(%arg0: i32) -> (i32, i32, i32) {
    %c0_i32 = arith.constant 0 : i32
    %c0_i32_0 = arith.constant 0 : i32
    %c0_i32_1 = arith.constant 0 : i32
    return %arg0, %c0_i32, %c0_i32_0 : i32, i32, i32
  }
}

module attributes {stable_mosaic.version = 11 : i64} {
  func.func @_apply_res_kernel(%arg0: i32, %arg1: memref<4x512xf32, #tpu.memory_space<vmem>>, %arg2: memref<4x1xf32, #tpu.memory_space<vmem>>, %arg3: memref<4x1xf32, #tpu.memory_space<vmem>>, %arg4: memref<4x512xf32, #tpu.memory_space<vmem>>, %arg5: memref<4x512xf32, #tpu.memory_space<vmem>>) attributes {dimension_semantics = [#tpu.dimension_semantics<parallel>], iteration_bounds = array<i64: 1>, scalar_prefetch = 0 : i64, scratch_operands = 0 : i64, tpu.core_type = #tpu.core_type<tc>, window_params = [{transform_indices = @transform_0, window_bounds = array<i64: 4, 512>}, {pipeline_mode = #tpu.pipeline_mode<synchronous>, transform_indices = @transform_1, window_bounds = array<i64: 4, 1>}, {pipeline_mode = #tpu.pipeline_mode<synchronous>, transform_indices = @transform_2, window_bounds = array<i64: 4, 1>}, {transform_indices = @transform_3, window_bounds = array<i64: 4, 512>}, {transform_indices = @transform_4, window_bounds = array<i64: 4, 512>}]} {
    %c0 = arith.constant 0 : index
    %c0_0 = arith.constant 0 : index
    %0 = vector.load %arg1[%c0, %c0_0] : memref<4x512xf32, #tpu.memory_space<vmem>>, vector<4x512xf32>
    %c0_1 = arith.constant 0 : index
    %c0_2 = arith.constant 0 : index
    %1 = vector.load %arg2[%c0_1, %c0_2] : memref<4x1xf32, #tpu.memory_space<vmem>>, vector<4x1xf32>
    %2 = vector.broadcast %1 : vector<4x1xf32> to vector<4x512xf32>
    %3 = arith.mulf %0, %2 : vector<4x512xf32>
    %c0_3 = arith.constant 0 : index
    %c0_4 = arith.constant 0 : index
    %4 = vector.load %arg3[%c0_3, %c0_4] : memref<4x1xf32, #tpu.memory_space<vmem>>, vector<4x1xf32>
    %5 = vector.broadcast %4 : vector<4x1xf32> to vector<4x512xf32>
    %6 = arith.addf %3, %5 : vector<4x512xf32>
    %cst = arith.constant 0.000000e+00 : f32
    %7 = vector.broadcast %cst : f32 to vector<4x512xf32>
    %8 = arith.cmpf oge, %6, %7 : vector<4x512xf32>
    %cst_5 = arith.constant 2.000000e-01 : f32
    %9 = vector.broadcast %cst_5 : f32 to vector<4x512xf32>
    %10 = arith.mulf %9, %6 : vector<4x512xf32>
    %11 = arith.select %8, %6, %10 : vector<4x512xi1>, vector<4x512xf32>
    %c0_6 = arith.constant 0 : index
    %c0_7 = arith.constant 0 : index
    %12 = vector.load %arg4[%c0_6, %c0_7] : memref<4x512xf32, #tpu.memory_space<vmem>>, vector<4x512xf32>
    %13 = arith.addf %11, %12 : vector<4x512xf32>
    %c0_8 = arith.constant 0 : index
    %c0_9 = arith.constant 0 : index
    %14 = vector.load %arg5[%c0_8, %c0_9] : memref<4x512xf32, #tpu.memory_space<vmem>>, vector<4x512xf32>
    tpu.vector_store %arg5[%c0_8, %c0_9], %13 {strides = array<i32>} : memref<4x512xf32, #tpu.memory_space<vmem>>, vector<4x512xf32>,
    return
  }
  func.func @transform_0(%arg0: i32) -> (i32, i32) {
    %c0_i32 = arith.constant 0 : i32
    %c0_i32_0 = arith.constant 0 : i32
    return %c0_i32, %arg0 : i32, i32
  }
  func.func @transform_1(%arg0: i32) -> (i32, i32) {
    %c0_i32 = arith.constant 0 : i32
    %c0_i32_0 = arith.constant 0 : i32
    %c0_i32_1 = arith.constant 0 : i32
    return %c0_i32, %c0_i32_0 : i32, i32
  }
  func.func @transform_2(%arg0: i32) -> (i32, i32) {
    %c0_i32 = arith.constant 0 : i32
    %c0_i32_0 = arith.constant 0 : i32
    %c0_i32_1 = arith.constant 0 : i32
    return %c0_i32, %c0_i32_0 : i32, i32
  }
  func.func @transform_3(%arg0: i32) -> (i32, i32) {
    %c0_i32 = arith.constant 0 : i32
    %c0_i32_0 = arith.constant 0 : i32
    return %c0_i32, %arg0 : i32, i32
  }
  func.func @transform_4(%arg0: i32) -> (i32, i32) {
    %c0_i32 = arith.constant 0 : i32
    %c0_i32_0 = arith.constant 0 : i32
    return %c0_i32, %arg0 : i32, i32
  }
}

module attributes {stable_mosaic.version = 11 : i64} {
  func.func @_conv_stats_kernel(%arg0: i32, %arg1: memref<8x36xf32, #tpu.memory_space<vmem>>, %arg2: memref<36x512xf32, #tpu.memory_space<vmem>>, %arg3: memref<8x512xf32, #tpu.memory_space<vmem>>, %arg4: memref<1x8x1xf32, #tpu.memory_space<vmem>>, %arg5: memref<1x8x1xf32, #tpu.memory_space<vmem>>) attributes {dimension_semantics = [#tpu.dimension_semantics<parallel>], iteration_bounds = array<i64: 1>, scalar_prefetch = 0 : i64, scratch_operands = 0 : i64, tpu.core_type = #tpu.core_type<tc>, window_params = [{pipeline_mode = #tpu.pipeline_mode<synchronous>, transform_indices = @transform_0, window_bounds = array<i64: 8, 36>}, {transform_indices = @transform_1, window_bounds = array<i64: 36, 512>}, {transform_indices = @transform_2, window_bounds = array<i64: 8, 512>}, {transform_indices = @transform_3, window_bounds = array<i64: 1, 8, 1>}, {transform_indices = @transform_4, window_bounds = array<i64: 1, 8, 1>}]} {
    %c0 = arith.constant 0 : index
    %c0_0 = arith.constant 0 : index
    %0 = vector.load %arg1[%c0, %c0_0] : memref<8x36xf32, #tpu.memory_space<vmem>>, vector<8x36xf32>
    %c0_1 = arith.constant 0 : index
    %c0_2 = arith.constant 0 : index
    %1 = vector.load %arg2[%c0_1, %c0_2] : memref<36x512xf32, #tpu.memory_space<vmem>>, vector<36x512xf32>
    %cst = arith.constant dense<0.000000e+00> : vector<8x512xf32>
    %2 = tpu.matmul %0, %1, %cst {dimension_numbers = #tpu.dot_dimension_numbers<[1], [0], [0], [1], [0, 0, 1, 1], [], []>, precision = #tpu.contract_precision<fp32>} : vector<8x36xf32>, vector<36x512xf32>, vector<8x512xf32> -> vector<8x512xf32>
    %c0_3 = arith.constant 0 : index
    %c0_4 = arith.constant 0 : index
    %3 = vector.load %arg3[%c0_3, %c0_4] : memref<8x512xf32, #tpu.memory_space<vmem>>, vector<8x512xf32>
    tpu.vector_store %arg3[%c0_3, %c0_4], %2 {strides = array<i32>} : memref<8x512xf32, #tpu.memory_space<vmem>>, vector<8x512xf32>,
    %cst_5 = arith.constant dense<0.000000e+00> : vector<8xf32>
    %4 = vector.multi_reduction <add>, %2, %cst_5 [1] : vector<8x512xf32> to vector<8xf32>
    %5 = vector.shape_cast %4 : vector<8xf32> to vector<8x1xf32>
    %c0_6 = arith.constant 0 : index
    %c0_7 = arith.constant 0 : index
    %c0_8 = arith.constant 0 : index
    %6 = vector.load %arg4[%c0_6, %c0_7, %c0_8] : memref<1x8x1xf32, #tpu.memory_space<vmem>>, vector<1x8x1xf32>
    %7 = vector.shape_cast %6 : vector<1x8x1xf32> to vector<8x1xf32>
    %8 = vector.shape_cast %5 : vector<8x1xf32> to vector<1x8x1xf32>
    tpu.vector_store %arg4[%c0_6, %c0_7, %c0_8], %8 {strides = array<i32>} : memref<1x8x1xf32, #tpu.memory_space<vmem>>, vector<1x8x1xf32>,
    %9 = arith.mulf %2, %2 : vector<8x512xf32>
    %cst_9 = arith.constant dense<0.000000e+00> : vector<8xf32>
    %10 = vector.multi_reduction <add>, %9, %cst_9 [1] : vector<8x512xf32> to vector<8xf32>
    %11 = vector.shape_cast %10 : vector<8xf32> to vector<8x1xf32>
    %c0_10 = arith.constant 0 : index
    %c0_11 = arith.constant 0 : index
    %c0_12 = arith.constant 0 : index
    %12 = vector.load %arg5[%c0_10, %c0_11, %c0_12] : memref<1x8x1xf32, #tpu.memory_space<vmem>>, vector<1x8x1xf32>
    %13 = vector.shape_cast %12 : vector<1x8x1xf32> to vector<8x1xf32>
    %14 = vector.shape_cast %11 : vector<8x1xf32> to vector<1x8x1xf32>
    tpu.vector_store %arg5[%c0_10, %c0_11, %c0_12], %14 {strides = array<i32>} : memref<1x8x1xf32, #tpu.memory_space<vmem>>, vector<1x8x1xf32>,
    return
  }
  func.func @transform_0(%arg0: i32) -> (i32, i32) {
    %c0_i32 = arith.constant 0 : i32
    %c0_i32_0 = arith.constant 0 : i32
    %c0_i32_1 = arith.constant 0 : i32
    return %c0_i32, %c0_i32_0 : i32, i32
  }
  func.func @transform_1(%arg0: i32) -> (i32, i32) {
    %c0_i32 = arith.constant 0 : i32
    %c0_i32_0 = arith.constant 0 : i32
    return %c0_i32, %arg0 : i32, i32
  }
  func.func @transform_2(%arg0: i32) -> (i32, i32) {
    %c0_i32 = arith.constant 0 : i32
    %c0_i32_0 = arith.constant 0 : i32
    return %c0_i32, %arg0 : i32, i32
  }
  func.func @transform_3(%arg0: i32) -> (i32, i32, i32) {
    %c0_i32 = arith.constant 0 : i32
    %c0_i32_0 = arith.constant 0 : i32
    %c0_i32_1 = arith.constant 0 : i32
    return %arg0, %c0_i32, %c0_i32_0 : i32, i32, i32
  }
  func.func @transform_4(%arg0: i32) -> (i32, i32, i32) {
    %c0_i32 = arith.constant 0 : i32
    %c0_i32_0 = arith.constant 0 : i32
    %c0_i32_1 = arith.constant 0 : i32
    return %arg0, %c0_i32, %c0_i32_0 : i32, i32, i32
  }
}

module attributes {stable_mosaic.version = 11 : i64} {
  func.func @_apply_kernel(%arg0: i32, %arg1: memref<8x512xf32, #tpu.memory_space<vmem>>, %arg2: memref<8x1xf32, #tpu.memory_space<vmem>>, %arg3: memref<8x1xf32, #tpu.memory_space<vmem>>, %arg4: memref<8x512xf32, #tpu.memory_space<vmem>>) attributes {dimension_semantics = [#tpu.dimension_semantics<parallel>], iteration_bounds = array<i64: 1>, scalar_prefetch = 0 : i64, scratch_operands = 0 : i64, tpu.core_type = #tpu.core_type<tc>, window_params = [{transform_indices = @transform_0, window_bounds = array<i64: 8, 512>}, {pipeline_mode = #tpu.pipeline_mode<synchronous>, transform_indices = @transform_1, window_bounds = array<i64: 8, 1>}, {pipeline_mode = #tpu.pipeline_mode<synchronous>, transform_indices = @transform_2, window_bounds = array<i64: 8, 1>}, {transform_indices = @transform_3, window_bounds = array<i64: 8, 512>}]} {
    %c0 = arith.constant 0 : index
    %c0_0 = arith.constant 0 : index
    %0 = vector.load %arg1[%c0, %c0_0] : memref<8x512xf32, #tpu.memory_space<vmem>>, vector<8x512xf32>
    %c0_1 = arith.constant 0 : index
    %c0_2 = arith.constant 0 : index
    %1 = vector.load %arg2[%c0_1, %c0_2] : memref<8x1xf32, #tpu.memory_space<vmem>>, vector<8x1xf32>
    %2 = vector.broadcast %1 : vector<8x1xf32> to vector<8x512xf32>
    %3 = arith.mulf %0, %2 : vector<8x512xf32>
    %c0_3 = arith.constant 0 : index
    %c0_4 = arith.constant 0 : index
    %4 = vector.load %arg3[%c0_3, %c0_4] : memref<8x1xf32, #tpu.memory_space<vmem>>, vector<8x1xf32>
    %5 = vector.broadcast %4 : vector<8x1xf32> to vector<8x512xf32>
    %6 = arith.addf %3, %5 : vector<8x512xf32>
    %cst = arith.constant 0.000000e+00 : f32
    %7 = vector.broadcast %cst : f32 to vector<8x512xf32>
    %8 = arith.cmpf oge, %6, %7 : vector<8x512xf32>
    %cst_5 = arith.constant 2.000000e-01 : f32
    %9 = vector.broadcast %cst_5 : f32 to vector<8x512xf32>
    %10 = arith.mulf %9, %6 : vector<8x512xf32>
    %11 = arith.select %8, %6, %10 : vector<8x512xi1>, vector<8x512xf32>
    %c0_6 = arith.constant 0 : index
    %c0_7 = arith.constant 0 : index
    %12 = vector.load %arg4[%c0_6, %c0_7] : memref<8x512xf32, #tpu.memory_space<vmem>>, vector<8x512xf32>
    tpu.vector_store %arg4[%c0_6, %c0_7], %11 {strides = array<i32>} : memref<8x512xf32, #tpu.memory_space<vmem>>, vector<8x512xf32>,
    return
  }
  func.func @transform_0(%arg0: i32) -> (i32, i32) {
    %c0_i32 = arith.constant 0 : i32
    %c0_i32_0 = arith.constant 0 : i32
    return %c0_i32, %arg0 : i32, i32
  }
  func.func @transform_1(%arg0: i32) -> (i32, i32) {
    %c0_i32 = arith.constant 0 : i32
    %c0_i32_0 = arith.constant 0 : i32
    %c0_i32_1 = arith.constant 0 : i32
    return %c0_i32, %c0_i32_0 : i32, i32
  }
  func.func @transform_2(%arg0: i32) -> (i32, i32) {
    %c0_i32 = arith.constant 0 : i32
    %c0_i32_0 = arith.constant 0 : i32
    %c0_i32_1 = arith.constant 0 : i32
    return %c0_i32, %c0_i32_0 : i32, i32
  }
  func.func @transform_3(%arg0: i32) -> (i32, i32) {
    %c0_i32 = arith.constant 0 : i32
    %c0_i32_0 = arith.constant 0 : i32
    return %c0_i32, %arg0 : i32, i32
  }
}

module attributes {stable_mosaic.version = 11 : i64} {
  func.func @_conv_stats_kernel(%arg0: i32, %arg1: memref<4x72xf32, #tpu.memory_space<vmem>>, %arg2: memref<72x128xf32, #tpu.memory_space<vmem>>, %arg3: memref<4x128xf32, #tpu.memory_space<vmem>>, %arg4: memref<1x4x1xf32, #tpu.memory_space<vmem>>, %arg5: memref<1x4x1xf32, #tpu.memory_space<vmem>>) attributes {dimension_semantics = [#tpu.dimension_semantics<parallel>], iteration_bounds = array<i64: 1>, scalar_prefetch = 0 : i64, scratch_operands = 0 : i64, tpu.core_type = #tpu.core_type<tc>, window_params = [{pipeline_mode = #tpu.pipeline_mode<synchronous>, transform_indices = @transform_0, window_bounds = array<i64: 4, 72>}, {transform_indices = @transform_1, window_bounds = array<i64: 72, 128>}, {transform_indices = @transform_2, window_bounds = array<i64: 4, 128>}, {transform_indices = @transform_3, window_bounds = array<i64: 1, 4, 1>}, {transform_indices = @transform_4, window_bounds = array<i64: 1, 4, 1>}]} {
    %c0 = arith.constant 0 : index
    %c0_0 = arith.constant 0 : index
    %0 = vector.load %arg1[%c0, %c0_0] : memref<4x72xf32, #tpu.memory_space<vmem>>, vector<4x72xf32>
    %c0_1 = arith.constant 0 : index
    %c0_2 = arith.constant 0 : index
    %1 = vector.load %arg2[%c0_1, %c0_2] : memref<72x128xf32, #tpu.memory_space<vmem>>, vector<72x128xf32>
    %cst = arith.constant dense<0.000000e+00> : vector<4x128xf32>
    %2 = tpu.matmul %0, %1, %cst {dimension_numbers = #tpu.dot_dimension_numbers<[1], [0], [0], [1], [0, 0, 1, 1], [], []>, precision = #tpu.contract_precision<fp32>} : vector<4x72xf32>, vector<72x128xf32>, vector<4x128xf32> -> vector<4x128xf32>
    %c0_3 = arith.constant 0 : index
    %c0_4 = arith.constant 0 : index
    %3 = vector.load %arg3[%c0_3, %c0_4] : memref<4x128xf32, #tpu.memory_space<vmem>>, vector<4x128xf32>
    tpu.vector_store %arg3[%c0_3, %c0_4], %2 {strides = array<i32>} : memref<4x128xf32, #tpu.memory_space<vmem>>, vector<4x128xf32>,
    %cst_5 = arith.constant dense<0.000000e+00> : vector<4xf32>
    %4 = vector.multi_reduction <add>, %2, %cst_5 [1] : vector<4x128xf32> to vector<4xf32>
    %5 = vector.shape_cast %4 : vector<4xf32> to vector<4x1xf32>
    %c0_6 = arith.constant 0 : index
    %c0_7 = arith.constant 0 : index
    %c0_8 = arith.constant 0 : index
    %6 = vector.load %arg4[%c0_6, %c0_7, %c0_8] : memref<1x4x1xf32, #tpu.memory_space<vmem>>, vector<1x4x1xf32>
    %7 = vector.shape_cast %6 : vector<1x4x1xf32> to vector<4x1xf32>
    %8 = vector.shape_cast %5 : vector<4x1xf32> to vector<1x4x1xf32>
    tpu.vector_store %arg4[%c0_6, %c0_7, %c0_8], %8 {strides = array<i32>} : memref<1x4x1xf32, #tpu.memory_space<vmem>>, vector<1x4x1xf32>,
    %9 = arith.mulf %2, %2 : vector<4x128xf32>
    %cst_9 = arith.constant dense<0.000000e+00> : vector<4xf32>
    %10 = vector.multi_reduction <add>, %9, %cst_9 [1] : vector<4x128xf32> to vector<4xf32>
    %11 = vector.shape_cast %10 : vector<4xf32> to vector<4x1xf32>
    %c0_10 = arith.constant 0 : index
    %c0_11 = arith.constant 0 : index
    %c0_12 = arith.constant 0 : index
    %12 = vector.load %arg5[%c0_10, %c0_11, %c0_12] : memref<1x4x1xf32, #tpu.memory_space<vmem>>, vector<1x4x1xf32>
    %13 = vector.shape_cast %12 : vector<1x4x1xf32> to vector<4x1xf32>
    %14 = vector.shape_cast %11 : vector<4x1xf32> to vector<1x4x1xf32>
    tpu.vector_store %arg5[%c0_10, %c0_11, %c0_12], %14 {strides = array<i32>} : memref<1x4x1xf32, #tpu.memory_space<vmem>>, vector<1x4x1xf32>,
    return
  }
  func.func @transform_0(%arg0: i32) -> (i32, i32) {
    %c0_i32 = arith.constant 0 : i32
    %c0_i32_0 = arith.constant 0 : i32
    %c0_i32_1 = arith.constant 0 : i32
    return %c0_i32, %c0_i32_0 : i32, i32
  }
  func.func @transform_1(%arg0: i32) -> (i32, i32) {
    %c0_i32 = arith.constant 0 : i32
    %c0_i32_0 = arith.constant 0 : i32
    return %c0_i32, %arg0 : i32, i32
  }
  func.func @transform_2(%arg0: i32) -> (i32, i32) {
    %c0_i32 = arith.constant 0 : i32
    %c0_i32_0 = arith.constant 0 : i32
    return %c0_i32, %arg0 : i32, i32
  }
  func.func @transform_3(%arg0: i32) -> (i32, i32, i32) {
    %c0_i32 = arith.constant 0 : i32
    %c0_i32_0 = arith.constant 0 : i32
    %c0_i32_1 = arith.constant 0 : i32
    return %arg0, %c0_i32, %c0_i32_0 : i32, i32, i32
  }
  func.func @transform_4(%arg0: i32) -> (i32, i32, i32) {
    %c0_i32 = arith.constant 0 : i32
    %c0_i32_0 = arith.constant 0 : i32
    %c0_i32_1 = arith.constant 0 : i32
    return %arg0, %c0_i32, %c0_i32_0 : i32, i32, i32
  }
}

module attributes {stable_mosaic.version = 11 : i64} {
  func.func @_apply_res_kernel(%arg0: i32, %arg1: memref<4x128xf32, #tpu.memory_space<vmem>>, %arg2: memref<4x1xf32, #tpu.memory_space<vmem>>, %arg3: memref<4x1xf32, #tpu.memory_space<vmem>>, %arg4: memref<4x128xf32, #tpu.memory_space<vmem>>, %arg5: memref<4x128xf32, #tpu.memory_space<vmem>>) attributes {dimension_semantics = [#tpu.dimension_semantics<parallel>], iteration_bounds = array<i64: 1>, scalar_prefetch = 0 : i64, scratch_operands = 0 : i64, tpu.core_type = #tpu.core_type<tc>, window_params = [{transform_indices = @transform_0, window_bounds = array<i64: 4, 128>}, {pipeline_mode = #tpu.pipeline_mode<synchronous>, transform_indices = @transform_1, window_bounds = array<i64: 4, 1>}, {pipeline_mode = #tpu.pipeline_mode<synchronous>, transform_indices = @transform_2, window_bounds = array<i64: 4, 1>}, {transform_indices = @transform_3, window_bounds = array<i64: 4, 128>}, {transform_indices = @transform_4, window_bounds = array<i64: 4, 128>}]} {
    %c0 = arith.constant 0 : index
    %c0_0 = arith.constant 0 : index
    %0 = vector.load %arg1[%c0, %c0_0] : memref<4x128xf32, #tpu.memory_space<vmem>>, vector<4x128xf32>
    %c0_1 = arith.constant 0 : index
    %c0_2 = arith.constant 0 : index
    %1 = vector.load %arg2[%c0_1, %c0_2] : memref<4x1xf32, #tpu.memory_space<vmem>>, vector<4x1xf32>
    %2 = vector.broadcast %1 : vector<4x1xf32> to vector<4x128xf32>
    %3 = arith.mulf %0, %2 : vector<4x128xf32>
    %c0_3 = arith.constant 0 : index
    %c0_4 = arith.constant 0 : index
    %4 = vector.load %arg3[%c0_3, %c0_4] : memref<4x1xf32, #tpu.memory_space<vmem>>, vector<4x1xf32>
    %5 = vector.broadcast %4 : vector<4x1xf32> to vector<4x128xf32>
    %6 = arith.addf %3, %5 : vector<4x128xf32>
    %cst = arith.constant 0.000000e+00 : f32
    %7 = vector.broadcast %cst : f32 to vector<4x128xf32>
    %8 = arith.cmpf oge, %6, %7 : vector<4x128xf32>
    %cst_5 = arith.constant 2.000000e-01 : f32
    %9 = vector.broadcast %cst_5 : f32 to vector<4x128xf32>
    %10 = arith.mulf %9, %6 : vector<4x128xf32>
    %11 = arith.select %8, %6, %10 : vector<4x128xi1>, vector<4x128xf32>
    %c0_6 = arith.constant 0 : index
    %c0_7 = arith.constant 0 : index
    %12 = vector.load %arg4[%c0_6, %c0_7] : memref<4x128xf32, #tpu.memory_space<vmem>>, vector<4x128xf32>
    %13 = arith.addf %11, %12 : vector<4x128xf32>
    %c0_8 = arith.constant 0 : index
    %c0_9 = arith.constant 0 : index
    %14 = vector.load %arg5[%c0_8, %c0_9] : memref<4x128xf32, #tpu.memory_space<vmem>>, vector<4x128xf32>
    tpu.vector_store %arg5[%c0_8, %c0_9], %13 {strides = array<i32>} : memref<4x128xf32, #tpu.memory_space<vmem>>, vector<4x128xf32>,
    return
  }
  func.func @transform_0(%arg0: i32) -> (i32, i32) {
    %c0_i32 = arith.constant 0 : i32
    %c0_i32_0 = arith.constant 0 : i32
    return %c0_i32, %arg0 : i32, i32
  }
  func.func @transform_1(%arg0: i32) -> (i32, i32) {
    %c0_i32 = arith.constant 0 : i32
    %c0_i32_0 = arith.constant 0 : i32
    %c0_i32_1 = arith.constant 0 : i32
    return %c0_i32, %c0_i32_0 : i32, i32
  }
  func.func @transform_2(%arg0: i32) -> (i32, i32) {
    %c0_i32 = arith.constant 0 : i32
    %c0_i32_0 = arith.constant 0 : i32
    %c0_i32_1 = arith.constant 0 : i32
    return %c0_i32, %c0_i32_0 : i32, i32
  }
  func.func @transform_3(%arg0: i32) -> (i32, i32) {
    %c0_i32 = arith.constant 0 : i32
    %c0_i32_0 = arith.constant 0 : i32
    return %c0_i32, %arg0 : i32, i32
  }
  func.func @transform_4(%arg0: i32) -> (i32, i32) {
    %c0_i32 = arith.constant 0 : i32
    %c0_i32_0 = arith.constant 0 : i32
    return %c0_i32, %arg0 : i32, i32
  }
}

</mosaic_0001>

<llo_original>
// kernel: mul.48
$region0: #{mul.48}
  %s0 = inlined_call_operand.vmem [shape: f32[8,2,3,3], index: 0, kind: input, shape index: {}]
  %s1 = inlined_call_operand.vmem [shape: f32[8,18], index: 1, kind: output, shape index: {}]
  $region1: #{mul.48} parent=0
    #allocation0 [shape = 'u8[24576]{0}', space=vmem, size = 0x6000, scoped, tag = 'scoped mem for input reshape']
    %s3 = sshllo.u32 0, 4
    %s4 = smul.addr 4, 5
    %s5 = scalar_lea.vmem %s0, %s4
    %v6 = vld [vmem:[%s5] sm:%s3]
    %s7 = scalar_lea.vmem [#allocation0], 40
    %8 = vst [vmem:[%s7] sm:%s3] %v6
    %s9 = smul.addr 4, 4
    %s10 = scalar_lea.vmem %s0, %s9
    %v11 = vld [vmem:[%s10] sm:%s3]
    %s12 = scalar_lea.vmem [#allocation0], 32
    %13 = vst [vmem:[%s12] sm:%s3] %v11
    %s14 = smul.addr 4, 3
    %s15 = scalar_lea.vmem %s0, %s14
    %v16 = vld [vmem:[%s15] sm:%s3]
    %s17 = scalar_lea.vmem [#allocation0], 24
    %18 = vst [vmem:[%s17] sm:%s3] %v16
    %s19 = smul.addr 4, 2
    %s20 = scalar_lea.vmem %s0, %s19
    %v21 = vld [vmem:[%s20] sm:%s3]
    %s22 = scalar_lea.vmem [#allocation0], 16
    %23 = vst [vmem:[%s22] sm:%s3] %v21
    %s24 = scalar_lea.vmem %s0, 4
    %v25 = vld [vmem:[%s24] sm:%s3]
    %s26 = scalar_lea.vmem [#allocation0], 8
    %27 = vst [vmem:[%s26] sm:%s3] %v25
    %v28 = vld [vmem:[%s0] sm:%s3]
    %29 = vst [vmem:[#allocation0] sm:%s3] %v28
    %v30 = vld [vmem:[#allocation0] sm:$0x7]
    %vm31 = vcmask 64512
    %32 = vst.msk [vmem:[%s1] sm:$0x7] %vm31, %v30
    %s33 = scalar_lea.vmem [#allocation0], 8
    %v34 = vld [vmem:[%s33] sm:$0x7]
    %vm35 = vcmask 64512
    %s36 = scalar_lea.vmem %s1, 3
    %37 = vst.msk [vmem:[%s36] sm:$0x7] %vm35, %v34
    %s38 = scalar_lea.vmem [#allocation0], 16
    %v39 = vld [vmem:[%s38] sm:$0x7]
    %vm40 = vcmask 64512
    %s41 = scalar_lea.vmem %s1, 6
    %42 = vst.msk [vmem:[%s41] sm:$0x7] %vm40, %v39
    %s43 = scalar_lea.vmem [#allocation0], 24
    %v44 = vld [vmem:[%s43] sm:$0x7]
    %vm45 = vcmask 64512
    %s46 = scalar_lea.vmem %s1, 9
    %47 = vst.msk [vmem:[%s46] sm:$0x7] %vm45, %v44
    %s48 = scalar_lea.vmem [#allocation0], 32
    %v49 = vld [vmem:[%s48] sm:$0x7]
    %vm50 = vcmask 64512
    %s51 = scalar_lea.vmem %s1, 12
    %52 = vst.msk [vmem:[%s51] sm:$0x7] %vm50, %v49
    %s53 = scalar_lea.vmem [#allocation0], 40
    %v54 = vld [vmem:[%s53] sm:$0x7]
    %vm55 = vcmask 64512
    %s56 = scalar_lea.vmem %s1, 15
    %57 = vst.msk [vmem:[%s56] sm:$0x7] %vm55, %v54

// kernel: mul.37
$region0: #{mul.37}
  %s0 = inlined_call_operand.vmem [shape: f32[4,2,3,3], index: 0, kind: input, shape index: {}]
  %s1 = inlined_call_operand.vmem [shape: f32[4,18], index: 1, kind: output, shape index: {}]
  $region1: #{mul.37} parent=0
    #allocation0 [shape = 'u8[4096]{0}', space=vmem, size = 0x1000, scoped, tag = 'scoped mem for output reshape']
    #allocation1 [shape = 'u8[32768]{0}', space=vmem, size = 0x8000, scoped, tag = 'scoped mem for input reshape']
    %s3 = sshllo.u32 0, 4
    %s4 = smul.addr 4, 7
    %s5 = scalar_lea.vmem %s0, %s4
    %v6 = vld [vmem:[%s5] sm:%s3]
    %s7 = scalar_lea.vmem [#allocation1], 56
    %8 = vst [vmem:[%s7] sm:%s3] %v6
    %s9 = smul.addr 4, 6
    %s10 = scalar_lea.vmem %s0, %s9
    %v11 = vld [vmem:[%s10] sm:%s3]
    %s12 = scalar_lea.vmem [#allocation1], 48
    %13 = vst [vmem:[%s12] sm:%s3] %v11
    %s14 = smul.addr 4, 5
    %s15 = scalar_lea.vmem %s0, %s14
    %v16 = vld [vmem:[%s15] sm:%s3]
    %s17 = scalar_lea.vmem [#allocation1], 40
    %18 = vst [vmem:[%s17] sm:%s3] %v16
    %s19 = smul.addr 4, 4
    %s20 = scalar_lea.vmem %s0, %s19
    %v21 = vld [vmem:[%s20] sm:%s3]
    %s22 = scalar_lea.vmem [#allocation1], 32
    %23 = vst [vmem:[%s22] sm:%s3] %v21
    %s24 = smul.addr 4, 3
    %s25 = scalar_lea.vmem %s0, %s24
    %v26 = vld [vmem:[%s25] sm:%s3]
    %s27 = scalar_lea.vmem [#allocation1], 24
    %28 = vst [vmem:[%s27] sm:%s3] %v26
    %s29 = smul.addr 4, 2
    %s30 = scalar_lea.vmem %s0, %s29
    %v31 = vld [vmem:[%s30] sm:%s3]
    %s32 = scalar_lea.vmem [#allocation1], 16
    %33 = vst [vmem:[%s32] sm:%s3] %v31
    %s34 = scalar_lea.vmem %s0, 4
    %v35 = vld [vmem:[%s34] sm:%s3]
    %s36 = scalar_lea.vmem [#allocation1], 8
    %37 = vst [vmem:[%s36] sm:%s3] %v35
    %v38 = vld [vmem:[%s0] sm:%s3]
    %39 = vst [vmem:[#allocation1] sm:%s3] %v38
    %s40 = smov 3
    %v41 = vld [vmem:[#allocation1] ss:$16 sm:%s40]
    %s42 = smov 12
    %v43 = vld [vmem:[#allocation1] ss:$16 sm:%s42]
    %vm44 = vcmask 1043458
    %v45 = vsel %vm44, %v43, %v41
    %vm46 = vcmask 23552
    %47 = vst.msk [vmem:[#allocation0] sm:$0xf] %vm46, %v45
    %s48 = scalar_lea.vmem [#allocation1], 10
    %s49 = smov 3
    %v50 = vld [vmem:[%s48] ss:$16 sm:%s49]
    %s51 = scalar_lea.vmem [#allocation1], 10
    %s52 = smov 12
    %v53 = vld [vmem:[%s51] ss:$16 sm:%s52]
    %vm54 = vcmask 1043458
    %v55 = vsel %vm54, %v53, %v50
    %56 = vrot.lane.b32.xlu0 %v55, 15
    %v57 = vpop.permute.xlu0 %56
    %vm58 = vcmask 146552
    %59 = vst.msk [vmem:[#allocation0] sm:$0xf] %vm58, %v57
    %s60 = scalar_lea.vmem [#allocation1], 9
    %s61 = smov 3
    %v62 = vld [vmem:[%s60] ss:$16 sm:%s61]
    %s63 = scalar_lea.vmem [#allocation1], 9
    %s64 = smov 12
    %v65 = vld [vmem:[%s63] ss:$16 sm:%s64]
    %vm66 = vcmask 1043458
    %v67 = vsel %vm66, %v65, %v62
    %68 = vrot.lane.b32.xlu0 %v67, 12
    %v69 = vpop.permute.xlu0 %68
    %vm70 = vcmask 121952
    %71 = vst.msk [vmem:[#allocation0] sm:$0xf] %vm70, %v69
    %s72 = scalar_lea.vmem [#allocation1], 8
    %s73 = smov 3
    %v74 = vld [vmem:[%s72] ss:$16 sm:%s73]
    %s75 = scalar_lea.vmem [#allocation1], 8
    %s76 = smov 12
    %v77 = vld [vmem:[%s75] ss:$16 sm:%s76]
    %vm78 = vcmask 1043458
    %v79 = vsel %vm78, %v77, %v74
    %80 = vrot.lane.b32.xlu0 %v79, 9
    %v81 = vpop.permute.xlu0 %80
    %vm82 = vcmask 97352
    %83 = vst.msk [vmem:[#allocation0] sm:$0xf] %vm82, %v81
    %s84 = scalar_lea.vmem [#allocation1], 2
    %s85 = smov 3
    %v86 = vld [vmem:[%s84] ss:$16 sm:%s85]
    %s87 = scalar_lea.vmem [#allocation1], 2
    %s88 = smov 12
    %v89 = vld [vmem:[%s87] ss:$16 sm:%s88]
    %vm90 = vcmask 1043458
    %v91 = vsel %vm90, %v89, %v86
    %92 = vrot.lane.b32.xlu0 %v91, 6
    %v93 = vpop.permute.xlu0 %92
    %vm94 = vcmask 72752
    %95 = vst.msk [vmem:[#allocation0] sm:$0xf] %vm94, %v93
    %s96 = scalar_lea.vmem [#allocation1], 1
    %s97 = smov 3
    %v98 = vld [vmem:[%s96] ss:$16 sm:%s97]
    %s99 = scalar_lea.vmem [#allocation1], 1
    %s100 = smov 12
    %v101 = vld [vmem:[%s99] ss:$16 sm:%s100]
    %vm102 = vcmask 1043458
    %v103 = vsel %vm102, %v101, %v98
    %104 = vrot.lane.b32.xlu0 %v103, 3
    %v105 = vpop.permute.xlu0 %104
    %vm106 = vcmask 48152
    %107 = vst.msk [vmem:[#allocation0] sm:$0xf] %vm106, %v105
    %s109 = sshllo.u32 0, 4
    %v111 = vld [vmem:[#allocation0] sm:%s109]
    %s112 = sshllo.u32 0, 4
    %113 = vst [vmem:[%s1] sm:%s112] %v111

// kernel: mul.59
$region0: #{mul.59}
  %s0 = inlined_call_operand.vmem [shape: f32[4,4,3,3], index: 0, kind: input, shape index: {}]
  %s1 = inlined_call_operand.vmem [shape: f32[4,36], index: 1, kind: output, shape index: {}]
  $region1: #{mul.59} parent=0
    #allocation0 [shape = 'u8[4096]{0}', space=vmem, size = 0x1000, scoped, tag = 'scoped mem for output reshape']
    #allocation1 [shape = 'u8[65536]{0}', space=vmem, size = 0x10000, scoped, tag = 'scoped mem for input reshape']
    %s3 = sshllo.u32 0, 4
    %s4 = smul.addr 4, 15
    %s5 = scalar_lea.vmem %s0, %s4
    %v6 = vld [vmem:[%s5] sm:%s3]
    %s7 = scalar_lea.vmem [#allocation1], 120
    %8 = vst [vmem:[%s7] sm:%s3] %v6
    %s9 = smul.addr 4, 14
    %s10 = scalar_lea.vmem %s0, %s9
    %v11 = vld [vmem:[%s10] sm:%s3]
    %s12 = scalar_lea.vmem [#allocation1], 112
    %13 = vst [vmem:[%s12] sm:%s3] %v11
    %s14 = smul.addr 4, 13
    %s15 = scalar_lea.vmem %s0, %s14
    %v16 = vld [vmem:[%s15] sm:%s3]
    %s17 = scalar_lea.vmem [#allocation1], 104
    %18 = vst [vmem:[%s17] sm:%s3] %v16
    %s19 = smul.addr 4, 12
    %s20 = scalar_lea.vmem %s0, %s19
    %v21 = vld [vmem:[%s20] sm:%s3]
    %s22 = scalar_lea.vmem [#allocation1], 96
    %23 = vst [vmem:[%s22] sm:%s3] %v21
    %s24 = smul.addr 4, 11
    %s25 = scalar_lea.vmem %s0, %s24
    %v26 = vld [vmem:[%s25] sm:%s3]
    %s27 = scalar_lea.vmem [#allocation1], 88
    %28 = vst [vmem:[%s27] sm:%s3] %v26
    %s29 = smul.addr 4, 10
    %s30 = scalar_lea.vmem %s0, %s29
    %v31 = vld [vmem:[%s30] sm:%s3]
    %s32 = scalar_lea.vmem [#allocation1], 80
    %33 = vst [vmem:[%s32] sm:%s3] %v31
    %s34 = smul.addr 4, 9
    %s35 = scalar_lea.vmem %s0, %s34
    %v36 = vld [vmem:[%s35] sm:%s3]
    %s37 = scalar_lea.vmem [#allocation1], 72
    %38 = vst [vmem:[%s37] sm:%s3] %v36
    %s39 = smul.addr 4, 8
    %s40 = scalar_lea.vmem %s0, %s39
    %v41 = vld [vmem:[%s40] sm:%s3]
    %s42 = scalar_lea.vmem [#allocation1], 64
    %43 = vst [vmem:[%s42] sm:%s3] %v41
    %s44 = smul.addr 4, 7
    %s45 = scalar_lea.vmem %s0, %s44
    %v46 = vld [vmem:[%s45] sm:%s3]
    %s47 = scalar_lea.vmem [#allocation1], 56
    %48 = vst [vmem:[%s47] sm:%s3] %v46
    %s49 = smul.addr 4, 6
    %s50 = scalar_lea.vmem %s0, %s49
    %v51 = vld [vmem:[%s50] sm:%s3]
    %s52 = scalar_lea.vmem [#allocation1], 48
    %53 = vst [vmem:[%s52] sm:%s3] %v51
    %s54 = smul.addr 4, 5
    %s55 = scalar_lea.vmem %s0, %s54
    %v56 = vld [vmem:[%s55] sm:%s3]
    %s57 = scalar_lea.vmem [#allocation1], 40
    %58 = vst [vmem:[%s57] sm:%s3] %v56
    %s59 = smul.addr 4, 4
    %s60 = scalar_lea.vmem %s0, %s59
    %v61 = vld [vmem:[%s60] sm:%s3]
    %s62 = scalar_lea.vmem [#allocation1], 32
    %63 = vst [vmem:[%s62] sm:%s3] %v61
    %s64 = smul.addr 4, 3
    %s65 = scalar_lea.vmem %s0, %s64
    %v66 = vld [vmem:[%s65] sm:%s3]
    %s67 = scalar_lea.vmem [#allocation1], 24
    %68 = vst [vmem:[%s67] sm:%s3] %v66
    %s69 = smul.addr 4, 2
    %s70 = scalar_lea.vmem %s0, %s69
    %v71 = vld [vmem:[%s70] sm:%s3]
    %s72 = scalar_lea.vmem [#allocation1], 16
    %73 = vst [vmem:[%s72] sm:%s3] %v71
    %s74 = scalar_lea.vmem %s0, 4
    %v75 = vld [vmem:[%s74] sm:%s3]
    %s76 = scalar_lea.vmem [#allocation1], 8
    %77 = vst [vmem:[%s76] sm:%s3] %v75
    %v78 = vld [vmem:[%s0] sm:%s3]
    %79 = vst [vmem:[#allocation1] sm:%s3] %v78
    %v80 = vld [vmem:[#allocation1] sm:$0x1]
    %s81 = scalar_lea.vmem [#allocation1], 31
    %v82 = vld [vmem:[%s81] sm:$0x2]
    %vm83 = vcmask 1041409
    %v84 = vsel %vm83, %v82, %v80
    %s85 = scalar_lea.vmem [#allocation1], 62
    %v86 = vld [vmem:[%s85] sm:$0x4]
    %vm87 = vcmask 1042434
    %v88 = vsel %vm87, %v86, %v84
    %s89 = scalar_lea.vmem [#allocation1], 93
    %v90 = vld [vmem:[%s89] sm:$0x8]
    %vm91 = vcmask 1043459
    %v92 = vsel %vm91, %v90, %v88
    %vm93 = vcmask 23552
    %94 = vst.msk [vmem:[#allocation0] sm:$0xf] %vm93, %v92
    %s95 = scalar_lea.vmem [#allocation1], 26
    %v96 = vld [vmem:[%s95] sm:$0x1]
    %s97 = scalar_lea.vmem [#allocation1], 57
    %v98 = vld [vmem:[%s97] sm:$0x2]
    %vm99 = vcmask 1041409
    %v100 = vsel %vm99, %v98, %v96
    %s101 = scalar_lea.vmem [#allocation1], 88
    %v102 = vld [vmem:[%s101] sm:$0x4]
    %vm103 = vcmask 1042434
    %v104 = vsel %vm103, %v102, %v100
    %s105 = scalar_lea.vmem [#allocation1], 119
    %v106 = vld [vmem:[%s105] sm:$0x8]
    %vm107 = vcmask 1043459
    %v108 = vsel %vm107, %v106, %v104
    %109 = vrot.lane.b32.xlu0 %v108, 33
    %v110 = vpop.permute.xlu0 %109
    %vm111 = vcmask 294152
    %112 = vst.msk [vmem:[#allocation0] sm:$0xf] %vm111, %v110
    %s113 = scalar_lea.vmem [#allocation1], 25
    %v114 = vld [vmem:[%s113] sm:$0x1]
    %s115 = scalar_lea.vmem [#allocation1], 56
    %v116 = vld [vmem:[%s115] sm:$0x2]
    %vm117 = vcmask 1041409
    %v118 = vsel %vm117, %v116, %v114
    %s119 = scalar_lea.vmem [#allocation1], 87
    %v120 = vld [vmem:[%s119] sm:$0x4]
    %vm121 = vcmask 1042434
    %v122 = vsel %vm121, %v120, %v118
    %s123 = scalar_lea.vmem [#allocation1], 118
    %v124 = vld [vmem:[%s123] sm:$0x8]
    %vm125 = vcmask 1043459
    %v126 = vsel %vm125, %v124, %v122
    %127 = vrot.lane.b32.xlu0 %v126, 30
    %v128 = vpop.permute.xlu0 %127
    %vm129 = vcmask 269552
    %130 = vst.msk [vmem:[#allocation0] sm:$0xf] %vm129, %v128
    %s131 = scalar_lea.vmem [#allocation1], 24
    %v132 = vld [vmem:[%s131] sm:$0x1]
    %s133 = scalar_lea.vmem [#allocation1], 55
    %v134 = vld [vmem:[%s133] sm:$0x2]
    %vm135 = vcmask 1041409
    %v136 = vsel %vm135, %v134, %v132
    %s137 = scalar_lea.vmem [#allocation1], 86
    %v138 = vld [vmem:[%s137] sm:$0x4]
    %vm139 = vcmask 1042434
    %v140 = vsel %vm139, %v138, %v136
    %s141 = scalar_lea.vmem [#allocation1], 117
    %v142 = vld [vmem:[%s141] sm:$0x8]
    %vm143 = vcmask 1043459
    %v144 = vsel %vm143, %v142, %v140
    %145 = vrot.lane.b32.xlu0 %v144, 27
    %v146 = vpop.permute.xlu0 %145
    %vm147 = vcmask 244952
    %148 = vst.msk [vmem:[#allocation0] sm:$0xf] %vm147, %v146
    %s149 = scalar_lea.vmem [#allocation1], 18
    %v150 = vld [vmem:[%s149] sm:$0x1]
    %s151 = scalar_lea.vmem [#allocation1], 49
    %v152 = vld [vmem:[%s151] sm:$0x2]
    %vm153 = vcmask 1041409
    %v154 = vsel %vm153, %v152, %v150
    %s155 = scalar_lea.vmem [#allocation1], 80
    %v156 = vld [vmem:[%s155] sm:$0x4]
    %vm157 = vcmask 1042434
    %v158 = vsel %vm157, %v156, %v154
    %s159 = scalar_lea.vmem [#allocation1], 111
    %v160 = vld [vmem:[%s159] sm:$0x8]
    %vm161 = vcmask 1043459
    %v162 = vsel %vm161, %v160, %v158
    %163 = vrot.lane.b32.xlu0 %v162, 24
    %v164 = vpop.permute.xlu0 %163
    %vm165 = vcmask 220352
    %166 = vst.msk [vmem:[#allocation0] sm:$0xf] %vm165, %v164
    %s167 = scalar_lea.vmem [#allocation1], 17
    %v168 = vld [vmem:[%s167] sm:$0x1]
    %s169 = scalar_lea.vmem [#allocation1], 48
    %v170 = vld [vmem:[%s169] sm:$0x2]
    %vm171 = vcmask 1041409
    %v172 = vsel %vm171, %v170, %v168
    %s173 = scalar_lea.vmem [#allocation1], 79
    %v174 = vld [vmem:[%s173] sm:$0x4]
    %vm175 = vcmask 1042434
    %v176 = vsel %vm175, %v174, %v172
    %s177 = scalar_lea.vmem [#allocation1], 110
    %v178 = vld [vmem:[%s177] sm:$0x8]
    %vm179 = vcmask 1043459
    %v180 = vsel %vm179, %v178, %v176
    %181 = vrot.lane.b32.xlu0 %v180, 21
    %v182 = vpop.permute.xlu0 %181
    %vm183 = vcmask 195752
    %184 = vst.msk [vmem:[#allocation0] sm:$0xf] %vm183, %v182
    %s185 = scalar_lea.vmem [#allocation1], 16
    %v186 = vld [vmem:[%s185] sm:$0x1]
    %s187 = scalar_lea.vmem [#allocation1], 47
    %v188 = vld [vmem:[%s187] sm:$0x2]
    %vm189 = vcmask 1041409
    %v190 = vsel %vm189, %v188, %v186
    %s191 = scalar_lea.vmem [#allocation1], 78
    %v192 = vld [vmem:[%s191] sm:$0x4]
    %vm193 = vcmask 1042434
    %v194 = vsel %vm193, %v192, %v190
    %s195 = scalar_lea.vmem [#allocation1], 109
    %v196 = vld [vmem:[%s195] sm:$0x8]
    %vm197 = vcmask 1043459
    %v198 = vsel %vm197, %v196, %v194
    %199 = vrot.lane.b32.xlu0 %v198, 18
    %v200 = vpop.permute.xlu0 %199
    %vm201 = vcmask 171152
    %202 = vst.msk [vmem:[#allocation0] sm:$0xf] %vm201, %v200
    %s203 = scalar_lea.vmem [#allocation1], 10
    %v204 = vld [vmem:[%s203] sm:$0x1]
    %s205 = scalar_lea.vmem [#allocation1], 41
    %v206 = vld [vmem:[%s205] sm:$0x2]
    %vm207 = vcmask 1041409
    %v208 = vsel %vm207, %v206, %v204
    %s209 = scalar_lea.vmem [#allocation1], 72
    %v210 = vld [vmem:[%s209] sm:$0x4]
    %vm211 = vcmask 1042434
    %v212 = vsel %vm211, %v210, %v208
    %s213 = scalar_lea.vmem [#allocation1], 103
    %v214 = vld [vmem:[%s213] sm:$0x8]
    %vm215 = vcmask 1043459
    %v216 = vsel %vm215, %v214, %v212
    %217 = vrot.lane.b32.xlu0 %v216, 15
    %v218 = vpop.permute.xlu0 %217
    %vm219 = vcmask 146552
    %220 = vst.msk [vmem:[#allocation0] sm:$0xf] %vm219, %v218
    %s221 = scalar_lea.vmem [#allocation1], 9
    %v222 = vld [vmem:[%s221] sm:$0x1]
    %s223 = scalar_lea.vmem [#allocation1], 40
    %v224 = vld [vmem:[%s223] sm:$0x2]
    %vm225 = vcmask 1041409
    %v226 = vsel %vm225, %v224, %v222
    %s227 = scalar_lea.vmem [#allocation1], 71
    %v228 = vld [vmem:[%s227] sm:$0x4]
    %vm229 = vcmask 1042434
    %v230 = vsel %vm229, %v228, %v226
    %s231 = scalar_lea.vmem [#allocation1], 102
    %v232 = vld [vmem:[%s231] sm:$0x8]
    %vm233 = vcmask 1043459
    %v234 = vsel %vm233, %v232, %v230
    %235 = vrot.lane.b32.xlu0 %v234, 12
    %v236 = vpop.permute.xlu0 %235
    %vm237 = vcmask 121952
    %238 = vst.msk [vmem:[#allocation0] sm:$0xf] %vm237, %v236
    %s239 = scalar_lea.vmem [#allocation1], 8
    %v240 = vld [vmem:[%s239] sm:$0x1]
    %s241 = scalar_lea.vmem [#allocation1], 39
    %v242 = vld [vmem:[%s241] sm:$0x2]
    %vm243 = vcmask 1041409
    %v244 = vsel %vm243, %v242, %v240
    %s245 = scalar_lea.vmem [#allocation1], 70
    %v246 = vld [vmem:[%s245] sm:$0x4]
    %vm247 = vcmask 1042434
    %v248 = vsel %vm247, %v246, %v244
    %s249 = scalar_lea.vmem [#allocation1], 101
    %v250 = vld [vmem:[%s249] sm:$0x8]
    %vm251 = vcmask 1043459
    %v252 = vsel %vm251, %v250, %v248
    %253 = vrot.lane.b32.xlu0 %v252, 9
    %v254 = vpop.permute.xlu0 %253
    %vm255 = vcmask 97352
    %256 = vst.msk [vmem:[#allocation0] sm:$0xf] %vm255, %v254
    %s257 = scalar_lea.vmem [#allocation1], 2
    %v258 = vld [vmem:[%s257] sm:$0x1]
    %s259 = scalar_lea.vmem [#allocation1], 33
    %v260 = vld [vmem:[%s259] sm:$0x2]
    %vm261 = vcmask 1041409
    %v262 = vsel %vm261, %v260, %v258
    %s263 = scalar_lea.vmem [#allocation1], 64
    %v264 = vld [vmem:[%s263] sm:$0x4]
    %vm265 = vcmask 1042434
    %v266 = vsel %vm265, %v264, %v262
    %s267 = scalar_lea.vmem [#allocation1], 95
    %v268 = vld [vmem:[%s267] sm:$0x8]
    %vm269 = vcmask 1043459
    %v270 = vsel %vm269, %v268, %v266
    %271 = vrot.lane.b32.xlu0 %v270, 6
    %v272 = vpop.permute.xlu0 %271
    %vm273 = vcmask 72752
    %274 = vst.msk [vmem:[#allocation0] sm:$0xf] %vm273, %v272
    %s275 = scalar_lea.vmem [#allocation1], 1
    %v276 = vld [vmem:[%s275] sm:$0x1]
    %s277 = scalar_lea.vmem [#allocation1], 32
    %v278 = vld [vmem:[%s277] sm:$0x2]
    %vm279 = vcmask 1041409
    %v280 = vsel %vm279, %v278, %v276
    %s281 = scalar_lea.vmem [#allocation1], 63
    %v282 = vld [vmem:[%s281] sm:$0x4]
    %vm283 = vcmask 1042434
    %v284 = vsel %vm283, %v282, %v280
    %s285 = scalar_lea.vmem [#allocation1], 94
    %v286 = vld [vmem:[%s285] sm:$0x8]
    %vm287 = vcmask 1043459
    %v288 = vsel %vm287, %v286, %v284
    %289 = vrot.lane.b32.xlu0 %v288, 3
    %v290 = vpop.permute.xlu0 %289
    %vm291 = vcmask 48152
    %292 = vst.msk [vmem:[#allocation0] sm:$0xf] %vm291, %v290
    %s294 = sshllo.u32 0, 4
    %v296 = vld [vmem:[#allocation0] sm:%s294]
    %s297 = sshllo.u32 0, 4
    %298 = vst [vmem:[%s1] sm:%s297] %v296

// kernel: pua_forward.7
$region0: #{pua_forward.7}
  #allocation0 [shape = 'u32[]', space=smem, size = 0x4, offset = 0x4, fixed_abs, tag = 'smem constant byte address 0x4 - core index']
  #allocation1 [shape = 'u32[144,128]{1,0:T(1,128)}', space=vmem, size = 0x12000, scoped, tag = 'internal scratch']
  %s0 = inlined_call_operand.vmem [shape: f32[4,512], index: 0, kind: input, shape index: {}]
  %s1 = inlined_call_operand.vmem [shape: f32[4,1], index: 1, kind: input, shape index: {}]
  %s2 = inlined_call_operand.vmem [shape: f32[4,1], index: 2, kind: input, shape index: {}]
  %s3 = inlined_call_operand.vmem [shape: f32[4,512], index: 3, kind: input, shape index: {}]
  %s4 = inlined_call_operand.vmem [shape: f32[4,512], index: 4, kind: output, shape index: {}]
  %s5 = sld [smem:[#allocation0]]
  $region26: #{pua_forward.7} parent=0
    _
  %s7 = ssub.s32 1, %s5
  %s8 = scalar_select 0, %s7, %s5
  // Predicated region
  $region2: #{pua_forward.7} parent=0 // pred_check
    _
  $region3: #{pua_forward.7} parent=0 // pred_check_branch
    %10 = sbr.rel (0) target = $region5
  $region4: #{pua_forward.7} parent=0 // pred_region
    _
  $region5: #{pua_forward.7} parent=0 // pred_fallthru
    _
  // Predicated region
  $region6: #{pua_forward.7} parent=0 // pred_check
    _
  $region7: #{pua_forward.7} parent=0 // pred_check_branch
    %12 = sbr.rel (0) target = $region9
  $region8: #{pua_forward.7} parent=0 // pred_region
    _
  $region9: #{pua_forward.7} parent=0 // pred_fallthru
    _
  // Predicated region
  $region10: #{pua_forward.7} parent=0 // pred_check
    _
  $region11: #{pua_forward.7} parent=0 // pred_check_branch
    %14 = sbr.rel (0) target = $region13
  $region12: #{pua_forward.7} parent=0 // pred_region
    _
  $region13: #{pua_forward.7} parent=0 // pred_fallthru
    _
  // Predicated region
  $region14: #{pua_forward.7} parent=0 // pred_check
    _
  $region15: #{pua_forward.7} parent=0 // pred_check_branch
    %16 = sbr.rel (0) target = $region17
  $region16: #{pua_forward.7} parent=0 // pred_region
    _
  $region17: #{pua_forward.7} parent=0 // pred_fallthru
    _
  %v17 = vld [vmem:[%s0] sm:$0xff]
  %v18 = vld [vmem:[%s0 + $0x8] sm:$0xff]
  %v19 = vld [vmem:[%s1] sm:$0xf]
  %21 = vset.pattern.permute.xlu0 0
  %22 = vperm.xlu0 %21, %v19
  %v23 = vpop.permute.xlu0 %22
  %v25 = vunpack.c.l.s4 839922192
  %v26 = vunpack.c.0.s8 %v25
  %v27 = vlaneseq
  %v28 = vshrl.u32 %v27, 7
  %v29 = vsub.s32 %v26, %v28
  %v30 = vrot.slane %v23, %v29
  %v32 = vmul.f32 %v17, %v30
  %v33 = vmul.f32 %v18, %v30
  %v34 = vld [vmem:[%s2] sm:$0xf]
  %36 = vset.pattern.permute.xlu0 0
  %37 = vperm.xlu0 %36, %v34
  %v38 = vpop.permute.xlu0 %37
  %v40 = vunpack.c.l.s4 839922192
  %v41 = vunpack.c.0.s8 %v40
  %v42 = vlaneseq
  %v43 = vshrl.u32 %v42, 7
  %v44 = vsub.s32 %v41, %v43
  %v45 = vrot.slane %v38, %v44
  %v47 = vadd.f32 %v32, %v45
  %v48 = vadd.f32 %v33, %v45
  %vm49 = vcmp.ge.f32.partialorder %v47, 0.0
  %vm50 = vcmp.ge.f32.partialorder %v48, 0.0
  %v51 = vmul.f32 %v47, 0.2
  %v52 = vmul.f32 %v48, 0.2
  %v53 = vsel %vm49, %v47, %v51
  %v54 = vsel %vm50, %v48, %v52
  %v55 = vld [vmem:[%s3] sm:$0xff]
  %v56 = vld [vmem:[%s3 + $0x8] sm:$0xff]
  %v57 = vadd.f32 %v53, %v55
  %v58 = vadd.f32 %v54, %v56
  %59 = vst [vmem:[%s4] sm:$0xff] %v57
  %60 = vst [vmem:[%s4 + $0x8] sm:$0xff] %v58
  // Predicated region
  $region18: #{pua_forward.7} parent=0 // pred_check
    _
  $region19: #{pua_forward.7} parent=0 // pred_check_branch
    %62 = sbr.rel (0) target = $region21
  $region20: #{pua_forward.7} parent=0 // pred_region
    _
  $region21: #{pua_forward.7} parent=0 // pred_fallthru
    _
  // Predicated region
  $region22: #{pua_forward.7} parent=0 // pred_check
    _
  $region23: #{pua_forward.7} parent=0 // pred_check_branch
    %64 = sbr.rel (0) target = $region25
  $region24: #{pua_forward.7} parent=0 // pred_region
    _
  $region25: #{pua_forward.7} parent=0 // pred_fallthru
    _

// kernel: pua_forward.6
$region0: #{pua_forward.6}
  #allocation0 [shape = 'u32[]', space=smem, size = 0x4, offset = 0x4, fixed_abs, tag = 'smem constant byte address 0x4 - core index']
  #allocation1 [shape = 'u32[144,128]{1,0:T(1,128)}', space=vmem, size = 0x12000, scoped, tag = 'internal scratch']
  %s0 = inlined_call_operand.vmem [shape: f32[4,36], index: 0, kind: input, shape index: {}]
  %s1 = inlined_call_operand.vmem [shape: f32[36,512], index: 1, kind: input, shape index: {}]
  %s2 = inlined_call_operand.vmem [shape: f32[4,512], index: 2, kind: output, shape index: {0}]
  %s3 = inlined_call_operand.vmem [shape: f32[1,4,1], index: 3, kind: output, shape index: {1}]
  %s4 = inlined_call_operand.vmem [shape: f32[1,4,1], index: 4, kind: output, shape index: {2}]
  %5 = xla_tuple %s2, %s3, %s4
  %s6 = sld [smem:[#allocation0]]
  $region34: #{pua_forward.6} parent=0
    _
  %s8 = ssub.s32 1, %s6
  %s9 = scalar_select 0, %s8, %s6
  // Predicated region
  $region2: #{pua_forward.6} parent=0 // pred_check
    _
  $region3: #{pua_forward.6} parent=0 // pred_check_branch
    %11 = sbr.rel (0) target = $region5
  $region4: #{pua_forward.6} parent=0 // pred_region
    _
  $region5: #{pua_forward.6} parent=0 // pred_fallthru
    _
  // Predicated region
  $region6: #{pua_forward.6} parent=0 // pred_check
    _
  $region7: #{pua_forward.6} parent=0 // pred_check_branch
    %13 = sbr.rel (0) target = $region9
  $region8: #{pua_forward.6} parent=0 // pred_region
    _
  $region9: #{pua_forward.6} parent=0 // pred_fallthru
    _
  %v14 = vld [vmem:[%s0] sm:$0xf]
  %v15 = vld [vmem:[%s1] sm:$0xff]
  %v16 = vld [vmem:[%s1 + $0x8] sm:$0xff]
  %v17 = vld [vmem:[%s1 + $0x10] sm:$0xff]
  %v18 = vld [vmem:[%s1 + $0x18] sm:$0xff]
  %v19 = vld [vmem:[%s1 + $0x20] sm:$0xff]
  %v20 = vld [vmem:[%s1 + $0x28] sm:$0xff]
  %v21 = vld [vmem:[%s1 + $0x30] sm:$0xff]
  %v22 = vld [vmem:[%s1 + $0x38] sm:$0xff]
  %v23 = vld [vmem:[%s1 + $0x40] sm:$0xff]
  %v24 = vld [vmem:[%s1 + $0x48] sm:$0xff]
  %v25 = vld [vmem:[%s1 + $0x50] sm:$0xff]
  %v26 = vld [vmem:[%s1 + $0x58] sm:$0xff]
  %v27 = vld [vmem:[%s1 + $0x60] sm:$0xff]
  %v28 = vld [vmem:[%s1 + $0x68] sm:$0xff]
  %v29 = vld [vmem:[%s1 + $0x70] sm:$0xff]
  %v30 = vld [vmem:[%s1 + $0x78] sm:$0xff]
  %v31 = vld [vmem:[%s1 + $0x80] sm:$0xf]
  %v32 = vld [vmem:[%s1 + $0x88] sm:$0xf]
  %v33 = vld [vmem:[%s1 + $0x90] sm:$0xf]
  %v34 = vld [vmem:[%s1 + $0x98] sm:$0xf]
  %vm35 = vcmask 293888
  %v37 = vsel %vm35, %v14, 0
  %vm39 = vcmask 1043456
  %v41 = vsel %vm39, %v31, 0
  %v44 = vsel %vm39, %v32, 0
  %v47 = vsel %vm39, %v33, 0
  %v50 = vsel %vm39, %v34, 0
  %v52 = vand.u32 %v16, 4294901760
  %53 = vmatprep.subr.mxu0 %v52
  %v54 = vand.u32 %v15, 4294901760
  %55 = vmatpush1.msra.mxu0 %v54
  %v56 = vand.u32 %v20, 4294901760
  %57 = vmatprep.subr.mxu0 %v56
  %v58 = vand.u32 %v19, 4294901760
  %59 = vmatpush1.msra.mxu0 %v58
  %v60 = vand.u32 %v24, 4294901760
  %61 = vmatprep.subr.mxu0 %v60
  %v62 = vand.u32 %v23, 4294901760
  %63 = vmatpush1.msra.mxu0 %v62
  %v64 = vand.u32 %v28, 4294901760
  %65 = vmatprep.subr.mxu0 %v64
  %v66 = vand.u32 %v27, 4294901760
  %67 = vmatpush1.msra.mxu0 %v66
  %v68 = vand.u32 %v44, 4294901760
  %69 = vmatprep.subr.mxu0 %v68
  %v70 = vand.u32 %v41, 4294901760
  %71 = vmatpush1.msra.mxu0 %v70
  %72 = vmatprep.subr.mxu0 0.0
  %73 = vmatpush1.msra.mxu0 0.0
  %74 = vmatprep.subr.mxu0 0.0
  %75 = vmatpush1.msra.mxu0 0.0
  %76 = vmatprep.subr.mxu0 0.0
  %77 = vmatpush1.msra.mxu0 0.0
  %78 = vmatprep.subr.mxu0 0.0
  %79 = vmatpush1.msra.mxu0 0.0
  %80 = vmatprep.subr.mxu0 0.0
  %81 = vmatpush1.msra.mxu0 0.0
  %82 = vmatprep.subr.mxu0 0.0
  %83 = vmatpush1.msra.mxu0 0.0
  %84 = vmatprep.subr.mxu0 0.0
  %85 = vmatpush1.msra.mxu0 0.0
  %86 = vmatprep.subr.mxu0 0.0
  %87 = vmatpush1.msra.mxu0 0.0
  %88 = vmatprep.subr.mxu0 0.0
  %89 = vmatpush1.msra.mxu0 0.0
  %90 = vmatprep.subr.mxu0 0.0
  %91 = vmatpush1.msra.mxu0 0.0
  %92 = vmatprep.subr.mxu0 0.0
  %93 = vmatpush1.msra.mxu0 0.0
  %94 = vmatprep.subr.mxu0 0.0
  %95 = vmatpush1.msra.mxu0 0.0
  %96 = vmatprep.subr.mxu0 0.0
  %97 = vmatpush1.msra.mxu0 0.0
  %98 = vmatprep.subr.mxu0 0.0
  %99 = vmatpush1.msra.mxu0 0.0
  %100 = vmatprep.subr.mxu0 0.0
  %101 = vmatpush1.msra.mxu0 0.0
  %102 = vmatprep.subr.mxu0 0.0
  %103 = vmatpush1.msra.mxu0 0.0
  %104 = vmatprep.subr.mxu0 0.0
  %105 = vmatpush1.msra.mxu0 0.0
  %106 = vmatprep.subr.mxu0 0.0
  %107 = vmatpush1.msra.mxu0 0.0
  %108 = vmatprep.subr.mxu0 0.0
  %109 = vmatpush1.msra.mxu0 0.0
  %110 = vmatprep.subr.mxu0 0.0
  %111 = vmatpush1.msra.mxu0 0.0
  %112 = vmatprep.subr.mxu0 0.0
  %113 = vmatpush1.msra.mxu0 0.0
  %114 = vmatprep.subr.mxu0 0.0
  %115 = vmatpush1.msra.mxu0 0.0
  %116 = vmatprep.subr.mxu0 0.0
  %117 = vmatpush1.msra.mxu0 0.0
  %118 = vmatprep.subr.mxu0 0.0
  %119 = vmatpush1.msra.mxu0 0.0
  %120 = vmatprep.subr.mxu0 0.0
  %121 = vmatpush1.msra.mxu0 0.0
  %122 = vmatprep.subr.mxu0 0.0
  %123 = vmatpush1.msra.mxu0 0.0
  %124 = vmatprep.subr.mxu0 0.0
  %125 = vmatpush1.msra.mxu0 0.0
  %126 = vmatprep.mubr.f32.mxu0 0.0
  %v127 = vand.u32 %v37, 4294901760
  %v128 = vsub.f32 %v37, %v127
  %v129 = vand.u32 %v128, 4294901760
  %v130 = vsub.f32 %v128, %v129
  %v131 = vand.u32 %v130, 4294901760
  %132 = vmatmul.mubr.f32.gmra.mrb[0].mxu0 %v131
  %v133 = vpop.f32.mrb[0].mxu0
  %v134 = vadd.f32 0.0, %v133
  %v135 = vpop.f32.mrb[0].mxu0
  %v136 = vadd.f32 0.0, %v135
  %137 = vdwg.mxu0
  %v138 = vand.u32 %v16, 4294901760
  %v139 = vsub.f32 %v16, %v138
  %v140 = vand.u32 %v139, 4294901760
  %v141 = vsub.f32 %v139, %v140
  %v142 = vand.u32 %v141, 4294901760
  %143 = vmatprep.subr.mxu0 %v142
  %v144 = vand.u32 %v15, 4294901760
  %v145 = vsub.f32 %v15, %v144
  %v146 = vand.u32 %v145, 4294901760
  %v147 = vsub.f32 %v145, %v146
  %v148 = vand.u32 %v147, 4294901760
  %149 = vmatpush1.msra.mxu0 %v148
  %v150 = vand.u32 %v20, 4294901760
  %v151 = vsub.f32 %v20, %v150
  %v152 = vand.u32 %v151, 4294901760
  %v153 = vsub.f32 %v151, %v152
  %v154 = vand.u32 %v153, 4294901760
  %155 = vmatprep.subr.mxu0 %v154
  %v156 = vand.u32 %v19, 4294901760
  %v157 = vsub.f32 %v19, %v156
  %v158 = vand.u32 %v157, 4294901760
  %v159 = vsub.f32 %v157, %v158
  %v160 = vand.u32 %v159, 4294901760
  %161 = vmatpush1.msra.mxu0 %v160
  %v162 = vand.u32 %v24, 4294901760
  %v163 = vsub.f32 %v24, %v162
  %v164 = vand.u32 %v163, 4294901760
  %v165 = vsub.f32 %v163, %v164
  %v166 = vand.u32 %v165, 4294901760
  %167 = vmatprep.subr.mxu0 %v166
  %v168 = vand.u32 %v23, 4294901760
  %v169 = vsub.f32 %v23, %v168
  %v170 = vand.u32 %v169, 4294901760
  %v171 = vsub.f32 %v169, %v170
  %v172 = vand.u32 %v171, 4294901760
  %173 = vmatpush1.msra.mxu0 %v172
  %v174 = vand.u32 %v28, 4294901760
  %v175 = vsub.f32 %v28, %v174
  %v176 = vand.u32 %v175, 4294901760
  %v177 = vsub.f32 %v175, %v176
  %v178 = vand.u32 %v177, 4294901760
  %179 = vmatprep.subr.mxu0 %v178
  %v180 = vand.u32 %v27, 4294901760
  %v181 = vsub.f32 %v27, %v180
  %v182 = vand.u32 %v181, 4294901760
  %v183 = vsub.f32 %v181, %v182
  %v184 = vand.u32 %v183, 4294901760
  %185 = vmatpush1.msra.mxu0 %v184
  %v186 = vand.u32 %v44, 4294901760
  %v187 = vsub.f32 %v44, %v186
  %v188 = vand.u32 %v187, 4294901760
  %v189 = vsub.f32 %v187, %v188
  %v190 = vand.u32 %v189, 4294901760
  %191 = vmatprep.subr.mxu0 %v190
  %v192 = vand.u32 %v41, 4294901760
  %v193 = vsub.f32 %v41, %v192
  %v194 = vand.u32 %v193, 4294901760
  %v195 = vsub.f32 %v193, %v194
  %v196 = vand.u32 %v195, 4294901760
  %197 = vmatpush1.msra.mxu0 %v196
  %198 = vmatprep.subr.mxu0 0.0
  %199 = vmatpush1.msra.mxu0 0.0
  %200 = vmatprep.subr.mxu0 0.0
  %201 = vmatpush1.msra.mxu0 0.0
  %202 = vmatprep.subr.mxu0 0.0
  %203 = vmatpush1.msra.mxu0 0.0
  %204 = vmatprep.subr.mxu0 0.0
  %205 = vmatpush1.msra.mxu0 0.0
  %206 = vmatprep.subr.mxu0 0.0
  %207 = vmatpush1.msra.mxu0 0.0
  %208 = vmatprep.subr.mxu0 0.0
  %209 = vmatpush1.msra.mxu0 0.0
  %210 = vmatprep.subr.mxu0 0.0
  %211 = vmatpush1.msra.mxu0 0.0
  %212 = vmatprep.subr.mxu0 0.0
  %213 = vmatpush1.msra.mxu0 0.0
  %214 = vmatprep.subr.mxu0 0.0
  %215 = vmatpush1.msra.mxu0 0.0
  %216 = vmatprep.subr.mxu0 0.0
  %217 = vmatpush1.msra.mxu0 0.0
  %218 = vmatprep.subr.mxu0 0.0
  %219 = vmatpush1.msra.mxu0 0.0
  %220 = vmatprep.subr.mxu0 0.0
  %221 = vmatpush1.msra.mxu0 0.0
  %222 = vmatprep.subr.mxu0 0.0
  %223 = vmatpush1.msra.mxu0 0.0
  %224 = vmatprep.subr.mxu0 0.0
  %225 = vmatpush1.msra.mxu0 0.0
  %226 = vmatprep.subr.mxu0 0.0
  %227 = vmatpush1.msra.mxu0 0.0
  %228 = vmatprep.subr.mxu0 0.0
  %229 = vmatpush1.msra.mxu0 0.0
  %230 = vmatprep.subr.mxu0 0.0
  %231 = vmatpush1.msra.mxu0 0.0
  %232 = vmatprep.subr.mxu0 0.0
  %233 = vmatpush1.msra.mxu0 0.0
  %234 = vmatprep.subr.mxu0 0.0
  %235 = vmatpush1.msra.mxu0 0.0
  %236 = vmatprep.subr.mxu0 0.0
  %237 = vmatpush1.msra.mxu0 0.0
  %238 = vmatprep.subr.mxu0 0.0
  %239 = vmatpush1.msra.mxu0 0.0
  %240 = vmatprep.subr.mxu0 0.0
  %241 = vmatpush1.msra.mxu0 0.0
  %242 = vmatprep.subr.mxu0 0.0
  %243 = vmatpush1.msra.mxu0 0.0
  %244 = vmatprep.subr.mxu0 0.0
  %245 = vmatpush1.msra.mxu0 0.0
  %246 = vmatprep.subr.mxu0 0.0
  %247 = vmatpush1.msra.mxu0 0.0
  %248 = vmatprep.subr.mxu0 0.0
  %249 = vmatpush1.msra.mxu0 0.0
  %250 = vmatprep.subr.mxu0 0.0
  %251 = vmatpush1.msra.mxu0 0.0
  %252 = vmatprep.mubr.f32.mxu0 0.0
  %v253 = vand.u32 %v37, 4294901760
  %254 = vmatmul.mubr.f32.gmra.mrb[0].mxu0 %v253
  %v255 = vpop.f32.mrb[0].mxu0
  %v256 = vadd.f32 %v134, %v255
  %v257 = vpop.f32.mrb[0].mxu0
  %v258 = vadd.f32 %v136, %v257
  %259 = vdwg.mxu0
  %v260 = vand.u32 %v16, 4294901760
  %v261 = vsub.f32 %v16, %v260
  %262 = vmatprep.subr.mxu0 %v261
  %v263 = vand.u32 %v15, 4294901760
  %v264 = vsub.f32 %v15, %v263
  %265 = vmatpush1.msra.mxu0 %v264
  %v266 = vand.u32 %v20, 4294901760
  %v267 = vsub.f32 %v20, %v266
  %268 = vmatprep.subr.mxu0 %v267
  %v269 = vand.u32 %v19, 4294901760
  %v270 = vsub.f32 %v19, %v269
  %271 = vmatpush1.msra.mxu0 %v270
  %v272 = vand.u32 %v24, 4294901760
  %v273 = vsub.f32 %v24, %v272
  %274 = vmatprep.subr.mxu0 %v273
  %v275 = vand.u32 %v23, 4294901760
  %v276 = vsub.f32 %v23, %v275
  %277 = vmatpush1.msra.mxu0 %v276
  %v278 = vand.u32 %v28, 4294901760
  %v279 = vsub.f32 %v28, %v278
  %280 = vmatprep.subr.mxu0 %v279
  %v281 = vand.u32 %v27, 4294901760
  %v282 = vsub.f32 %v27, %v281
  %283 = vmatpush1.msra.mxu0 %v282
  %v284 = vand.u32 %v44, 4294901760
  %v285 = vsub.f32 %v44, %v284
  %286 = vmatprep.subr.mxu0 %v285
  %v287 = vand.u32 %v41, 4294901760
  %v288 = vsub.f32 %v41, %v287
  %289 = vmatpush1.msra.mxu0 %v288
  %290 = vmatprep.subr.mxu0 0.0
  %291 = vmatpush1.msra.mxu0 0.0
  %292 = vmatprep.subr.mxu0 0.0
  %293 = vmatpush1.msra.mxu0 0.0
  %294 = vmatprep.subr.mxu0 0.0
  %295 = vmatpush1.msra.mxu0 0.0
  %296 = vmatprep.subr.mxu0 0.0
  %297 = vmatpush1.msra.mxu0 0.0
  %298 = vmatprep.subr.mxu0 0.0
  %299 = vmatpush1.msra.mxu0 0.0
  %300 = vmatprep.subr.mxu0 0.0
  %301 = vmatpush1.msra.mxu0 0.0
  %302 = vmatprep.subr.mxu0 0.0
  %303 = vmatpush1.msra.mxu0 0.0
  %304 = vmatprep.subr.mxu0 0.0
  %305 = vmatpush1.msra.mxu0 0.0
  %306 = vmatprep.subr.mxu0 0.0
  %307 = vmatpush1.msra.mxu0 0.0
  %308 = vmatprep.subr.mxu0 0.0
  %309 = vmatpush1.msra.mxu0 0.0
  %310 = vmatprep.subr.mxu0 0.0
  %311 = vmatpush1.msra.mxu0 0.0
  %312 = vmatprep.subr.mxu0 0.0
  %313 = vmatpush1.msra.mxu0 0.0
  %314 = vmatprep.subr.mxu0 0.0
  %315 = vmatpush1.msra.mxu0 0.0
  %316 = vmatprep.subr.mxu0 0.0
  %317 = vmatpush1.msra.mxu0 0.0
  %318 = vmatprep.subr.mxu0 0.0
  %319 = vmatpush1.msra.mxu0 0.0
  %320 = vmatprep.subr.mxu0 0.0
  %321 = vmatpush1.msra.mxu0 0.0
  %322 = vmatprep.subr.mxu0 0.0
  %323 = vmatpush1.msra.mxu0 0.0
  %324 = vmatprep.subr.mxu0 0.0
  %325 = vmatpush1.msra.mxu0 0.0
  %326 = vmatprep.subr.mxu0 0.0
  %327 = vmatpush1.msra.mxu0 0.0
  %328 = vmatprep.subr.mxu0 0.0
  %329 = vmatpush1.msra.mxu0 0.0
  %330 = vmatprep.subr.mxu0 0.0
  %331 = vmatpush1.msra.mxu0 0.0
  %332 = vmatprep.subr.mxu0 0.0
  %333 = vmatpush1.msra.mxu0 0.0
  %334 = vmatprep.subr.mxu0 0.0
  %335 = vmatpush1.msra.mxu0 0.0
  %336 = vmatprep.subr.mxu0 0.0
  %337 = vmatpush1.msra.mxu0 0.0
  %338 = vmatprep.subr.mxu0 0.0
  %339 = vmatpush1.msra.mxu0 0.0
  %340 = vmatprep.subr.mxu0 0.0
  %341 = vmatpush1.msra.mxu0 0.0
  %342 = vmatprep.subr.mxu0 0.0
  %343 = vmatpush1.msra.mxu0 0.0
  %344 = vmatprep.mubr.f32.mxu0 0.0
  %v345 = vand.u32 %v37, 4294901760
  %v346 = vsub.f32 %v37, %v345
  %347 = vmatmul.mubr.f32.gmra.mrb[0].mxu0 %v346
  %v348 = vpop.f32.mrb[0].mxu0
  %v349 = vadd.f32 %v256, %v348
  %v350 = vpop.f32.mrb[0].mxu0
  %v351 = vadd.f32 %v258, %v350
  %352 = vdwg.mxu0
  %v353 = vand.u32 %v16, 4294901760
  %354 = vmatprep.subr.mxu0 %v353
  %v355 = vand.u32 %v15, 4294901760
  %356 = vmatpush1.msra.mxu0 %v355
  %v357 = vand.u32 %v20, 4294901760
  %358 = vmatprep.subr.mxu0 %v357
  %v359 = vand.u32 %v19, 4294901760
  %360 = vmatpush1.msra.mxu0 %v359
  %v361 = vand.u32 %v24, 4294901760
  %362 = vmatprep.subr.mxu0 %v361
  %v363 = vand.u32 %v23, 4294901760
  %364 = vmatpush1.msra.mxu0 %v363
  %v365 = vand.u32 %v28, 4294901760
  %366 = vmatprep.subr.mxu0 %v365
  %v367 = vand.u32 %v27, 4294901760
  %368 = vmatpush1.msra.mxu0 %v367
  %v369 = vand.u32 %v44, 4294901760
  %370 = vmatprep.subr.mxu0 %v369
  %v371 = vand.u32 %v41, 4294901760
  %372 = vmatpush1.msra.mxu0 %v371
  %373 = vmatprep.subr.mxu0 0.0
  %374 = vmatpush1.msra.mxu0 0.0
  %375 = vmatprep.subr.mxu0 0.0
  %376 = vmatpush1.msra.mxu0 0.0
  %377 = vmatprep.subr.mxu0 0.0
  %378 = vmatpush1.msra.mxu0 0.0
  %379 = vmatprep.subr.mxu0 0.0
  %380 = vmatpush1.msra.mxu0 0.0
  %381 = vmatprep.subr.mxu0 0.0
  %382 = vmatpush1.msra.mxu0 0.0
  %383 = vmatprep.subr.mxu0 0.0
  %384 = vmatpush1.msra.mxu0 0.0
  %385 = vmatprep.subr.mxu0 0.0
  %386 = vmatpush1.msra.mxu0 0.0
  %387 = vmatprep.subr.mxu0 0.0
  %388 = vmatpush1.msra.mxu0 0.0
  %389 = vmatprep.subr.mxu0 0.0
  %390 = vmatpush1.msra.mxu0 0.0
  %391 = vmatprep.subr.mxu0 0.0
  %392 = vmatpush1.msra.mxu0 0.0
  %393 = vmatprep.subr.mxu0 0.0
  %394 = vmatpush1.msra.mxu0 0.0
  %395 = vmatprep.subr.mxu0 0.0
  %396 = vmatpush1.msra.mxu0 0.0
  %397 = vmatprep.subr.mxu0 0.0
  %398 = vmatpush1.msra.mxu0 0.0
  %399 = vmatprep.subr.mxu0 0.0
  %400 = vmatpush1.msra.mxu0 0.0
  %401 = vmatprep.subr.mxu0 0.0
  %402 = vmatpush1.msra.mxu0 0.0
  %403 = vmatprep.subr.mxu0 0.0
  %404 = vmatpush1.msra.mxu0 0.0
  %405 = vmatprep.subr.mxu0 0.0
  %406 = vmatpush1.msra.mxu0 0.0
  %407 = vmatprep.subr.mxu0 0.0
  %408 = vmatpush1.msra.mxu0 0.0
  %409 = vmatprep.subr.mxu0 0.0
  %410 = vmatpush1.msra.mxu0 0.0
  %411 = vmatprep.subr.mxu0 0.0
  %412 = vmatpush1.msra.mxu0 0.0
  %413 = vmatprep.subr.mxu0 0.0
  %414 = vmatpush1.msra.mxu0 0.0
  %415 = vmatprep.subr.mxu0 0.0
  %416 = vmatpush1.msra.mxu0 0.0
  %417 = vmatprep.subr.mxu0 0.0
  %418 = vmatpush1.msra.mxu0 0.0
  %419 = vmatprep.subr.mxu0 0.0
  %420 = vmatpush1.msra.mxu0 0.0
  %421 = vmatprep.subr.mxu0 0.0
  %422 = vmatpush1.msra.mxu0 0.0
  %423 = vmatprep.subr.mxu0 0.0
  %424 = vmatpush1.msra.mxu0 0.0
  %425 = vmatprep.subr.mxu0 0.0
  %426 = vmatpush1.msra.mxu0 0.0
  %427 = vmatprep.mubr.f32.mxu0 0.0
  %v428 = vand.u32 %v37, 4294901760
  %v429 = vsub.f32 %v37, %v428
  %v430 = vand.u32 %v429, 4294901760
  %431 = vmatmul.mubr.f32.gmra.mrb[0].mxu0 %v430
  %v432 = vpop.f32.mrb[0].mxu0
  %v433 = vadd.f32 %v349, %v432
  %v434 = vpop.f32.mrb[0].mxu0
  %v435 = vadd.f32 %v351, %v434
  %436 = vdwg.mxu0
  %v437 = vand.u32 %v16, 4294901760
  %v438 = vsub.f32 %v16, %v437
  %v439 = vand.u32 %v438, 4294901760
  %440 = vmatprep.subr.mxu0 %v439
  %v441 = vand.u32 %v15, 4294901760
  %v442 = vsub.f32 %v15, %v441
  %v443 = vand.u32 %v442, 4294901760
  %444 = vmatpush1.msra.mxu0 %v443
  %v445 = vand.u32 %v20, 4294901760
  %v446 = vsub.f32 %v20, %v445
  %v447 = vand.u32 %v446, 4294901760
  %448 = vmatprep.subr.mxu0 %v447
  %v449 = vand.u32 %v19, 4294901760
  %v450 = vsub.f32 %v19, %v449
  %v451 = vand.u32 %v450, 4294901760
  %452 = vmatpush1.msra.mxu0 %v451
  %v453 = vand.u32 %v24, 4294901760
  %v454 = vsub.f32 %v24, %v453
  %v455 = vand.u32 %v454, 4294901760
  %456 = vmatprep.subr.mxu0 %v455
  %v457 = vand.u32 %v23, 4294901760
  %v458 = vsub.f32 %v23, %v457
  %v459 = vand.u32 %v458, 4294901760
  %460 = vmatpush1.msra.mxu0 %v459
  %v461 = vand.u32 %v28, 4294901760
  %v462 = vsub.f32 %v28, %v461
  %v463 = vand.u32 %v462, 4294901760
  %464 = vmatprep.subr.mxu0 %v463
  %v465 = vand.u32 %v27, 4294901760
  %v466 = vsub.f32 %v27, %v465
  %v467 = vand.u32 %v466, 4294901760
  %468 = vmatpush1.msra.mxu0 %v467
  %v469 = vand.u32 %v44, 4294901760
  %v470 = vsub.f32 %v44, %v469
  %v471 = vand.u32 %v470, 4294901760
  %472 = vmatprep.subr.mxu0 %v471
  %v473 = vand.u32 %v41, 4294901760
  %v474 = vsub.f32 %v41, %v473
  %v475 = vand.u32 %v474, 4294901760
  %476 = vmatpush1.msra.mxu0 %v475
  %477 = vmatprep.subr.mxu0 0.0
  %478 = vmatpush1.msra.mxu0 0.0
  %479 = vmatprep.subr.mxu0 0.0
  %480 = vmatpush1.msra.mxu0 0.0
  %481 = vmatprep.subr.mxu0 0.0
  %482 = vmatpush1.msra.mxu0 0.0
  %483 = vmatprep.subr.mxu0 0.0
  %484 = vmatpush1.msra.mxu0 0.0
  %485 = vmatprep.subr.mxu0 0.0
  %486 = vmatpush1.msra.mxu0 0.0
  %487 = vmatprep.subr.mxu0 0.0
  %488 = vmatpush1.msra.mxu0 0.0
  %489 = vmatprep.subr.mxu0 0.0
  %490 = vmatpush1.msra.mxu0 0.0
  %491 = vmatprep.subr.mxu0 0.0
  %492 = vmatpush1.msra.mxu0 0.0
  %493 = vmatprep.subr.mxu0 0.0
  %494 = vmatpush1.msra.mxu0 0.0
  %495 = vmatprep.subr.mxu0 0.0
  %496 = vmatpush1.msra.mxu0 0.0
  %497 = vmatprep.subr.mxu0 0.0
  %498 = vmatpush1.msra.mxu0 0.0
  %499 = vmatprep.subr.mxu0 0.0
  %500 = vmatpush1.msra.mxu0 0.0
  %501 = vmatprep.subr.mxu0 0.0
  %502 = vmatpush1.msra.mxu0 0.0
  %503 = vmatprep.subr.mxu0 0.0
  %504 = vmatpush1.msra.mxu0 0.0
  %505 = vmatprep.subr.mxu0 0.0
  %506 = vmatpush1.msra.mxu0 0.0
  %507 = vmatprep.subr.mxu0 0.0
  %508 = vmatpush1.msra.mxu0 0.0
  %509 = vmatprep.subr.mxu0 0.0
  %510 = vmatpush1.msra.mxu0 0.0
  %511 = vmatprep.subr.mxu0 0.0
  %512 = vmatpush1.msra.mxu0 0.0
  %513 = vmatprep.subr.mxu0 0.0
  %514 = vmatpush1.msra.mxu0 0.0
  %515 = vmatprep.subr.mxu0 0.0
  %516 = vmatpush1.msra.mxu0 0.0
  %517 = vmatprep.subr.mxu0 0.0
  %518 = vmatpush1.msra.mxu0 0.0
  %519 = vmatprep.subr.mxu0 0.0
  %520 = vmatpush1.msra.mxu0 0.0
  %521 = vmatprep.subr.mxu0 0.0
  %522 = vmatpush1.msra.mxu0 0.0
  %523 = vmatprep.subr.mxu0 0.0
  %524 = vmatpush1.msra.mxu0 0.0
  %525 = vmatprep.subr.mxu0 0.0
  %526 = vmatpush1.msra.mxu0 0.0
  %527 = vmatprep.subr.mxu0 0.0
  %528 = vmatpush1.msra.mxu0 0.0
  %529 = vmatprep.subr.mxu0 0.0
  %530 = vmatpush1.msra.mxu0 0.0
  %531 = vmatprep.mubr.f32.mxu0 0.0
  %v532 = vand.u32 %v37, 4294901760
  %533 = vmatmul.mubr.f32.gmra.mrb[0].mxu0 %v532
  %v534 = vpop.f32.mrb[0].mxu0
  %v535 = vadd.f32 %v433, %v534
  %v536 = vpop.f32.mrb[0].mxu0
  %v537 = vadd.f32 %v435, %v536
  %538 = vdwg.mxu0
  %v539 = vand.u32 %v16, 4294901760
  %540 = vmatprep.subr.mxu0 %v539
  %v541 = vand.u32 %v15, 4294901760
  %542 = vmatpush1.msra.mxu0 %v541
  %v543 = vand.u32 %v20, 4294901760
  %544 = vmatprep.subr.mxu0 %v543
  %v545 = vand.u32 %v19, 4294901760
  %546 = vmatpush1.msra.mxu0 %v545
  %v547 = vand.u32 %v24, 4294901760
  %548 = vmatprep.subr.mxu0 %v547
  %v549 = vand.u32 %v23, 4294901760
  %550 = vmatpush1.msra.mxu0 %v549
  %v551 = vand.u32 %v28, 4294901760
  %552 = vmatprep.subr.mxu0 %v551
  %v553 = vand.u32 %v27, 4294901760
  %554 = vmatpush1.msra.mxu0 %v553
  %v555 = vand.u32 %v44, 4294901760
  %556 = vmatprep.subr.mxu0 %v555
  %v557 = vand.u32 %v41, 4294901760
  %558 = vmatpush1.msra.mxu0 %v557
  %559 = vmatprep.subr.mxu0 0.0
  %560 = vmatpush1.msra.mxu0 0.0
  %561 = vmatprep.subr.mxu0 0.0
  %562 = vmatpush1.msra.mxu0 0.0
  %563 = vmatprep.subr.mxu0 0.0
  %564 = vmatpush1.msra.mxu0 0.0
  %565 = vmatprep.subr.mxu0 0.0
  %566 = vmatpush1.msra.mxu0 0.0
  %567 = vmatprep.subr.mxu0 0.0
  %568 = vmatpush1.msra.mxu0 0.0
  %569 = vmatprep.subr.mxu0 0.0
  %570 = vmatpush1.msra.mxu0 0.0
  %571 = vmatprep.subr.mxu0 0.0
  %572 = vmatpush1.msra.mxu0 0.0
  %573 = vmatprep.subr.mxu0 0.0
  %574 = vmatpush1.msra.mxu0 0.0
  %575 = vmatprep.subr.mxu0 0.0
  %576 = vmatpush1.msra.mxu0 0.0
  %577 = vmatprep.subr.mxu0 0.0
  %578 = vmatpush1.msra.mxu0 0.0
  %579 = vmatprep.subr.mxu0 0.0
  %580 = vmatpush1.msra.mxu0 0.0
  %581 = vmatprep.subr.mxu0 0.0
  %582 = vmatpush1.msra.mxu0 0.0
  %583 = vmatprep.subr.mxu0 0.0
  %584 = vmatpush1.msra.mxu0 0.0
  %585 = vmatprep.subr.mxu0 0.0
  %586 = vmatpush1.msra.mxu0 0.0
  %587 = vmatprep.subr.mxu0 0.0
  %588 = vmatpush1.msra.mxu0 0.0
  %589 = vmatprep.subr.mxu0 0.0
  %590 = vmatpush1.msra.mxu0 0.0
  %591 = vmatprep.subr.mxu0 0.0
  %592 = vmatpush1.msra.mxu0 0.0
  %593 = vmatprep.subr.mxu0 0.0
  %594 = vmatpush1.msra.mxu0 0.0
  %595 = vmatprep.subr.mxu0 0.0
  %596 = vmatpush1.msra.mxu0 0.0
  %597 = vmatprep.subr.mxu0 0.0
  %598 = vmatpush1.msra.mxu0 0.0
  %599 = vmatprep.subr.mxu0 0.0
  %600 = vmatpush1.msra.mxu0 0.0
  %601 = vmatprep.subr.mxu0 0.0
  %602 = vmatpush1.msra.mxu0 0.0
  %603 = vmatprep.subr.mxu0 0.0
  %604 = vmatpush1.msra.mxu0 0.0
  %605 = vmatprep.subr.mxu0 0.0
  %606 = vmatpush1.msra.mxu0 0.0
  %607 = vmatprep.subr.mxu0 0.0
  %608 = vmatpush1.msra.mxu0 0.0
  %609 = vmatprep.subr.mxu0 0.0
  %610 = vmatpush1.msra.mxu0 0.0
  %611 = vmatprep.subr.mxu0 0.0
  %612 = vmatpush1.msra.mxu0 0.0
  %613 = vmatprep.mubr.f32.mxu0 0.0
  %v614 = vand.u32 %v37, 4294901760
  %615 = vmatmul.mubr.f32.gmra.mrb[0].mxu0 %v614
  %v616 = vpop.f32.mrb[0].mxu0
  %v617 = vadd.f32 %v535, %v616
  %v618 = vpop.f32.mrb[0].mxu0
  %v619 = vadd.f32 %v537, %v618
  %620 = vdwg.mxu0
  %v621 = vand.u32 %v18, 4294901760
  %622 = vmatprep.subr.mxu0 %v621
  %v623 = vand.u32 %v17, 4294901760
  %624 = vmatpush1.msra.mxu0 %v623
  %v625 = vand.u32 %v22, 4294901760
  %626 = vmatprep.subr.mxu0 %v625
  %v627 = vand.u32 %v21, 4294901760
  %628 = vmatpush1.msra.mxu0 %v627
  %v629 = vand.u32 %v26, 4294901760
  %630 = vmatprep.subr.mxu0 %v629
  %v631 = vand.u32 %v25, 4294901760
  %632 = vmatpush1.msra.mxu0 %v631
  %v633 = vand.u32 %v30, 4294901760
  %634 = vmatprep.subr.mxu0 %v633
  %v635 = vand.u32 %v29, 4294901760
  %636 = vmatpush1.msra.mxu0 %v635
  %v637 = vand.u32 %v50, 4294901760
  %638 = vmatprep.subr.mxu0 %v637
  %v639 = vand.u32 %v47, 4294901760
  %640 = vmatpush1.msra.mxu0 %v639
  %641 = vmatprep.subr.mxu0 0.0
  %642 = vmatpush1.msra.mxu0 0.0
  %643 = vmatprep.subr.mxu0 0.0
  %644 = vmatpush1.msra.mxu0 0.0
  %645 = vmatprep.subr.mxu0 0.0
  %646 = vmatpush1.msra.mxu0 0.0
  %647 = vmatprep.subr.mxu0 0.0
  %648 = vmatpush1.msra.mxu0 0.0
  %649 = vmatprep.subr.mxu0 0.0
  %650 = vmatpush1.msra.mxu0 0.0
  %651 = vmatprep.subr.mxu0 0.0
  %652 = vmatpush1.msra.mxu0 0.0
  %653 = vmatprep.subr.mxu0 0.0
  %654 = vmatpush1.msra.mxu0 0.0
  %655 = vmatprep.subr.mxu0 0.0
  %656 = vmatpush1.msra.mxu0 0.0
  %657 = vmatprep.subr.mxu0 0.0
  %658 = vmatpush1.msra.mxu0 0.0
  %659 = vmatprep.subr.mxu0 0.0
  %660 = vmatpush1.msra.mxu0 0.0
  %661 = vmatprep.subr.mxu0 0.0
  %662 = vmatpush1.msra.mxu0 0.0
  %663 = vmatprep.subr.mxu0 0.0
  %664 = vmatpush1.msra.mxu0 0.0
  %665 = vmatprep.subr.mxu0 0.0
  %666 = vmatpush1.msra.mxu0 0.0
  %667 = vmatprep.subr.mxu0 0.0
  %668 = vmatpush1.msra.mxu0 0.0
  %669 = vmatprep.subr.mxu0 0.0
  %670 = vmatpush1.msra.mxu0 0.0
  %671 = vmatprep.subr.mxu0 0.0
  %672 = vmatpush1.msra.mxu0 0.0
  %673 = vmatprep.subr.mxu0 0.0
  %674 = vmatpush1.msra.mxu0 0.0
  %675 = vmatprep.subr.mxu0 0.0
  %676 = vmatpush1.msra.mxu0 0.0
  %677 = vmatprep.subr.mxu0 0.0
  %678 = vmatpush1.msra.mxu0 0.0
  %679 = vmatprep.subr.mxu0 0.0
  %680 = vmatpush1.msra.mxu0 0.0
  %681 = vmatprep.subr.mxu0 0.0
  %682 = vmatpush1.msra.mxu0 0.0
  %683 = vmatprep.subr.mxu0 0.0
  %684 = vmatpush1.msra.mxu0 0.0
  %685 = vmatprep.subr.mxu0 0.0
  %686 = vmatpush1.msra.mxu0 0.0
  %687 = vmatprep.subr.mxu0 0.0
  %688 = vmatpush1.msra.mxu0 0.0
  %689 = vmatprep.subr.mxu0 0.0
  %690 = vmatpush1.msra.mxu0 0.0
  %691 = vmatprep.subr.mxu0 0.0
  %692 = vmatpush1.msra.mxu0 0.0
  %693 = vmatprep.subr.mxu0 0.0
  %694 = vmatpush1.msra.mxu0 0.0
  %695 = vmatprep.mubr.f32.mxu0 0.0
  %v696 = vand.u32 %v37, 4294901760
  %v697 = vsub.f32 %v37, %v696
  %v698 = vand.u32 %v697, 4294901760
  %v699 = vsub.f32 %v697, %v698
  %v700 = vand.u32 %v699, 4294901760
  %701 = vmatmul.mubr.f32.gmra.mrb[0].mxu0 %v700
  %v702 = vpop.f32.mrb[0].mxu0
  %v703 = vadd.f32 0.0, %v702
  %v704 = vpop.f32.mrb[0].mxu0
  %v705 = vadd.f32 0.0, %v704
  %706 = vdwg.mxu0
  %v707 = vand.u32 %v18, 4294901760
  %v708 = vsub.f32 %v18, %v707
  %v709 = vand.u32 %v708, 4294901760
  %v710 = vsub.f32 %v708, %v709
  %v711 = vand.u32 %v710, 4294901760
  %712 = vmatprep.subr.mxu0 %v711
  %v713 = vand.u32 %v17, 4294901760
  %v714 = vsub.f32 %v17, %v713
  %v715 = vand.u32 %v714, 4294901760
  %v716 = vsub.f32 %v714, %v715
  %v717 = vand.u32 %v716, 4294901760
  %718 = vmatpush1.msra.mxu0 %v717
  %v719 = vand.u32 %v22, 4294901760
  %v720 = vsub.f32 %v22, %v719
  %v721 = vand.u32 %v720, 4294901760
  %v722 = vsub.f32 %v720, %v721
  %v723 = vand.u32 %v722, 4294901760
  %724 = vmatprep.subr.mxu0 %v723
  %v725 = vand.u32 %v21, 4294901760
  %v726 = vsub.f32 %v21, %v725
  %v727 = vand.u32 %v726, 4294901760
  %v728 = vsub.f32 %v726, %v727
  %v729 = vand.u32 %v728, 4294901760
  %730 = vmatpush1.msra.mxu0 %v729
  %v731 = vand.u32 %v26, 4294901760
  %v732 = vsub.f32 %v26, %v731
  %v733 = vand.u32 %v732, 4294901760
  %v734 = vsub.f32 %v732, %v733
  %v735 = vand.u32 %v734, 4294901760
  %736 = vmatprep.subr.mxu0 %v735
  %v737 = vand.u32 %v25, 4294901760
  %v738 = vsub.f32 %v25, %v737
  %v739 = vand.u32 %v738, 4294901760
  %v740 = vsub.f32 %v738, %v739
  %v741 = vand.u32 %v740, 4294901760
  %742 = vmatpush1.msra.mxu0 %v741
  %v743 = vand.u32 %v30, 4294901760
  %v744 = vsub.f32 %v30, %v743
  %v745 = vand.u32 %v744, 4294901760
  %v746 = vsub.f32 %v744, %v745
  %v747 = vand.u32 %v746, 4294901760
  %748 = vmatprep.subr.mxu0 %v747
  %v749 = vand.u32 %v29, 4294901760
  %v750 = vsub.f32 %v29, %v749
  %v751 = vand.u32 %v750, 4294901760
  %v752 = vsub.f32 %v750, %v751
  %v753 = vand.u32 %v752, 4294901760
  %754 = vmatpush1.msra.mxu0 %v753
  %v755 = vand.u32 %v50, 4294901760
  %v756 = vsub.f32 %v50, %v755
  %v757 = vand.u32 %v756, 4294901760
  %v758 = vsub.f32 %v756, %v757
  %v759 = vand.u32 %v758, 4294901760
  %760 = vmatprep.subr.mxu0 %v759
  %v761 = vand.u32 %v47, 4294901760
  %v762 = vsub.f32 %v47, %v761
  %v763 = vand.u32 %v762, 4294901760
  %v764 = vsub.f32 %v762, %v763
  %v765 = vand.u32 %v764, 4294901760
  %766 = vmatpush1.msra.mxu0 %v765
  %767 = vmatprep.subr.mxu0 0.0
  %768 = vmatpush1.msra.mxu0 0.0
  %769 = vmatprep.subr.mxu0 0.0
  %770 = vmatpush1.msra.mxu0 0.0
  %771 = vmatprep.subr.mxu0 0.0
  %772 = vmatpush1.msra.mxu0 0.0
  %773 = vmatprep.subr.mxu0 0.0
  %774 = vmatpush1.msra.mxu0 0.0
  %775 = vmatprep.subr.mxu0 0.0
  %776 = vmatpush1.msra.mxu0 0.0
  %777 = vmatprep.subr.mxu0 0.0
  %778 = vmatpush1.msra.mxu0 0.0
  %779 = vmatprep.subr.mxu0 0.0
  %780 = vmatpush1.msra.mxu0 0.0
  %781 = vmatprep.subr.mxu0 0.0
  %782 = vmatpush1.msra.mxu0 0.0
  %783 = vmatprep.subr.mxu0 0.0
  %784 = vmatpush1.msra.mxu0 0.0
  %785 = vmatprep.subr.mxu0 0.0
  %786 = vmatpush1.msra.mxu0 0.0
  %787 = vmatprep.subr.mxu0 0.0
  %788 = vmatpush1.msra.mxu0 0.0
  %789 = vmatprep.subr.mxu0 0.0
  %790 = vmatpush1.msra.mxu0 0.0
  %791 = vmatprep.subr.mxu0 0.0
  %792 = vmatpush1.msra.mxu0 0.0
  %793 = vmatprep.subr.mxu0 0.0
  %794 = vmatpush1.msra.mxu0 0.0
  %795 = vmatprep.subr.mxu0 0.0
  %796 = vmatpush1.msra.mxu0 0.0
  %797 = vmatprep.subr.mxu0 0.0
  %798 = vmatpush1.msra.mxu0 0.0
  %799 = vmatprep.subr.mxu0 0.0
  %800 = vmatpush1.msra.mxu0 0.0
  %801 = vmatprep.subr.mxu0 0.0
  %802 = vmatpush1.msra.mxu0 0.0
  %803 = vmatprep.subr.mxu0 0.0
  %804 = vmatpush1.msra.mxu0 0.0
  %805 = vmatprep.subr.mxu0 0.0
  %806 = vmatpush1.msra.mxu0 0.0
  %807 = vmatprep.subr.mxu0 0.0
  %808 = vmatpush1.msra.mxu0 0.0
  %809 = vmatprep.subr.mxu0 0.0
  %810 = vmatpush1.msra.mxu0 0.0
  %811 = vmatprep.subr.mxu0 0.0
  %812 = vmatpush1.msra.mxu0 0.0
  %813 = vmatprep.subr.mxu0 0.0
  %814 = vmatpush1.msra.mxu0 0.0
  %815 = vmatprep.subr.mxu0 0.0
  %816 = vmatpush1.msra.mxu0 0.0
  %817 = vmatprep.subr.mxu0 0.0
  %818 = vmatpush1.msra.mxu0 0.0
  %819 = vmatprep.subr.mxu0 0.0
  %820 = vmatpush1.msra.mxu0 0.0
  %821 = vmatprep.mubr.f32.mxu0 0.0
  %v822 = vand.u32 %v37, 4294901760
  %823 = vmatmul.mubr.f32.gmra.mrb[0].mxu0 %v822
  %v824 = vpop.f32.mrb[0].mxu0
  %v825 = vadd.f32 %v703, %v824
  %v826 = vpop.f32.mrb[0].mxu0
  %v827 = vadd.f32 %v705, %v826
  %828 = vdwg.mxu0
  %v829 = vand.u32 %v18, 4294901760
  %v830 = vsub.f32 %v18, %v829
  %831 = vmatprep.subr.mxu0 %v830
  %v832 = vand.u32 %v17, 4294901760
  %v833 = vsub.f32 %v17, %v832
  %834 = vmatpush1.msra.mxu0 %v833
  %v835 = vand.u32 %v22, 4294901760
  %v836 = vsub.f32 %v22, %v835
  %837 = vmatprep.subr.mxu0 %v836
  %v838 = vand.u32 %v21, 4294901760
  %v839 = vsub.f32 %v21, %v838
  %840 = vmatpush1.msra.mxu0 %v839
  %v841 = vand.u32 %v26, 4294901760
  %v842 = vsub.f32 %v26, %v841
  %843 = vmatprep.subr.mxu0 %v842
  %v844 = vand.u32 %v25, 4294901760
  %v845 = vsub.f32 %v25, %v844
  %846 = vmatpush1.msra.mxu0 %v845
  %v847 = vand.u32 %v30, 4294901760
  %v848 = vsub.f32 %v30, %v847
  %849 = vmatprep.subr.mxu0 %v848
  %v850 = vand.u32 %v29, 4294901760
  %v851 = vsub.f32 %v29, %v850
  %852 = vmatpush1.msra.mxu0 %v851
  %v853 = vand.u32 %v50, 4294901760
  %v854 = vsub.f32 %v50, %v853
  %855 = vmatprep.subr.mxu0 %v854
  %v856 = vand.u32 %v47, 4294901760
  %v857 = vsub.f32 %v47, %v856
  %858 = vmatpush1.msra.mxu0 %v857
  %859 = vmatprep.subr.mxu0 0.0
  %860 = vmatpush1.msra.mxu0 0.0
  %861 = vmatprep.subr.mxu0 0.0
  %862 = vmatpush1.msra.mxu0 0.0
  %863 = vmatprep.subr.mxu0 0.0
  %864 = vmatpush1.msra.mxu0 0.0
  %865 = vmatprep.subr.mxu0 0.0
  %866 = vmatpush1.msra.mxu0 0.0
  %867 = vmatprep.subr.mxu0 0.0
  %868 = vmatpush1.msra.mxu0 0.0
  %869 = vmatprep.subr.mxu0 0.0
  %870 = vmatpush1.msra.mxu0 0.0
  %871 = vmatprep.subr.mxu0 0.0
  %872 = vmatpush1.msra.mxu0 0.0
  %873 = vmatprep.subr.mxu0 0.0
  %874 = vmatpush1.msra.mxu0 0.0
  %875 = vmatprep.subr.mxu0 0.0
  %876 = vmatpush1.msra.mxu0 0.0
  %877 = vmatprep.subr.mxu0 0.0
  %878 = vmatpush1.msra.mxu0 0.0
  %879 = vmatprep.subr.mxu0 0.0
  %880 = vmatpush1.msra.mxu0 0.0
  %881 = vmatprep.subr.mxu0 0.0
  %882 = vmatpush1.msra.mxu0 0.0
  %883 = vmatprep.subr.mxu0 0.0
  %884 = vmatpush1.msra.mxu0 0.0
  %885 = vmatprep.subr.mxu0 0.0
  %886 = vmatpush1.msra.mxu0 0.0
  %887 = vmatprep.subr.mxu0 0.0
  %888 = vmatpush1.msra.mxu0 0.0
  %889 = vmatprep.subr.mxu0 0.0
  %890 = vmatpush1.msra.mxu0 0.0
  %891 = vmatprep.subr.mxu0 0.0
  %892 = vmatpush1.msra.mxu0 0.0
  %893 = vmatprep.subr.mxu0 0.0
  %894 = vmatpush1.msra.mxu0 0.0
  %895 = vmatprep.subr.mxu0 0.0
  %896 = vmatpush1.msra.mxu0 0.0
  %897 = vmatprep.subr.mxu0 0.0
  %898 = vmatpush1.msra.mxu0 0.0
  %899 = vmatprep.subr.mxu0 0.0
  %900 = vmatpush1.msra.mxu0 0.0
  %901 = vmatprep.subr.mxu0 0.0
  %902 = vmatpush1.msra.mxu0 0.0
  %903 = vmatprep.subr.mxu0 0.0
  %904 = vmatpush1.msra.mxu0 0.0
  %905 = vmatprep.subr.mxu0 0.0
  %906 = vmatpush1.msra.mxu0 0.0
  %907 = vmatprep.subr.mxu0 0.0
  %908 = vmatpush1.msra.mxu0 0.0
  %909 = vmatprep.subr.mxu0 0.0
  %910 = vmatpush1.msra.mxu0 0.0
  %911 = vmatprep.subr.mxu0 0.0
  %912 = vmatpush1.msra.mxu0 0.0
  %913 = vmatprep.mubr.f32.mxu0 0.0
  %v914 = vand.u32 %v37, 4294901760
  %v915 = vsub.f32 %v37, %v914
  %916 = vmatmul.mubr.f32.gmra.mrb[0].mxu0 %v915
  %v917 = vpop.f32.mrb[0].mxu0
  %v918 = vadd.f32 %v825, %v917
  %v919 = vpop.f32.mrb[0].mxu0
  %v920 = vadd.f32 %v827, %v919
  %921 = vdwg.mxu0
  %v922 = vand.u32 %v18, 4294901760
  %923 = vmatprep.subr.mxu0 %v922
  %v924 = vand.u32 %v17, 4294901760
  %925 = vmatpush1.msra.mxu0 %v924
  %v926 = vand.u32 %v22, 4294901760
  %927 = vmatprep.subr.mxu0 %v926
  %v928 = vand.u32 %v21, 4294901760
  %929 = vmatpush1.msra.mxu0 %v928
  %v930 = vand.u32 %v26, 4294901760
  %931 = vmatprep.subr.mxu0 %v930
  %v932 = vand.u32 %v25, 4294901760
  %933 = vmatpush1.msra.mxu0 %v932
  %v934 = vand.u32 %v30, 4294901760
  %935 = vmatprep.subr.mxu0 %v934
  %v936 = vand.u32 %v29, 4294901760
  %937 = vmatpush1.msra.mxu0 %v936
  %v938 = vand.u32 %v50, 4294901760
  %939 = vmatprep.subr.mxu0 %v938
  %v940 = vand.u32 %v47, 4294901760
  %941 = vmatpush1.msra.mxu0 %v940
  %942 = vmatprep.subr.mxu0 0.0
  %943 = vmatpush1.msra.mxu0 0.0
  %944 = vmatprep.subr.mxu0 0.0
  %945 = vmatpush1.msra.mxu0 0.0
  %946 = vmatprep.subr.mxu0 0.0
  %947 = vmatpush1.msra.mxu0 0.0
  %948 = vmatprep.subr.mxu0 0.0
  %949 = vmatpush1.msra.mxu0 0.0
  %950 = vmatprep.subr.mxu0 0.0
  %951 = vmatpush1.msra.mxu0 0.0
  %952 = vmatprep.subr.mxu0 0.0
  %953 = vmatpush1.msra.mxu0 0.0
  %954 = vmatprep.subr.mxu0 0.0
  %955 = vmatpush1.msra.mxu0 0.0
  %956 = vmatprep.subr.mxu0 0.0
  %957 = vmatpush1.msra.mxu0 0.0
  %958 = vmatprep.subr.mxu0 0.0
  %959 = vmatpush1.msra.mxu0 0.0
  %960 = vmatprep.subr.mxu0 0.0
  %961 = vmatpush1.msra.mxu0 0.0
  %962 = vmatprep.subr.mxu0 0.0
  %963 = vmatpush1.msra.mxu0 0.0
  %964 = vmatprep.subr.mxu0 0.0
  %965 = vmatpush1.msra.mxu0 0.0
  %966 = vmatprep.subr.mxu0 0.0
  %967 = vmatpush1.msra.mxu0 0.0
  %968 = vmatprep.subr.mxu0 0.0
  %969 = vmatpush1.msra.mxu0 0.0
  %970 = vmatprep.subr.mxu0 0.0
  %971 = vmatpush1.msra.mxu0 0.0
  %972 = vmatprep.subr.mxu0 0.0
  %973 = vmatpush1.msra.mxu0 0.0
  %974 = vmatprep.subr.mxu0 0.0
  %975 = vmatpush1.msra.mxu0 0.0
  %976 = vmatprep.subr.mxu0 0.0
  %977 = vmatpush1.msra.mxu0 0.0
  %978 = vmatprep.subr.mxu0 0.0
  %979 = vmatpush1.msra.mxu0 0.0
  %980 = vmatprep.subr.mxu0 0.0
  %981 = vmatpush1.msra.mxu0 0.0
  %982 = vmatprep.subr.mxu0 0.0
  %983 = vmatpush1.msra.mxu0 0.0
  %984 = vmatprep.subr.mxu0 0.0
  %985 = vmatpush1.msra.mxu0 0.0
  %986 = vmatprep.subr.mxu0 0.0
  %987 = vmatpush1.msra.mxu0 0.0
  %988 = vmatprep.subr.mxu0 0.0
  %989 = vmatpush1.msra.mxu0 0.0
  %990 = vmatprep.subr.mxu0 0.0
  %991 = vmatpush1.msra.mxu0 0.0
  %992 = vmatprep.subr.mxu0 0.0
  %993 = vmatpush1.msra.mxu0 0.0
  %994 = vmatprep.subr.mxu0 0.0
  %995 = vmatpush1.msra.mxu0 0.0
  %996 = vmatprep.mubr.f32.mxu0 0.0
  %v997 = vand.u32 %v37, 4294901760
  %v998 = vsub.f32 %v37, %v997
  %v999 = vand.u32 %v998, 4294901760
  %1000 = vmatmul.mubr.f32.gmra.mrb[0].mxu0 %v999
  %v1001 = vpop.f32.mrb[0].mxu0
  %v1002 = vadd.f32 %v918, %v1001
  %v1003 = vpop.f32.mrb[0].mxu0
  %v1004 = vadd.f32 %v920, %v1003
  %1005 = vdwg.mxu0
  %v1006 = vand.u32 %v18, 4294901760
  %v1007 = vsub.f32 %v18, %v1006
  %v1008 = vand.u32 %v1007, 4294901760
  %1009 = vmatprep.subr.mxu0 %v1008
  %v1010 = vand.u32 %v17, 4294901760
  %v1011 = vsub.f32 %v17, %v1010
  %v1012 = vand.u32 %v1011, 4294901760
  %1013 = vmatpush1.msra.mxu0 %v1012
  %v1014 = vand.u32 %v22, 4294901760
  %v1015 = vsub.f32 %v22, %v1014
  %v1016 = vand.u32 %v1015, 4294901760
  %1017 = vmatprep.subr.mxu0 %v1016
  %v1018 = vand.u32 %v21, 4294901760
  %v1019 = vsub.f32 %v21, %v1018
  %v1020 = vand.u32 %v1019, 4294901760
  %1021 = vmatpush1.msra.mxu0 %v1020
  %v1022 = vand.u32 %v26, 4294901760
  %v1023 = vsub.f32 %v26, %v1022
  %v1024 = vand.u32 %v1023, 4294901760
  %1025 = vmatprep.subr.mxu0 %v1024
  %v1026 = vand.u32 %v25, 4294901760
  %v1027 = vsub.f32 %v25, %v1026
  %v1028 = vand.u32 %v1027, 4294901760
  %1029 = vmatpush1.msra.mxu0 %v1028
  %v1030 = vand.u32 %v30, 4294901760
  %v1031 = vsub.f32 %v30, %v1030
  %v1032 = vand.u32 %v1031, 4294901760
  %1033 = vmatprep.subr.mxu0 %v1032
  %v1034 = vand.u32 %v29, 4294901760
  %v1035 = vsub.f32 %v29, %v1034
  %v1036 = vand.u32 %v1035, 4294901760
  %1037 = vmatpush1.msra.mxu0 %v1036
  %v1038 = vand.u32 %v50, 4294901760
  %v1039 = vsub.f32 %v50, %v1038
  %v1040 = vand.u32 %v1039, 4294901760
  %1041 = vmatprep.subr.mxu0 %v1040
  %v1042 = vand.u32 %v47, 4294901760
  %v1043 = vsub.f32 %v47, %v1042
  %v1044 = vand.u32 %v1043, 4294901760
  %1045 = vmatpush1.msra.mxu0 %v1044
  %1046 = vmatprep.subr.mxu0 0.0
  %1047 = vmatpush1.msra.mxu0 0.0
  %1048 = vmatprep.subr.mxu0 0.0
  %1049 = vmatpush1.msra.mxu0 0.0
  %1050 = vmatprep.subr.mxu0 0.0
  %1051 = vmatpush1.msra.mxu0 0.0
  %1052 = vmatprep.subr.mxu0 0.0
  %1053 = vmatpush1.msra.mxu0 0.0
  %1054 = vmatprep.subr.mxu0 0.0
  %1055 = vmatpush1.msra.mxu0 0.0
  %1056 = vmatprep.subr.mxu0 0.0
  %1057 = vmatpush1.msra.mxu0 0.0
  %1058 = vmatprep.subr.mxu0 0.0
  %1059 = vmatpush1.msra.mxu0 0.0
  %1060 = vmatprep.subr.mxu0 0.0
  %1061 = vmatpush1.msra.mxu0 0.0
  %1062 = vmatprep.subr.mxu0 0.0
  %1063 = vmatpush1.msra.mxu0 0.0
  %1064 = vmatprep.subr.mxu0 0.0
  %1065 = vmatpush1.msra.mxu0 0.0
  %1066 = vmatprep.subr.mxu0 0.0
  %1067 = vmatpush1.msra.mxu0 0.0
  %1068 = vmatprep.subr.mxu0 0.0
  %1069 = vmatpush1.msra.mxu0 0.0
  %1070 = vmatprep.subr.mxu0 0.0
  %1071 = vmatpush1.msra.mxu0 0.0
  %1072 = vmatprep.subr.mxu0 0.0
  %1073 = vmatpush1.msra.mxu0 0.0
  %1074 = vmatprep.subr.mxu0 0.0
  %1075 = vmatpush1.msra.mxu0 0.0
  %1076 = vmatprep.subr.mxu0 0.0
  %1077 = vmatpush1.msra.mxu0 0.0
  %1078 = vmatprep.subr.mxu0 0.0
  %1079 = vmatpush1.msra.mxu0 0.0
  %1080 = vmatprep.subr.mxu0 0.0
  %1081 = vmatpush1.msra.mxu0 0.0
  %1082 = vmatprep.subr.mxu0 0.0
  %1083 = vmatpush1.msra.mxu0 0.0
  %1084 = vmatprep.subr.mxu0 0.0
  %1085 = vmatpush1.msra.mxu0 0.0
  %1086 = vmatprep.subr.mxu0 0.0
  %1087 = vmatpush1.msra.mxu0 0.0
  %1088 = vmatprep.subr.mxu0 0.0
  %1089 = vmatpush1.msra.mxu0 0.0
  %1090 = vmatprep.subr.mxu0 0.0
  %1091 = vmatpush1.msra.mxu0 0.0
  %1092 = vmatprep.subr.mxu0 0.0
  %1093 = vmatpush1.msra.mxu0 0.0
  %1094 = vmatprep.subr.mxu0 0.0
  %1095 = vmatpush1.msra.mxu0 0.0
  %1096 = vmatprep.subr.mxu0 0.0
  %1097 = vmatpush1.msra.mxu0 0.0
  %1098 = vmatprep.subr.mxu0 0.0
  %1099 = vmatpush1.msra.mxu0 0.0
  %1100 = vmatprep.mubr.f32.mxu0 0.0
  %v1101 = vand.u32 %v37, 4294901760
  %1102 = vmatmul.mubr.f32.gmra.mrb[0].mxu0 %v1101
  %v1103 = vpop.f32.mrb[0].mxu0
  %v1104 = vadd.f32 %v1002, %v1103
  %v1105 = vpop.f32.mrb[0].mxu0
  %v1106 = vadd.f32 %v1004, %v1105
  %1107 = vdwg.mxu0
  %v1108 = vand.u32 %v18, 4294901760
  %1109 = vmatprep.subr.mxu0 %v1108
  %v1110 = vand.u32 %v17, 4294901760
  %1111 = vmatpush1.msra.mxu0 %v1110
  %v1112 = vand.u32 %v22, 4294901760
  %1113 = vmatprep.subr.mxu0 %v1112
  %v1114 = vand.u32 %v21, 4294901760
  %1115 = vmatpush1.msra.mxu0 %v1114
  %v1116 = vand.u32 %v26, 4294901760
  %1117 = vmatprep.subr.mxu0 %v1116
  %v1118 = vand.u32 %v25, 4294901760
  %1119 = vmatpush1.msra.mxu0 %v1118
  %v1120 = vand.u32 %v30, 4294901760
  %1121 = vmatprep.subr.mxu0 %v1120
  %v1122 = vand.u32 %v29, 4294901760
  %1123 = vmatpush1.msra.mxu0 %v1122
  %v1124 = vand.u32 %v50, 4294901760
  %1125 = vmatprep.subr.mxu0 %v1124
  %v1126 = vand.u32 %v47, 4294901760
  %1127 = vmatpush1.msra.mxu0 %v1126
  %1128 = vmatprep.subr.mxu0 0.0
  %1129 = vmatpush1.msra.mxu0 0.0
  %1130 = vmatprep.subr.mxu0 0.0
  %1131 = vmatpush1.msra.mxu0 0.0
  %1132 = vmatprep.subr.mxu0 0.0
  %1133 = vmatpush1.msra.mxu0 0.0
  %1134 = vmatprep.subr.mxu0 0.0
  %1135 = vmatpush1.msra.mxu0 0.0
  %1136 = vmatprep.subr.mxu0 0.0
  %1137 = vmatpush1.msra.mxu0 0.0
  %1138 = vmatprep.subr.mxu0 0.0
  %1139 = vmatpush1.msra.mxu0 0.0
  %1140 = vmatprep.subr.mxu0 0.0
  %1141 = vmatpush1.msra.mxu0 0.0
  %1142 = vmatprep.subr.mxu0 0.0
  %1143 = vmatpush1.msra.mxu0 0.0
  %1144 = vmatprep.subr.mxu0 0.0
  %1145 = vmatpush1.msra.mxu0 0.0
  %1146 = vmatprep.subr.mxu0 0.0
  %1147 = vmatpush1.msra.mxu0 0.0
  %1148 = vmatprep.subr.mxu0 0.0
  %1149 = vmatpush1.msra.mxu0 0.0
  %1150 = vmatprep.subr.mxu0 0.0
  %1151 = vmatpush1.msra.mxu0 0.0
  %1152 = vmatprep.subr.mxu0 0.0
  %1153 = vmatpush1.msra.mxu0 0.0
  %1154 = vmatprep.subr.mxu0 0.0
  %1155 = vmatpush1.msra.mxu0 0.0
  %1156 = vmatprep.subr.mxu0 0.0
  %1157 = vmatpush1.msra.mxu0 0.0
  %1158 = vmatprep.subr.mxu0 0.0
  %1159 = vmatpush1.msra.mxu0 0.0
  %1160 = vmatprep.subr.mxu0 0.0
  %1161 = vmatpush1.msra.mxu0 0.0
  %1162 = vmatprep.subr.mxu0 0.0
  %1163 = vmatpush1.msra.mxu0 0.0
  %1164 = vmatprep.subr.mxu0 0.0
  %1165 = vmatpush1.msra.mxu0 0.0
  %1166 = vmatprep.subr.mxu0 0.0
  %1167 = vmatpush1.msra.mxu0 0.0
  %1168 = vmatprep.subr.mxu0 0.0
  %1169 = vmatpush1.msra.mxu0 0.0
  %1170 = vmatprep.subr.mxu0 0.0
  %1171 = vmatpush1.msra.mxu0 0.0
  %1172 = vmatprep.subr.mxu0 0.0
  %1173 = vmatpush1.msra.mxu0 0.0
  %1174 = vmatprep.subr.mxu0 0.0
  %1175 = vmatpush1.msra.mxu0 0.0
  %1176 = vmatprep.subr.mxu0 0.0
  %1177 = vmatpush1.msra.mxu0 0.0
  %1178 = vmatprep.subr.mxu0 0.0
  %1179 = vmatpush1.msra.mxu0 0.0
  %1180 = vmatprep.subr.mxu0 0.0
  %1181 = vmatpush1.msra.mxu0 0.0
  %1182 = vmatprep.mubr.f32.mxu0 0.0
  %v1183 = vand.u32 %v37, 4294901760
  %1184 = vmatmul.mubr.f32.gmra.mrb[0].mxu0 %v1183
  %v1185 = vpop.f32.mrb[0].mxu0
  %v1186 = vadd.f32 %v1104, %v1185
  %v1187 = vpop.f32.mrb[0].mxu0
  %v1188 = vadd.f32 %v1106, %v1187
  %1189 = vdwg.mxu0
  %v1194 = vcombine.low %v617, %v619
  %v1195 = vcombine.low %v1186, %v1188
  %1198 = vst [vmem:[%s2] sm:$0xff] %v1194
  %1199 = vst [vmem:[%s2 + $0x8] sm:$0xff] %v1195
  %v1200 = vsel %vm39, %v617, 0.0
  %v1201 = vsel %vm39, %v619, 0.0
  %v1202 = vadd.f32 %v1200, %v1201
  %v1203 = vsel %vm39, %v1186, 0.0
  %v1204 = vadd.f32 %v1202, %v1203
  %v1205 = vsel %vm39, %v1188, 0.0
  %v1206 = vadd.f32 %v1204, %v1205
  %1207 = vadd.xlane.f32.xlu0 %v1206
  %v1208 = vpop.xlane.xlu0 %1207
  %vm1209 = vcmask 3072
  %1210 = vst.msk [vmem:[%s3] sm:$0xf] %vm1209, %v1208
  %v1211 = vmul.f32 %v617, %v617
  %v1212 = vmul.f32 %v619, %v619
  %v1213 = vmul.f32 %v1186, %v1186
  %v1214 = vmul.f32 %v1188, %v1188
  %v1215 = vsel %vm39, %v1211, 0.0
  %v1216 = vsel %vm39, %v1212, 0.0
  %v1217 = vadd.f32 %v1215, %v1216
  %v1218 = vsel %vm39, %v1213, 0.0
  %v1219 = vadd.f32 %v1217, %v1218
  %v1220 = vsel %vm39, %v1214, 0.0
  %v1221 = vadd.f32 %v1219, %v1220
  %1222 = vadd.xlane.f32.xlu0 %v1221
  %v1223 = vpop.xlane.xlu0 %1222
  %1224 = vst.msk [vmem:[%s4] sm:$0xf] %vm1209, %v1223
  // Predicated region
  $region10: #{pua_forward.6} parent=0 // pred_check
    _
  $region11: #{pua_forward.6} parent=0 // pred_check_branch
    %1226 = sbr.rel (0) target = $region13
  $region12: #{pua_forward.6} parent=0 // pred_region
    _
  $region13: #{pua_forward.6} parent=0 // pred_fallthru
    _
  // Predicated region
  $region14: #{pua_forward.6} parent=0 // pred_check
    _
  $region15: #{pua_forward.6} parent=0 // pred_check_branch
    %1228 = sbr.rel (0) target = $region17
  $region16: #{pua_forward.6} parent=0 // pred_region
    _
  $region17: #{pua_forward.6} parent=0 // pred_fallthru
    _
  // Predicated region
  $region18: #{pua_forward.6} parent=0 // pred_check
    _
  $region19: #{pua_forward.6} parent=0 // pred_check_branch
    %1230 = sbr.rel (0) target = $region21
  $region20: #{pua_forward.6} parent=0 // pred_region
    _
  $region21: #{pua_forward.6} parent=0 // pred_fallthru
    _
  // Predicated region
  $region22: #{pua_forward.6} parent=0 // pred_check
    _
  $region23: #{pua_forward.6} parent=0 // pred_check_branch
    %1232 = sbr.rel (0) target = $region25
  $region24: #{pua_forward.6} parent=0 // pred_region
    _
  $region25: #{pua_forward.6} parent=0 // pred_fallthru
    _
  // Predicated region
  $region26: #{pua_forward.6} parent=0 // pred_check
    _
  $region27: #{pua_forward.6} parent=0 // pred_check_branch
    %1234 = sbr.rel (0) target = $region29
  $region28: #{pua_forward.6} parent=0 // pred_region
    _
  $region29: #{pua_forward.6} parent=0 // pred_fallthru
    _
  // Predicated region
  $region30: #{pua_forward.6} parent=0 // pred_check
    _
  $region31: #{pua_forward.6} parent=0 // pred_check_branch
    %1236 = sbr.rel (0) target = $region33
  $region32: #{pua_forward.6} parent=0 // pred_region
    _
  $region33: #{pua_forward.6} parent=0 // pred_fallthru
    _

// kernel: pua_forward.9
$region0: #{pua_forward.9}
  #allocation0 [shape = 'u32[]', space=smem, size = 0x4, offset = 0x4, fixed_abs, tag = 'smem constant byte address 0x4 - core index']
  #allocation1 [shape = 'u32[144,128]{1,0:T(1,128)}', space=vmem, size = 0x12000, scoped, tag = 'internal scratch']
  %s0 = inlined_call_operand.vmem [shape: f32[8,512], index: 0, kind: input, shape index: {}]
  %s1 = inlined_call_operand.vmem [shape: f32[8,1], index: 1, kind: input, shape index: {}]
  %s2 = inlined_call_operand.vmem [shape: f32[8,1], index: 2, kind: input, shape index: {}]
  %s3 = inlined_call_operand.vmem [shape: f32[8,512], index: 3, kind: output, shape index: {}]
  %s4 = sld [smem:[#allocation0]]
  $region22: #{pua_forward.9} parent=0
    _
  %s6 = ssub.s32 1, %s4
  %s7 = scalar_select 0, %s6, %s4
  // Predicated region
  $region2: #{pua_forward.9} parent=0 // pred_check
    _
  $region3: #{pua_forward.9} parent=0 // pred_check_branch
    %9 = sbr.rel (0) target = $region5
  $region4: #{pua_forward.9} parent=0 // pred_region
    _
  $region5: #{pua_forward.9} parent=0 // pred_fallthru
    _
  // Predicated region
  $region6: #{pua_forward.9} parent=0 // pred_check
    _
  $region7: #{pua_forward.9} parent=0 // pred_check_branch
    %11 = sbr.rel (0) target = $region9
  $region8: #{pua_forward.9} parent=0 // pred_region
    _
  $region9: #{pua_forward.9} parent=0 // pred_fallthru
    _
  // Predicated region
  $region10: #{pua_forward.9} parent=0 // pred_check
    _
  $region11: #{pua_forward.9} parent=0 // pred_check_branch
    %13 = sbr.rel (0) target = $region13
  $region12: #{pua_forward.9} parent=0 // pred_region
    _
  $region13: #{pua_forward.9} parent=0 // pred_fallthru
    _
  %v14 = vld [vmem:[%s0] sm:$0xff]
  %v15 = vld [vmem:[%s0 + $0x8] sm:$0xff]
  %v16 = vld [vmem:[%s0 + $0x10] sm:$0xff]
  %v17 = vld [vmem:[%s0 + $0x18] sm:$0xff]
  %v18 = vld [vmem:[%s1] sm:$0xff]
  %20 = vset.pattern.permute.xlu0 0
  %21 = vperm.xlu0 %20, %v18
  %v22 = vpop.permute.xlu0 %21
  %v24 = vmul.f32 %v14, %v22
  %v25 = vmul.f32 %v15, %v22
  %v26 = vmul.f32 %v16, %v22
  %v27 = vmul.f32 %v17, %v22
  %v28 = vld [vmem:[%s2] sm:$0xff]
  %30 = vset.pattern.permute.xlu0 0
  %31 = vperm.xlu0 %30, %v28
  %v32 = vpop.permute.xlu0 %31
  %v34 = vadd.f32 %v24, %v32
  %v35 = vadd.f32 %v25, %v32
  %v36 = vadd.f32 %v26, %v32
  %v37 = vadd.f32 %v27, %v32
  %vm38 = vcmp.ge.f32.partialorder %v34, 0.0
  %vm39 = vcmp.ge.f32.partialorder %v35, 0.0
  %vm40 = vcmp.ge.f32.partialorder %v36, 0.0
  %vm41 = vcmp.ge.f32.partialorder %v37, 0.0
  %v42 = vmul.f32 %v34, 0.2
  %v43 = vmul.f32 %v35, 0.2
  %v44 = vmul.f32 %v36, 0.2
  %v45 = vmul.f32 %v37, 0.2
  %v46 = vsel %vm38, %v34, %v42
  %v47 = vsel %vm39, %v35, %v43
  %v48 = vsel %vm40, %v36, %v44
  %v49 = vsel %vm41, %v37, %v45
  %50 = vst [vmem:[%s3] sm:$0xff] %v46
  %51 = vst [vmem:[%s3 + $0x8] sm:$0xff] %v47
  %52 = vst [vmem:[%s3 + $0x10] sm:$0xff] %v48
  %53 = vst [vmem:[%s3 + $0x18] sm:$0xff] %v49
  // Predicated region
  $region14: #{pua_forward.9} parent=0 // pred_check
    _
  $region15: #{pua_forward.9} parent=0 // pred_check_branch
    %55 = sbr.rel (0) target = $region17
  $region16: #{pua_forward.9} parent=0 // pred_region
    _
  $region17: #{pua_forward.9} parent=0 // pred_fallthru
    _
  // Predicated region
  $region18: #{pua_forward.9} parent=0 // pred_check
    _
  $region19: #{pua_forward.9} parent=0 // pred_check_branch
    %57 = sbr.rel (0) target = $region21
  $region20: #{pua_forward.9} parent=0 // pred_region
    _
  $region21: #{pua_forward.9} parent=0 // pred_fallthru
    _

// kernel: pua_forward.8
$region0: #{pua_forward.8}
  #allocation0 [shape = 'u32[]', space=smem, size = 0x4, offset = 0x4, fixed_abs, tag = 'smem constant byte address 0x4 - core index']
  #allocation1 [shape = 'u32[144,128]{1,0:T(1,128)}', space=vmem, size = 0x12000, scoped, tag = 'internal scratch']
  %s0 = inlined_call_operand.vmem [shape: f32[8,36], index: 0, kind: input, shape index: {}]
  %s1 = inlined_call_operand.vmem [shape: f32[36,512], index: 1, kind: input, shape index: {}]
  %s2 = inlined_call_operand.vmem [shape: f32[8,512], index: 2, kind: output, shape index: {0}]
  %s3 = inlined_call_operand.vmem [shape: f32[1,8,1], index: 3, kind: output, shape index: {1}]
  %s4 = inlined_call_operand.vmem [shape: f32[1,8,1], index: 4, kind: output, shape index: {2}]
  %5 = xla_tuple %s2, %s3, %s4
  %s6 = sld [smem:[#allocation0]]
  $region34: #{pua_forward.8} parent=0
    _
  %s8 = ssub.s32 1, %s6
  %s9 = scalar_select 0, %s8, %s6
  // Predicated region
  $region2: #{pua_forward.8} parent=0 // pred_check
    _
  $region3: #{pua_forward.8} parent=0 // pred_check_branch
    %11 = sbr.rel (0) target = $region5
  $region4: #{pua_forward.8} parent=0 // pred_region
    _
  $region5: #{pua_forward.8} parent=0 // pred_fallthru
    _
  // Predicated region
  $region6: #{pua_forward.8} parent=0 // pred_check
    _
  $region7: #{pua_forward.8} parent=0 // pred_check_branch
    %13 = sbr.rel (0) target = $region9
  $region8: #{pua_forward.8} parent=0 // pred_region
    _
  $region9: #{pua_forward.8} parent=0 // pred_fallthru
    _
  %v14 = vld [vmem:[%s0] sm:$0xff]
  %v15 = vld [vmem:[%s1] sm:$0xff]
  %v16 = vld [vmem:[%s1 + $0x8] sm:$0xff]
  %v17 = vld [vmem:[%s1 + $0x10] sm:$0xff]
  %v18 = vld [vmem:[%s1 + $0x18] sm:$0xff]
  %v19 = vld [vmem:[%s1 + $0x20] sm:$0xff]
  %v20 = vld [vmem:[%s1 + $0x28] sm:$0xff]
  %v21 = vld [vmem:[%s1 + $0x30] sm:$0xff]
  %v22 = vld [vmem:[%s1 + $0x38] sm:$0xff]
  %v23 = vld [vmem:[%s1 + $0x40] sm:$0xff]
  %v24 = vld [vmem:[%s1 + $0x48] sm:$0xff]
  %v25 = vld [vmem:[%s1 + $0x50] sm:$0xff]
  %v26 = vld [vmem:[%s1 + $0x58] sm:$0xff]
  %v27 = vld [vmem:[%s1 + $0x60] sm:$0xff]
  %v28 = vld [vmem:[%s1 + $0x68] sm:$0xff]
  %v29 = vld [vmem:[%s1 + $0x70] sm:$0xff]
  %v30 = vld [vmem:[%s1 + $0x78] sm:$0xff]
  %v31 = vld [vmem:[%s1 + $0x80] sm:$0xf]
  %v32 = vld [vmem:[%s1 + $0x88] sm:$0xf]
  %v33 = vld [vmem:[%s1 + $0x90] sm:$0xf]
  %v34 = vld [vmem:[%s1 + $0x98] sm:$0xf]
  %vm35 = vcmask 293888
  %v37 = vsel %vm35, %v14, 0
  %vm39 = vcmask 1043456
  %v41 = vsel %vm39, %v31, 0
  %v44 = vsel %vm39, %v32, 0
  %v47 = vsel %vm39, %v33, 0
  %v50 = vsel %vm39, %v34, 0
  %v52 = vand.u32 %v16, 4294901760
  %53 = vmatprep.subr.mxu0 %v52
  %v54 = vand.u32 %v15, 4294901760
  %55 = vmatpush1.msra.mxu0 %v54
  %v56 = vand.u32 %v20, 4294901760
  %57 = vmatprep.subr.mxu0 %v56
  %v58 = vand.u32 %v19, 4294901760
  %59 = vmatpush1.msra.mxu0 %v58
  %v60 = vand.u32 %v24, 4294901760
  %61 = vmatprep.subr.mxu0 %v60
  %v62 = vand.u32 %v23, 4294901760
  %63 = vmatpush1.msra.mxu0 %v62
  %v64 = vand.u32 %v28, 4294901760
  %65 = vmatprep.subr.mxu0 %v64
  %v66 = vand.u32 %v27, 4294901760
  %67 = vmatpush1.msra.mxu0 %v66
  %v68 = vand.u32 %v44, 4294901760
  %69 = vmatprep.subr.mxu0 %v68
  %v70 = vand.u32 %v41, 4294901760
  %71 = vmatpush1.msra.mxu0 %v70
  %72 = vmatprep.subr.mxu0 0.0
  %73 = vmatpush1.msra.mxu0 0.0
  %74 = vmatprep.subr.mxu0 0.0
  %75 = vmatpush1.msra.mxu0 0.0
  %76 = vmatprep.subr.mxu0 0.0
  %77 = vmatpush1.msra.mxu0 0.0
  %78 = vmatprep.subr.mxu0 0.0
  %79 = vmatpush1.msra.mxu0 0.0
  %80 = vmatprep.subr.mxu0 0.0
  %81 = vmatpush1.msra.mxu0 0.0
  %82 = vmatprep.subr.mxu0 0.0
  %83 = vmatpush1.msra.mxu0 0.0
  %84 = vmatprep.subr.mxu0 0.0
  %85 = vmatpush1.msra.mxu0 0.0
  %86 = vmatprep.subr.mxu0 0.0
  %87 = vmatpush1.msra.mxu0 0.0
  %88 = vmatprep.subr.mxu0 0.0
  %89 = vmatpush1.msra.mxu0 0.0
  %90 = vmatprep.subr.mxu0 0.0
  %91 = vmatpush1.msra.mxu0 0.0
  %92 = vmatprep.subr.mxu0 0.0
  %93 = vmatpush1.msra.mxu0 0.0
  %94 = vmatprep.subr.mxu0 0.0
  %95 = vmatpush1.msra.mxu0 0.0
  %96 = vmatprep.subr.mxu0 0.0
  %97 = vmatpush1.msra.mxu0 0.0
  %98 = vmatprep.subr.mxu0 0.0
  %99 = vmatpush1.msra.mxu0 0.0
  %100 = vmatprep.subr.mxu0 0.0
  %101 = vmatpush1.msra.mxu0 0.0
  %102 = vmatprep.subr.mxu0 0.0
  %103 = vmatpush1.msra.mxu0 0.0
  %104 = vmatprep.subr.mxu0 0.0
  %105 = vmatpush1.msra.mxu0 0.0
  %106 = vmatprep.subr.mxu0 0.0
  %107 = vmatpush1.msra.mxu0 0.0
  %108 = vmatprep.subr.mxu0 0.0
  %109 = vmatpush1.msra.mxu0 0.0
  %110 = vmatprep.subr.mxu0 0.0
  %111 = vmatpush1.msra.mxu0 0.0
  %112 = vmatprep.subr.mxu0 0.0
  %113 = vmatpush1.msra.mxu0 0.0
  %114 = vmatprep.subr.mxu0 0.0
  %115 = vmatpush1.msra.mxu0 0.0
  %116 = vmatprep.subr.mxu0 0.0
  %117 = vmatpush1.msra.mxu0 0.0
  %118 = vmatprep.subr.mxu0 0.0
  %119 = vmatpush1.msra.mxu0 0.0
  %120 = vmatprep.subr.mxu0 0.0
  %121 = vmatpush1.msra.mxu0 0.0
  %122 = vmatprep.subr.mxu0 0.0
  %123 = vmatpush1.msra.mxu0 0.0
  %124 = vmatprep.subr.mxu0 0.0
  %125 = vmatpush1.msra.mxu0 0.0
  %126 = vmatprep.mubr.f32.mxu0 0.0
  %v127 = vand.u32 %v37, 4294901760
  %v128 = vsub.f32 %v37, %v127
  %v129 = vand.u32 %v128, 4294901760
  %v130 = vsub.f32 %v128, %v129
  %v131 = vand.u32 %v130, 4294901760
  %132 = vmatmul.mubr.f32.gmra.mrb[0].mxu0 %v131
  %v133 = vpop.f32.mrb[0].mxu0
  %v134 = vadd.f32 0.0, %v133
  %v135 = vpop.f32.mrb[0].mxu0
  %v136 = vadd.f32 0.0, %v135
  %137 = vdwg.mxu0
  %v138 = vand.u32 %v16, 4294901760
  %v139 = vsub.f32 %v16, %v138
  %v140 = vand.u32 %v139, 4294901760
  %v141 = vsub.f32 %v139, %v140
  %v142 = vand.u32 %v141, 4294901760
  %143 = vmatprep.subr.mxu0 %v142
  %v144 = vand.u32 %v15, 4294901760
  %v145 = vsub.f32 %v15, %v144
  %v146 = vand.u32 %v145, 4294901760
  %v147 = vsub.f32 %v145, %v146
  %v148 = vand.u32 %v147, 4294901760
  %149 = vmatpush1.msra.mxu0 %v148
  %v150 = vand.u32 %v20, 4294901760
  %v151 = vsub.f32 %v20, %v150
  %v152 = vand.u32 %v151, 4294901760
  %v153 = vsub.f32 %v151, %v152
  %v154 = vand.u32 %v153, 4294901760
  %155 = vmatprep.subr.mxu0 %v154
  %v156 = vand.u32 %v19, 4294901760
  %v157 = vsub.f32 %v19, %v156
  %v158 = vand.u32 %v157, 4294901760
  %v159 = vsub.f32 %v157, %v158
  %v160 = vand.u32 %v159, 4294901760
  %161 = vmatpush1.msra.mxu0 %v160
  %v162 = vand.u32 %v24, 4294901760
  %v163 = vsub.f32 %v24, %v162
  %v164 = vand.u32 %v163, 4294901760
  %v165 = vsub.f32 %v163, %v164
  %v166 = vand.u32 %v165, 4294901760
  %167 = vmatprep.subr.mxu0 %v166
  %v168 = vand.u32 %v23, 4294901760
  %v169 = vsub.f32 %v23, %v168
  %v170 = vand.u32 %v169, 4294901760
  %v171 = vsub.f32 %v169, %v170
  %v172 = vand.u32 %v171, 4294901760
  %173 = vmatpush1.msra.mxu0 %v172
  %v174 = vand.u32 %v28, 4294901760
  %v175 = vsub.f32 %v28, %v174
  %v176 = vand.u32 %v175, 4294901760
  %v177 = vsub.f32 %v175, %v176
  %v178 = vand.u32 %v177, 4294901760
  %179 = vmatprep.subr.mxu0 %v178
  %v180 = vand.u32 %v27, 4294901760
  %v181 = vsub.f32 %v27, %v180
  %v182 = vand.u32 %v181, 4294901760
  %v183 = vsub.f32 %v181, %v182
  %v184 = vand.u32 %v183, 4294901760
  %185 = vmatpush1.msra.mxu0 %v184
  %v186 = vand.u32 %v44, 4294901760
  %v187 = vsub.f32 %v44, %v186
  %v188 = vand.u32 %v187, 4294901760
  %v189 = vsub.f32 %v187, %v188
  %v190 = vand.u32 %v189, 4294901760
  %191 = vmatprep.subr.mxu0 %v190
  %v192 = vand.u32 %v41, 4294901760
  %v193 = vsub.f32 %v41, %v192
  %v194 = vand.u32 %v193, 4294901760
  %v195 = vsub.f32 %v193, %v194
  %v196 = vand.u32 %v195, 4294901760
  %197 = vmatpush1.msra.mxu0 %v196
  %198 = vmatprep.subr.mxu0 0.0
  %199 = vmatpush1.msra.mxu0 0.0
  %200 = vmatprep.subr.mxu0 0.0
  %201 = vmatpush1.msra.mxu0 0.0
  %202 = vmatprep.subr.mxu0 0.0
  %203 = vmatpush1.msra.mxu0 0.0
  %204 = vmatprep.subr.mxu0 0.0
  %205 = vmatpush1.msra.mxu0 0.0
  %206 = vmatprep.subr.mxu0 0.0
  %207 = vmatpush1.msra.mxu0 0.0
  %208 = vmatprep.subr.mxu0 0.0
  %209 = vmatpush1.msra.mxu0 0.0
  %210 = vmatprep.subr.mxu0 0.0
  %211 = vmatpush1.msra.mxu0 0.0
  %212 = vmatprep.subr.mxu0 0.0
  %213 = vmatpush1.msra.mxu0 0.0
  %214 = vmatprep.subr.mxu0 0.0
  %215 = vmatpush1.msra.mxu0 0.0
  %216 = vmatprep.subr.mxu0 0.0
  %217 = vmatpush1.msra.mxu0 0.0
  %218 = vmatprep.subr.mxu0 0.0
  %219 = vmatpush1.msra.mxu0 0.0
  %220 = vmatprep.subr.mxu0 0.0
  %221 = vmatpush1.msra.mxu0 0.0
  %222 = vmatprep.subr.mxu0 0.0
  %223 = vmatpush1.msra.mxu0 0.0
  %224 = vmatprep.subr.mxu0 0.0
  %225 = vmatpush1.msra.mxu0 0.0
  %226 = vmatprep.subr.mxu0 0.0
  %227 = vmatpush1.msra.mxu0 0.0
  %228 = vmatprep.subr.mxu0 0.0
  %229 = vmatpush1.msra.mxu0 0.0
  %230 = vmatprep.subr.mxu0 0.0
  %231 = vmatpush1.msra.mxu0 0.0
  %232 = vmatprep.subr.mxu0 0.0
  %233 = vmatpush1.msra.mxu0 0.0
  %234 = vmatprep.subr.mxu0 0.0
  %235 = vmatpush1.msra.mxu0 0.0
  %236 = vmatprep.subr.mxu0 0.0
  %237 = vmatpush1.msra.mxu0 0.0
  %238 = vmatprep.subr.mxu0 0.0
  %239 = vmatpush1.msra.mxu0 0.0
  %240 = vmatprep.subr.mxu0 0.0
  %241 = vmatpush1.msra.mxu0 0.0
  %242 = vmatprep.subr.mxu0 0.0
  %243 = vmatpush1.msra.mxu0 0.0
  %244 = vmatprep.subr.mxu0 0.0
  %245 = vmatpush1.msra.mxu0 0.0
  %246 = vmatprep.subr.mxu0 0.0
  %247 = vmatpush1.msra.mxu0 0.0
  %248 = vmatprep.subr.mxu0 0.0
  %249 = vmatpush1.msra.mxu0 0.0
  %250 = vmatprep.subr.mxu0 0.0
  %251 = vmatpush1.msra.mxu0 0.0
  %252 = vmatprep.mubr.f32.mxu0 0.0
  %v253 = vand.u32 %v37, 4294901760
  %254 = vmatmul.mubr.f32.gmra.mrb[0].mxu0 %v253
  %v255 = vpop.f32.mrb[0].mxu0
  %v256 = vadd.f32 %v134, %v255
  %v257 = vpop.f32.mrb[0].mxu0
  %v258 = vadd.f32 %v136, %v257
  %259 = vdwg.mxu0
  %v260 = vand.u32 %v16, 4294901760
  %v261 = vsub.f32 %v16, %v260
  %262 = vmatprep.subr.mxu0 %v261
  %v263 = vand.u32 %v15, 4294901760
  %v264 = vsub.f32 %v15, %v263
  %265 = vmatpush1.msra.mxu0 %v264
  %v266 = vand.u32 %v20, 4294901760
  %v267 = vsub.f32 %v20, %v266
  %268 = vmatprep.subr.mxu0 %v267
  %v269 = vand.u32 %v19, 4294901760
  %v270 = vsub.f32 %v19, %v269
  %271 = vmatpush1.msra.mxu0 %v270
  %v272 = vand.u32 %v24, 4294901760
  %v273 = vsub.f32 %v24, %v272
  %274 = vmatprep.subr.mxu0 %v273
  %v275 = vand.u32 %v23, 4294901760
  %v276 = vsub.f32 %v23, %v275
  %277 = vmatpush1.msra.mxu0 %v276
  %v278 = vand.u32 %v28, 4294901760
  %v279 = vsub.f32 %v28, %v278
  %280 = vmatprep.subr.mxu0 %v279
  %v281 = vand.u32 %v27, 4294901760
  %v282 = vsub.f32 %v27, %v281
  %283 = vmatpush1.msra.mxu0 %v282
  %v284 = vand.u32 %v44, 4294901760
  %v285 = vsub.f32 %v44, %v284
  %286 = vmatprep.subr.mxu0 %v285
  %v287 = vand.u32 %v41, 4294901760
  %v288 = vsub.f32 %v41, %v287
  %289 = vmatpush1.msra.mxu0 %v288
  %290 = vmatprep.subr.mxu0 0.0
  %291 = vmatpush1.msra.mxu0 0.0
  %292 = vmatprep.subr.mxu0 0.0
  %293 = vmatpush1.msra.mxu0 0.0
  %294 = vmatprep.subr.mxu0 0.0
  %295 = vmatpush1.msra.mxu0 0.0
  %296 = vmatprep.subr.mxu0 0.0
  %297 = vmatpush1.msra.mxu0 0.0
  %298 = vmatprep.subr.mxu0 0.0
  %299 = vmatpush1.msra.mxu0 0.0
  %300 = vmatprep.subr.mxu0 0.0
  %301 = vmatpush1.msra.mxu0 0.0
  %302 = vmatprep.subr.mxu0 0.0
  %303 = vmatpush1.msra.mxu0 0.0
  %304 = vmatprep.subr.mxu0 0.0
  %305 = vmatpush1.msra.mxu0 0.0
  %306 = vmatprep.subr.mxu0 0.0
  %307 = vmatpush1.msra.mxu0 0.0
  %308 = vmatprep.subr.mxu0 0.0
  %309 = vmatpush1.msra.mxu0 0.0
  %310 = vmatprep.subr.mxu0 0.0
  %311 = vmatpush1.msra.mxu0 0.0
  %312 = vmatprep.subr.mxu0 0.0
  %313 = vmatpush1.msra.mxu0 0.0
  %314 = vmatprep.subr.mxu0 0.0
  %315 = vmatpush1.msra.mxu0 0.0
  %316 = vmatprep.subr.mxu0 0.0
  %317 = vmatpush1.msra.mxu0 0.0
  %318 = vmatprep.subr.mxu0 0.0
  %319 = vmatpush1.msra.mxu0 0.0
  %320 = vmatprep.subr.mxu0 0.0
  %321 = vmatpush1.msra.mxu0 0.0
  %322 = vmatprep.subr.mxu0 0.0
  %323 = vmatpush1.msra.mxu0 0.0
  %324 = vmatprep.subr.mxu0 0.0
  %325 = vmatpush1.msra.mxu0 0.0
  %326 = vmatprep.subr.mxu0 0.0
  %327 = vmatpush1.msra.mxu0 0.0
  %328 = vmatprep.subr.mxu0 0.0
  %329 = vmatpush1.msra.mxu0 0.0
  %330 = vmatprep.subr.mxu0 0.0
  %331 = vmatpush1.msra.mxu0 0.0
  %332 = vmatprep.subr.mxu0 0.0
  %333 = vmatpush1.msra.mxu0 0.0
  %334 = vmatprep.subr.mxu0 0.0
  %335 = vmatpush1.msra.mxu0 0.0
  %336 = vmatprep.subr.mxu0 0.0
  %337 = vmatpush1.msra.mxu0 0.0
  %338 = vmatprep.subr.mxu0 0.0
  %339 = vmatpush1.msra.mxu0 0.0
  %340 = vmatprep.subr.mxu0 0.0
  %341 = vmatpush1.msra.mxu0 0.0
  %342 = vmatprep.subr.mxu0 0.0
  %343 = vmatpush1.msra.mxu0 0.0
  %344 = vmatprep.mubr.f32.mxu0 0.0
  %v345 = vand.u32 %v37, 4294901760
  %v346 = vsub.f32 %v37, %v345
  %347 = vmatmul.mubr.f32.gmra.mrb[0].mxu0 %v346
  %v348 = vpop.f32.mrb[0].mxu0
  %v349 = vadd.f32 %v256, %v348
  %v350 = vpop.f32.mrb[0].mxu0
  %v351 = vadd.f32 %v258, %v350
  %352 = vdwg.mxu0
  %v353 = vand.u32 %v16, 4294901760
  %354 = vmatprep.subr.mxu0 %v353
  %v355 = vand.u32 %v15, 4294901760
  %356 = vmatpush1.msra.mxu0 %v355
  %v357 = vand.u32 %v20, 4294901760
  %358 = vmatprep.subr.mxu0 %v357
  %v359 = vand.u32 %v19, 4294901760
  %360 = vmatpush1.msra.mxu0 %v359
  %v361 = vand.u32 %v24, 4294901760
  %362 = vmatprep.subr.mxu0 %v361
  %v363 = vand.u32 %v23, 4294901760
  %364 = vmatpush1.msra.mxu0 %v363
  %v365 = vand.u32 %v28, 4294901760
  %366 = vmatprep.subr.mxu0 %v365
  %v367 = vand.u32 %v27, 4294901760
  %368 = vmatpush1.msra.mxu0 %v367
  %v369 = vand.u32 %v44, 4294901760
  %370 = vmatprep.subr.mxu0 %v369
  %v371 = vand.u32 %v41, 4294901760
  %372 = vmatpush1.msra.mxu0 %v371
  %373 = vmatprep.subr.mxu0 0.0
  %374 = vmatpush1.msra.mxu0 0.0
  %375 = vmatprep.subr.mxu0 0.0
  %376 = vmatpush1.msra.mxu0 0.0
  %377 = vmatprep.subr.mxu0 0.0
  %378 = vmatpush1.msra.mxu0 0.0
  %379 = vmatprep.subr.mxu0 0.0
  %380 = vmatpush1.msra.mxu0 0.0
  %381 = vmatprep.subr.mxu0 0.0
  %382 = vmatpush1.msra.mxu0 0.0
  %383 = vmatprep.subr.mxu0 0.0
  %384 = vmatpush1.msra.mxu0 0.0
  %385 = vmatprep.subr.mxu0 0.0
  %386 = vmatpush1.msra.mxu0 0.0
  %387 = vmatprep.subr.mxu0 0.0
  %388 = vmatpush1.msra.mxu0 0.0
  %389 = vmatprep.subr.mxu0 0.0
  %390 = vmatpush1.msra.mxu0 0.0
  %391 = vmatprep.subr.mxu0 0.0
  %392 = vmatpush1.msra.mxu0 0.0
  %393 = vmatprep.subr.mxu0 0.0
  %394 = vmatpush1.msra.mxu0 0.0
  %395 = vmatprep.subr.mxu0 0.0
  %396 = vmatpush1.msra.mxu0 0.0
  %397 = vmatprep.subr.mxu0 0.0
  %398 = vmatpush1.msra.mxu0 0.0
  %399 = vmatprep.subr.mxu0 0.0
  %400 = vmatpush1.msra.mxu0 0.0
  %401 = vmatprep.subr.mxu0 0.0
  %402 = vmatpush1.msra.mxu0 0.0
  %403 = vmatprep.subr.mxu0 0.0
  %404 = vmatpush1.msra.mxu0 0.0
  %405 = vmatprep.subr.mxu0 0.0
  %406 = vmatpush1.msra.mxu0 0.0
  %407 = vmatprep.subr.mxu0 0.0
  %408 = vmatpush1.msra.mxu0 0.0
  %409 = vmatprep.subr.mxu0 0.0
  %410 = vmatpush1.msra.mxu0 0.0
  %411 = vmatprep.subr.mxu0 0.0
  %412 = vmatpush1.msra.mxu0 0.0
  %413 = vmatprep.subr.mxu0 0.0
  %414 = vmatpush1.msra.mxu0 0.0
  %415 = vmatprep.subr.mxu0 0.0
  %416 = vmatpush1.msra.mxu0 0.0
  %417 = vmatprep.subr.mxu0 0.0
  %418 = vmatpush1.msra.mxu0 0.0
  %419 = vmatprep.subr.mxu0 0.0
  %420 = vmatpush1.msra.mxu0 0.0
  %421 = vmatprep.subr.mxu0 0.0
  %422 = vmatpush1.msra.mxu0 0.0
  %423 = vmatprep.subr.mxu0 0.0
  %424 = vmatpush1.msra.mxu0 0.0
  %425 = vmatprep.subr.mxu0 0.0
  %426 = vmatpush1.msra.mxu0 0.0
  %427 = vmatprep.mubr.f32.mxu0 0.0
  %v428 = vand.u32 %v37, 4294901760
  %v429 = vsub.f32 %v37, %v428
  %v430 = vand.u32 %v429, 4294901760
  %431 = vmatmul.mubr.f32.gmra.mrb[0].mxu0 %v430
  %v432 = vpop.f32.mrb[0].mxu0
  %v433 = vadd.f32 %v349, %v432
  %v434 = vpop.f32.mrb[0].mxu0
  %v435 = vadd.f32 %v351, %v434
  %436 = vdwg.mxu0
  %v437 = vand.u32 %v16, 4294901760
  %v438 = vsub.f32 %v16, %v437
  %v439 = vand.u32 %v438, 4294901760
  %440 = vmatprep.subr.mxu0 %v439
  %v441 = vand.u32 %v15, 4294901760
  %v442 = vsub.f32 %v15, %v441
  %v443 = vand.u32 %v442, 4294901760
  %444 = vmatpush1.msra.mxu0 %v443
  %v445 = vand.u32 %v20, 4294901760
  %v446 = vsub.f32 %v20, %v445
  %v447 = vand.u32 %v446, 4294901760
  %448 = vmatprep.subr.mxu0 %v447
  %v449 = vand.u32 %v19, 4294901760
  %v450 = vsub.f32 %v19, %v449
  %v451 = vand.u32 %v450, 4294901760
  %452 = vmatpush1.msra.mxu0 %v451
  %v453 = vand.u32 %v24, 4294901760
  %v454 = vsub.f32 %v24, %v453
  %v455 = vand.u32 %v454, 4294901760
  %456 = vmatprep.subr.mxu0 %v455
  %v457 = vand.u32 %v23, 4294901760
  %v458 = vsub.f32 %v23, %v457
  %v459 = vand.u32 %v458, 4294901760
  %460 = vmatpush1.msra.mxu0 %v459
  %v461 = vand.u32 %v28, 4294901760
  %v462 = vsub.f32 %v28, %v461
  %v463 = vand.u32 %v462, 4294901760
  %464 = vmatprep.subr.mxu0 %v463
  %v465 = vand.u32 %v27, 4294901760
  %v466 = vsub.f32 %v27, %v465
  %v467 = vand.u32 %v466, 4294901760
  %468 = vmatpush1.msra.mxu0 %v467
  %v469 = vand.u32 %v44, 4294901760
  %v470 = vsub.f32 %v44, %v469
  %v471 = vand.u32 %v470, 4294901760
  %472 = vmatprep.subr.mxu0 %v471
  %v473 = vand.u32 %v41, 4294901760
  %v474 = vsub.f32 %v41, %v473
  %v475 = vand.u32 %v474, 4294901760
  %476 = vmatpush1.msra.mxu0 %v475
  %477 = vmatprep.subr.mxu0 0.0
  %478 = vmatpush1.msra.mxu0 0.0
  %479 = vmatprep.subr.mxu0 0.0
  %480 = vmatpush1.msra.mxu0 0.0
  %481 = vmatprep.subr.mxu0 0.0
  %482 = vmatpush1.msra.mxu0 0.0
  %483 = vmatprep.subr.mxu0 0.0
  %484 = vmatpush1.msra.mxu0 0.0
  %485 = vmatprep.subr.mxu0 0.0
  %486 = vmatpush1.msra.mxu0 0.0
  %487 = vmatprep.subr.mxu0 0.0
  %488 = vmatpush1.msra.mxu0 0.0
  %489 = vmatprep.subr.mxu0 0.0
  %490 = vmatpush1.msra.mxu0 0.0
  %491 = vmatprep.subr.mxu0 0.0
  %492 = vmatpush1.msra.mxu0 0.0
  %493 = vmatprep.subr.mxu0 0.0
  %494 = vmatpush1.msra.mxu0 0.0
  %495 = vmatprep.subr.mxu0 0.0
  %496 = vmatpush1.msra.mxu0 0.0
  %497 = vmatprep.subr.mxu0 0.0
  %498 = vmatpush1.msra.mxu0 0.0
  %499 = vmatprep.subr.mxu0 0.0
  %500 = vmatpush1.msra.mxu0 0.0
  %501 = vmatprep.subr.mxu0 0.0
  %502 = vmatpush1.msra.mxu0 0.0
  %503 = vmatprep.subr.mxu0 0.0
  %504 = vmatpush1.msra.mxu0 0.0
  %505 = vmatprep.subr.mxu0 0.0
  %506 = vmatpush1.msra.mxu0 0.0
  %507 = vmatprep.subr.mxu0 0.0
  %508 = vmatpush1.msra.mxu0 0.0
  %509 = vmatprep.subr.mxu0 0.0
  %510 = vmatpush1.msra.mxu0 0.0
  %511 = vmatprep.subr.mxu0 0.0
  %512 = vmatpush1.msra.mxu0 0.0
  %513 = vmatprep.subr.mxu0 0.0
  %514 = vmatpush1.msra.mxu0 0.0
  %515 = vmatprep.subr.mxu0 0.0
  %516 = vmatpush1.msra.mxu0 0.0
  %517 = vmatprep.subr.mxu0 0.0
  %518 = vmatpush1.msra.mxu0 0.0
  %519 = vmatprep.subr.mxu0 0.0
  %520 = vmatpush1.msra.mxu0 0.0
  %521 = vmatprep.subr.mxu0 0.0
  %522 = vmatpush1.msra.mxu0 0.0
  %523 = vmatprep.subr.mxu0 0.0
  %524 = vmatpush1.msra.mxu0 0.0
  %525 = vmatprep.subr.mxu0 0.0
  %526 = vmatpush1.msra.mxu0 0.0
  %527 = vmatprep.subr.mxu0 0.0
  %528 = vmatpush1.msra.mxu0 0.0
  %529 = vmatprep.subr.mxu0 0.0
  %530 = vmatpush1.msra.mxu0 0.0
  %531 = vmatprep.mubr.f32.mxu0 0.0
  %v532 = vand.u32 %v37, 4294901760
  %533 = vmatmul.mubr.f32.gmra.mrb[0].mxu0 %v532
  %v534 = vpop.f32.mrb[0].mxu0
  %v535 = vadd.f32 %v433, %v534
  %v536 = vpop.f32.mrb[0].mxu0
  %v537 = vadd.f32 %v435, %v536
  %538 = vdwg.mxu0
  %v539 = vand.u32 %v16, 4294901760
  %540 = vmatprep.subr.mxu0 %v539
  %v541 = vand.u32 %v15, 4294901760
  %542 = vmatpush1.msra.mxu0 %v541
  %v543 = vand.u32 %v20, 4294901760
  %544 = vmatprep.subr.mxu0 %v543
  %v545 = vand.u32 %v19, 4294901760
  %546 = vmatpush1.msra.mxu0 %v545
  %v547 = vand.u32 %v24, 4294901760
  %548 = vmatprep.subr.mxu0 %v547
  %v549 = vand.u32 %v23, 4294901760
  %550 = vmatpush1.msra.mxu0 %v549
  %v551 = vand.u32 %v28, 4294901760
  %552 = vmatprep.subr.mxu0 %v551
  %v553 = vand.u32 %v27, 4294901760
  %554 = vmatpush1.msra.mxu0 %v553
  %v555 = vand.u32 %v44, 4294901760
  %556 = vmatprep.subr.mxu0 %v555
  %v557 = vand.u32 %v41, 4294901760
  %558 = vmatpush1.msra.mxu0 %v557
  %559 = vmatprep.subr.mxu0 0.0
  %560 = vmatpush1.msra.mxu0 0.0
  %561 = vmatprep.subr.mxu0 0.0
  %562 = vmatpush1.msra.mxu0 0.0
  %563 = vmatprep.subr.mxu0 0.0
  %564 = vmatpush1.msra.mxu0 0.0
  %565 = vmatprep.subr.mxu0 0.0
  %566 = vmatpush1.msra.mxu0 0.0
  %567 = vmatprep.subr.mxu0 0.0
  %568 = vmatpush1.msra.mxu0 0.0
  %569 = vmatprep.subr.mxu0 0.0
  %570 = vmatpush1.msra.mxu0 0.0
  %571 = vmatprep.subr.mxu0 0.0
  %572 = vmatpush1.msra.mxu0 0.0
  %573 = vmatprep.subr.mxu0 0.0
  %574 = vmatpush1.msra.mxu0 0.0
  %575 = vmatprep.subr.mxu0 0.0
  %576 = vmatpush1.msra.mxu0 0.0
  %577 = vmatprep.subr.mxu0 0.0
  %578 = vmatpush1.msra.mxu0 0.0
  %579 = vmatprep.subr.mxu0 0.0
  %580 = vmatpush1.msra.mxu0 0.0
  %581 = vmatprep.subr.mxu0 0.0
  %582 = vmatpush1.msra.mxu0 0.0
  %583 = vmatprep.subr.mxu0 0.0
  %584 = vmatpush1.msra.mxu0 0.0
  %585 = vmatprep.subr.mxu0 0.0
  %586 = vmatpush1.msra.mxu0 0.0
  %587 = vmatprep.subr.mxu0 0.0
  %588 = vmatpush1.msra.mxu0 0.0
  %589 = vmatprep.subr.mxu0 0.0
  %590 = vmatpush1.msra.mxu0 0.0
  %591 = vmatprep.subr.mxu0 0.0
  %592 = vmatpush1.msra.mxu0 0.0
  %593 = vmatprep.subr.mxu0 0.0
  %594 = vmatpush1.msra.mxu0 0.0
  %595 = vmatprep.subr.mxu0 0.0
  %596 = vmatpush1.msra.mxu0 0.0
  %597 = vmatprep.subr.mxu0 0.0
  %598 = vmatpush1.msra.mxu0 0.0
  %599 = vmatprep.subr.mxu0 0.0
  %600 = vmatpush1.msra.mxu0 0.0
  %601 = vmatprep.subr.mxu0 0.0
  %602 = vmatpush1.msra.mxu0 0.0
  %603 = vmatprep.subr.mxu0 0.0
  %604 = vmatpush1.msra.mxu0 0.0
  %605 = vmatprep.subr.mxu0 0.0
  %606 = vmatpush1.msra.mxu0 0.0
  %607 = vmatprep.subr.mxu0 0.0
  %608 = vmatpush1.msra.mxu0 0.0
  %609 = vmatprep.subr.mxu0 0.0
  %610 = vmatpush1.msra.mxu0 0.0
  %611 = vmatprep.subr.mxu0 0.0
  %612 = vmatpush1.msra.mxu0 0.0
  %613 = vmatprep.mubr.f32.mxu0 0.0
  %v614 = vand.u32 %v37, 4294901760
  %615 = vmatmul.mubr.f32.gmra.mrb[0].mxu0 %v614
  %v616 = vpop.f32.mrb[0].mxu0
  %v617 = vadd.f32 %v535, %v616
  %v618 = vpop.f32.mrb[0].mxu0
  %v619 = vadd.f32 %v537, %v618
  %620 = vdwg.mxu0
  %v621 = vand.u32 %v18, 4294901760
  %622 = vmatprep.subr.mxu0 %v621
  %v623 = vand.u32 %v17, 4294901760
  %624 = vmatpush1.msra.mxu0 %v623
  %v625 = vand.u32 %v22, 4294901760
  %626 = vmatprep.subr.mxu0 %v625
  %v627 = vand.u32 %v21, 4294901760
  %628 = vmatpush1.msra.mxu0 %v627
  %v629 = vand.u32 %v26, 4294901760
  %630 = vmatprep.subr.mxu0 %v629
  %v631 = vand.u32 %v25, 4294901760
  %632 = vmatpush1.msra.mxu0 %v631
  %v633 = vand.u32 %v30, 4294901760
  %634 = vmatprep.subr.mxu0 %v633
  %v635 = vand.u32 %v29, 4294901760
  %636 = vmatpush1.msra.mxu0 %v635
  %v637 = vand.u32 %v50, 4294901760
  %638 = vmatprep.subr.mxu0 %v637
  %v639 = vand.u32 %v47, 4294901760
  %640 = vmatpush1.msra.mxu0 %v639
  %641 = vmatprep.subr.mxu0 0.0
  %642 = vmatpush1.msra.mxu0 0.0
  %643 = vmatprep.subr.mxu0 0.0
  %644 = vmatpush1.msra.mxu0 0.0
  %645 = vmatprep.subr.mxu0 0.0
  %646 = vmatpush1.msra.mxu0 0.0
  %647 = vmatprep.subr.mxu0 0.0
  %648 = vmatpush1.msra.mxu0 0.0
  %649 = vmatprep.subr.mxu0 0.0
  %650 = vmatpush1.msra.mxu0 0.0
  %651 = vmatprep.subr.mxu0 0.0
  %652 = vmatpush1.msra.mxu0 0.0
  %653 = vmatprep.subr.mxu0 0.0
  %654 = vmatpush1.msra.mxu0 0.0
  %655 = vmatprep.subr.mxu0 0.0
  %656 = vmatpush1.msra.mxu0 0.0
  %657 = vmatprep.subr.mxu0 0.0
  %658 = vmatpush1.msra.mxu0 0.0
  %659 = vmatprep.subr.mxu0 0.0
  %660 = vmatpush1.msra.mxu0 0.0
  %661 = vmatprep.subr.mxu0 0.0
  %662 = vmatpush1.msra.mxu0 0.0
  %663 = vmatprep.subr.mxu0 0.0
  %664 = vmatpush1.msra.mxu0 0.0
  %665 = vmatprep.subr.mxu0 0.0
  %666 = vmatpush1.msra.mxu0 0.0
  %667 = vmatprep.subr.mxu0 0.0
  %668 = vmatpush1.msra.mxu0 0.0
  %669 = vmatprep.subr.mxu0 0.0
  %670 = vmatpush1.msra.mxu0 0.0
  %671 = vmatprep.subr.mxu0 0.0
  %672 = vmatpush1.msra.mxu0 0.0
  %673 = vmatprep.subr.mxu0 0.0
  %674 = vmatpush1.msra.mxu0 0.0
  %675 = vmatprep.subr.mxu0 0.0
  %676 = vmatpush1.msra.mxu0 0.0
  %677 = vmatprep.subr.mxu0 0.0
  %678 = vmatpush1.msra.mxu0 0.0
  %679 = vmatprep.subr.mxu0 0.0
  %680 = vmatpush1.msra.mxu0 0.0
  %681 = vmatprep.subr.mxu0 0.0
  %682 = vmatpush1.msra.mxu0 0.0
  %683 = vmatprep.subr.mxu0 0.0
  %684 = vmatpush1.msra.mxu0 0.0
  %685 = vmatprep.subr.mxu0 0.0
  %686 = vmatpush1.msra.mxu0 0.0
  %687 = vmatprep.subr.mxu0 0.0
  %688 = vmatpush1.msra.mxu0 0.0
  %689 = vmatprep.subr.mxu0 0.0
  %690 = vmatpush1.msra.mxu0 0.0
  %691 = vmatprep.subr.mxu0 0.0
  %692 = vmatpush1.msra.mxu0 0.0
  %693 = vmatprep.subr.mxu0 0.0
  %694 = vmatpush1.msra.mxu0 0.0
  %695 = vmatprep.mubr.f32.mxu0 0.0
  %v696 = vand.u32 %v37, 4294901760
  %v697 = vsub.f32 %v37, %v696
  %v698 = vand.u32 %v697, 4294901760
  %v699 = vsub.f32 %v697, %v698
  %v700 = vand.u32 %v699, 4294901760
  %701 = vmatmul.mubr.f32.gmra.mrb[0].mxu0 %v700
  %v702 = vpop.f32.mrb[0].mxu0
  %v703 = vadd.f32 0.0, %v702
  %v704 = vpop.f32.mrb[0].mxu0
  %v705 = vadd.f32 0.0, %v704
  %706 = vdwg.mxu0
  %v707 = vand.u32 %v18, 4294901760
  %v708 = vsub.f32 %v18, %v707
  %v709 = vand.u32 %v708, 4294901760
  %v710 = vsub.f32 %v708, %v709
  %v711 = vand.u32 %v710, 4294901760
  %712 = vmatprep.subr.mxu0 %v711
  %v713 = vand.u32 %v17, 4294901760
  %v714 = vsub.f32 %v17, %v713
  %v715 = vand.u32 %v714, 4294901760
  %v716 = vsub.f32 %v714, %v715
  %v717 = vand.u32 %v716, 4294901760
  %718 = vmatpush1.msra.mxu0 %v717
  %v719 = vand.u32 %v22, 4294901760
  %v720 = vsub.f32 %v22, %v719
  %v721 = vand.u32 %v720, 4294901760
  %v722 = vsub.f32 %v720, %v721
  %v723 = vand.u32 %v722, 4294901760
  %724 = vmatprep.subr.mxu0 %v723
  %v725 = vand.u32 %v21, 4294901760
  %v726 = vsub.f32 %v21, %v725
  %v727 = vand.u32 %v726, 4294901760
  %v728 = vsub.f32 %v726, %v727
  %v729 = vand.u32 %v728, 4294901760
  %730 = vmatpush1.msra.mxu0 %v729
  %v731 = vand.u32 %v26, 4294901760
  %v732 = vsub.f32 %v26, %v731
  %v733 = vand.u32 %v732, 4294901760
  %v734 = vsub.f32 %v732, %v733
  %v735 = vand.u32 %v734, 4294901760
  %736 = vmatprep.subr.mxu0 %v735
  %v737 = vand.u32 %v25, 4294901760
  %v738 = vsub.f32 %v25, %v737
  %v739 = vand.u32 %v738, 4294901760
  %v740 = vsub.f32 %v738, %v739
  %v741 = vand.u32 %v740, 4294901760
  %742 = vmatpush1.msra.mxu0 %v741
  %v743 = vand.u32 %v30, 4294901760
  %v744 = vsub.f32 %v30, %v743
  %v745 = vand.u32 %v744, 4294901760
  %v746 = vsub.f32 %v744, %v745
  %v747 = vand.u32 %v746, 4294901760
  %748 = vmatprep.subr.mxu0 %v747
  %v749 = vand.u32 %v29, 4294901760
  %v750 = vsub.f32 %v29, %v749
  %v751 = vand.u32 %v750, 4294901760
  %v752 = vsub.f32 %v750, %v751
  %v753 = vand.u32 %v752, 4294901760
  %754 = vmatpush1.msra.mxu0 %v753
  %v755 = vand.u32 %v50, 4294901760
  %v756 = vsub.f32 %v50, %v755
  %v757 = vand.u32 %v756, 4294901760
  %v758 = vsub.f32 %v756, %v757
  %v759 = vand.u32 %v758, 4294901760
  %760 = vmatprep.subr.mxu0 %v759
  %v761 = vand.u32 %v47, 4294901760
  %v762 = vsub.f32 %v47, %v761
  %v763 = vand.u32 %v762, 4294901760
  %v764 = vsub.f32 %v762, %v763
  %v765 = vand.u32 %v764, 4294901760
  %766 = vmatpush1.msra.mxu0 %v765
  %767 = vmatprep.subr.mxu0 0.0
  %768 = vmatpush1.msra.mxu0 0.0
  %769 = vmatprep.subr.mxu0 0.0
  %770 = vmatpush1.msra.mxu0 0.0
  %771 = vmatprep.subr.mxu0 0.0
  %772 = vmatpush1.msra.mxu0 0.0
  %773 = vmatprep.subr.mxu0 0.0
  %774 = vmatpush1.msra.mxu0 0.0
  %775 = vmatprep.subr.mxu0 0.0
  %776 = vmatpush1.msra.mxu0 0.0
  %777 = vmatprep.subr.mxu0 0.0
  %778 = vmatpush1.msra.mxu0 0.0
  %779 = vmatprep.subr.mxu0 0.0
  %780 = vmatpush1.msra.mxu0 0.0
  %781 = vmatprep.subr.mxu0 0.0
  %782 = vmatpush1.msra.mxu0 0.0
  %783 = vmatprep.subr.mxu0 0.0
  %784 = vmatpush1.msra.mxu0 0.0
  %785 = vmatprep.subr.mxu0 0.0
  %786 = vmatpush1.msra.mxu0 0.0
  %787 = vmatprep.subr.mxu0 0.0
  %788 = vmatpush1.msra.mxu0 0.0
  %789 = vmatprep.subr.mxu0 0.0
  %790 = vmatpush1.msra.mxu0 0.0
  %791 = vmatprep.subr.mxu0 0.0
  %792 = vmatpush1.msra.mxu0 0.0
  %793 = vmatprep.subr.mxu0 0.0
  %794 = vmatpush1.msra.mxu0 0.0
  %795 = vmatprep.subr.mxu0 0.0
  %796 = vmatpush1.msra.mxu0 0.0
  %797 = vmatprep.subr.mxu0 0.0
  %798 = vmatpush1.msra.mxu0 0.0
  %799 = vmatprep.subr.mxu0 0.0
  %800 = vmatpush1.msra.mxu0 0.0
  %801 = vmatprep.subr.mxu0 0.0
  %802 = vmatpush1.msra.mxu0 0.0
  %803 = vmatprep.subr.mxu0 0.0
  %804 = vmatpush1.msra.mxu0 0.0
  %805 = vmatprep.subr.mxu0 0.0
  %806 = vmatpush1.msra.mxu0 0.0
  %807 = vmatprep.subr.mxu0 0.0
  %808 = vmatpush1.msra.mxu0 0.0
  %809 = vmatprep.subr.mxu0 0.0
  %810 = vmatpush1.msra.mxu0 0.0
  %811 = vmatprep.subr.mxu0 0.0
  %812 = vmatpush1.msra.mxu0 0.0
  %813 = vmatprep.subr.mxu0 0.0
  %814 = vmatpush1.msra.mxu0 0.0
  %815 = vmatprep.subr.mxu0 0.0
  %816 = vmatpush1.msra.mxu0 0.0
  %817 = vmatprep.subr.mxu0 0.0
  %818 = vmatpush1.msra.mxu0 0.0
  %819 = vmatprep.subr.mxu0 0.0
  %820 = vmatpush1.msra.mxu0 0.0
  %821 = vmatprep.mubr.f32.mxu0 0.0
  %v822 = vand.u32 %v37, 4294901760
  %823 = vmatmul.mubr.f32.gmra.mrb[0].mxu0 %v822
  %v824 = vpop.f32.mrb[0].mxu0
  %v825 = vadd.f32 %v703, %v824
  %v826 = vpop.f32.mrb[0].mxu0
  %v827 = vadd.f32 %v705, %v826
  %828 = vdwg.mxu0
  %v829 = vand.u32 %v18, 4294901760
  %v830 = vsub.f32 %v18, %v829
  %831 = vmatprep.subr.mxu0 %v830
  %v832 = vand.u32 %v17, 4294901760
  %v833 = vsub.f32 %v17, %v832
  %834 = vmatpush1.msra.mxu0 %v833
  %v835 = vand.u32 %v22, 4294901760
  %v836 = vsub.f32 %v22, %v835
  %837 = vmatprep.subr.mxu0 %v836
  %v838 = vand.u32 %v21, 4294901760
  %v839 = vsub.f32 %v21, %v838
  %840 = vmatpush1.msra.mxu0 %v839
  %v841 = vand.u32 %v26, 4294901760
  %v842 = vsub.f32 %v26, %v841
  %843 = vmatprep.subr.mxu0 %v842
  %v844 = vand.u32 %v25, 4294901760
  %v845 = vsub.f32 %v25, %v844
  %846 = vmatpush1.msra.mxu0 %v845
  %v847 = vand.u32 %v30, 4294901760
  %v848 = vsub.f32 %v30, %v847
  %849 = vmatprep.subr.mxu0 %v848
  %v850 = vand.u32 %v29, 4294901760
  %v851 = vsub.f32 %v29, %v850
  %852 = vmatpush1.msra.mxu0 %v851
  %v853 = vand.u32 %v50, 4294901760
  %v854 = vsub.f32 %v50, %v853
  %855 = vmatprep.subr.mxu0 %v854
  %v856 = vand.u32 %v47, 4294901760
  %v857 = vsub.f32 %v47, %v856
  %858 = vmatpush1.msra.mxu0 %v857
  %859 = vmatprep.subr.mxu0 0.0
  %860 = vmatpush1.msra.mxu0 0.0
  %861 = vmatprep.subr.mxu0 0.0
  %862 = vmatpush1.msra.mxu0 0.0
  %863 = vmatprep.subr.mxu0 0.0
  %864 = vmatpush1.msra.mxu0 0.0
  %865 = vmatprep.subr.mxu0 0.0
  %866 = vmatpush1.msra.mxu0 0.0
  %867 = vmatprep.subr.mxu0 0.0
  %868 = vmatpush1.msra.mxu0 0.0
  %869 = vmatprep.subr.mxu0 0.0
  %870 = vmatpush1.msra.mxu0 0.0
  %871 = vmatprep.subr.mxu0 0.0
  %872 = vmatpush1.msra.mxu0 0.0
  %873 = vmatprep.subr.mxu0 0.0
  %874 = vmatpush1.msra.mxu0 0.0
  %875 = vmatprep.subr.mxu0 0.0
  %876 = vmatpush1.msra.mxu0 0.0
  %877 = vmatprep.subr.mxu0 0.0
  %878 = vmatpush1.msra.mxu0 0.0
  %879 = vmatprep.subr.mxu0 0.0
  %880 = vmatpush1.msra.mxu0 0.0
  %881 = vmatprep.subr.mxu0 0.0
  %882 = vmatpush1.msra.mxu0 0.0
  %883 = vmatprep.subr.mxu0 0.0
  %884 = vmatpush1.msra.mxu0 0.0
  %885 = vmatprep.subr.mxu0 0.0
  %886 = vmatpush1.msra.mxu0 0.0
  %887 = vmatprep.subr.mxu0 0.0
  %888 = vmatpush1.msra.mxu0 0.0
  %889 = vmatprep.subr.mxu0 0.0
  %890 = vmatpush1.msra.mxu0 0.0
  %891 = vmatprep.subr.mxu0 0.0
  %892 = vmatpush1.msra.mxu0 0.0
  %893 = vmatprep.subr.mxu0 0.0
  %894 = vmatpush1.msra.mxu0 0.0
  %895 = vmatprep.subr.mxu0 0.0
  %896 = vmatpush1.msra.mxu0 0.0
  %897 = vmatprep.subr.mxu0 0.0
  %898 = vmatpush1.msra.mxu0 0.0
  %899 = vmatprep.subr.mxu0 0.0
  %900 = vmatpush1.msra.mxu0 0.0
  %901 = vmatprep.subr.mxu0 0.0
  %902 = vmatpush1.msra.mxu0 0.0
  %903 = vmatprep.subr.mxu0 0.0
  %904 = vmatpush1.msra.mxu0 0.0
  %905 = vmatprep.subr.mxu0 0.0
  %906 = vmatpush1.msra.mxu0 0.0
  %907 = vmatprep.subr.mxu0 0.0
  %908 = vmatpush1.msra.mxu0 0.0
  %909 = vmatprep.subr.mxu0 0.0
  %910 = vmatpush1.msra.mxu0 0.0
  %911 = vmatprep.subr.mxu0 0.0
  %912 = vmatpush1.msra.mxu0 0.0
  %913 = vmatprep.mubr.f32.mxu0 0.0
  %v914 = vand.u32 %v37, 4294901760
  %v915 = vsub.f32 %v37, %v914
  %916 = vmatmul.mubr.f32.gmra.mrb[0].mxu0 %v915
  %v917 = vpop.f32.mrb[0].mxu0
  %v918 = vadd.f32 %v825, %v917
  %v919 = vpop.f32.mrb[0].mxu0
  %v920 = vadd.f32 %v827, %v919
  %921 = vdwg.mxu0
  %v922 = vand.u32 %v18, 4294901760
  %923 = vmatprep.subr.mxu0 %v922
  %v924 = vand.u32 %v17, 4294901760
  %925 = vmatpush1.msra.mxu0 %v924
  %v926 = vand.u32 %v22, 4294901760
  %927 = vmatprep.subr.mxu0 %v926
  %v928 = vand.u32 %v21, 4294901760
  %929 = vmatpush1.msra.mxu0 %v928
  %v930 = vand.u32 %v26, 4294901760
  %931 = vmatprep.subr.mxu0 %v930
  %v932 = vand.u32 %v25, 4294901760
  %933 = vmatpush1.msra.mxu0 %v932
  %v934 = vand.u32 %v30, 4294901760
  %935 = vmatprep.subr.mxu0 %v934
  %v936 = vand.u32 %v29, 4294901760
  %937 = vmatpush1.msra.mxu0 %v936
  %v938 = vand.u32 %v50, 4294901760
  %939 = vmatprep.subr.mxu0 %v938
  %v940 = vand.u32 %v47, 4294901760
  %941 = vmatpush1.msra.mxu0 %v940
  %942 = vmatprep.subr.mxu0 0.0
  %943 = vmatpush1.msra.mxu0 0.0
  %944 = vmatprep.subr.mxu0 0.0
  %945 = vmatpush1.msra.mxu0 0.0
  %946 = vmatprep.subr.mxu0 0.0
  %947 = vmatpush1.msra.mxu0 0.0
  %948 = vmatprep.subr.mxu0 0.0
  %949 = vmatpush1.msra.mxu0 0.0
  %950 = vmatprep.subr.mxu0 0.0
  %951 = vmatpush1.msra.mxu0 0.0
  %952 = vmatprep.subr.mxu0 0.0
  %953 = vmatpush1.msra.mxu0 0.0
  %954 = vmatprep.subr.mxu0 0.0
  %955 = vmatpush1.msra.mxu0 0.0
  %956 = vmatprep.subr.mxu0 0.0
  %957 = vmatpush1.msra.mxu0 0.0
  %958 = vmatprep.subr.mxu0 0.0
  %959 = vmatpush1.msra.mxu0 0.0
  %960 = vmatprep.subr.mxu0 0.0
  %961 = vmatpush1.msra.mxu0 0.0
  %962 = vmatprep.subr.mxu0 0.0
  %963 = vmatpush1.msra.mxu0 0.0
  %964 = vmatprep.subr.mxu0 0.0
  %965 = vmatpush1.msra.mxu0 0.0
  %966 = vmatprep.subr.mxu0 0.0
  %967 = vmatpush1.msra.mxu0 0.0
  %968 = vmatprep.subr.mxu0 0.0
  %969 = vmatpush1.msra.mxu0 0.0
  %970 = vmatprep.subr.mxu0 0.0
  %971 = vmatpush1.msra.mxu0 0.0
  %972 = vmatprep.subr.mxu0 0.0
  %973 = vmatpush1.msra.mxu0 0.0
  %974 = vmatprep.subr.mxu0 0.0
  %975 = vmatpush1.msra.mxu0 0.0
  %976 = vmatprep.subr.mxu0 0.0
  %977 = vmatpush1.msra.mxu0 0.0
  %978 = vmatprep.subr.mxu0 0.0
  %979 = vmatpush1.msra.mxu0 0.0
  %980 = vmatprep.subr.mxu0 0.0
  %981 = vmatpush1.msra.mxu0 0.0
  %982 = vmatprep.subr.mxu0 0.0
  %983 = vmatpush1.msra.mxu0 0.0
  %984 = vmatprep.subr.mxu0 0.0
  %985 = vmatpush1.msra.mxu0 0.0
  %986 = vmatprep.subr.mxu0 0.0
  %987 = vmatpush1.msra.mxu0 0.0
  %988 = vmatprep.subr.mxu0 0.0
  %989 = vmatpush1.msra.mxu0 0.0
  %990 = vmatprep.subr.mxu0 0.0
  %991 = vmatpush1.msra.mxu0 0.0
  %992 = vmatprep.subr.mxu0 0.0
  %993 = vmatpush1.msra.mxu0 0.0
  %994 = vmatprep.subr.mxu0 0.0
  %995 = vmatpush1.msra.mxu0 0.0
  %996 = vmatprep.mubr.f32.mxu0 0.0
  %v997 = vand.u32 %v37, 4294901760
  %v998 = vsub.f32 %v37, %v997
  %v999 = vand.u32 %v998, 4294901760
  %1000 = vmatmul.mubr.f32.gmra.mrb[0].mxu0 %v999
  %v1001 = vpop.f32.mrb[0].mxu0
  %v1002 = vadd.f32 %v918, %v1001
  %v1003 = vpop.f32.mrb[0].mxu0
  %v1004 = vadd.f32 %v920, %v1003
  %1005 = vdwg.mxu0
  %v1006 = vand.u32 %v18, 4294901760
  %v1007 = vsub.f32 %v18, %v1006
  %v1008 = vand.u32 %v1007, 4294901760
  %1009 = vmatprep.subr.mxu0 %v1008
  %v1010 = vand.u32 %v17, 4294901760
  %v1011 = vsub.f32 %v17, %v1010
  %v1012 = vand.u32 %v1011, 4294901760
  %1013 = vmatpush1.msra.mxu0 %v1012
  %v1014 = vand.u32 %v22, 4294901760
  %v1015 = vsub.f32 %v22, %v1014
  %v1016 = vand.u32 %v1015, 4294901760
  %1017 = vmatprep.subr.mxu0 %v1016
  %v1018 = vand.u32 %v21, 4294901760
  %v1019 = vsub.f32 %v21, %v1018
  %v1020 = vand.u32 %v1019, 4294901760
  %1021 = vmatpush1.msra.mxu0 %v1020
  %v1022 = vand.u32 %v26, 4294901760
  %v1023 = vsub.f32 %v26, %v1022
  %v1024 = vand.u32 %v1023, 4294901760
  %1025 = vmatprep.subr.mxu0 %v1024
  %v1026 = vand.u32 %v25, 4294901760
  %v1027 = vsub.f32 %v25, %v1026
  %v1028 = vand.u32 %v1027, 4294901760
  %1029 = vmatpush1.msra.mxu0 %v1028
  %v1030 = vand.u32 %v30, 4294901760
  %v1031 = vsub.f32 %v30, %v1030
  %v1032 = vand.u32 %v1031, 4294901760
  %1033 = vmatprep.subr.mxu0 %v1032
  %v1034 = vand.u32 %v29, 4294901760
  %v1035 = vsub.f32 %v29, %v1034
  %v1036 = vand.u32 %v1035, 4294901760
  %1037 = vmatpush1.msra.mxu0 %v1036
  %v1038 = vand.u32 %v50, 4294901760
  %v1039 = vsub.f32 %v50, %v1038
  %v1040 = vand.u32 %v1039, 4294901760
  %1041 = vmatprep.subr.mxu0 %v1040
  %v1042 = vand.u32 %v47, 4294901760
  %v1043 = vsub.f32 %v47, %v1042
  %v1044 = vand.u32 %v1043, 4294901760
  %1045 = vmatpush1.msra.mxu0 %v1044
  %1046 = vmatprep.subr.mxu0 0.0
  %1047 = vmatpush1.msra.mxu0 0.0
  %1048 = vmatprep.subr.mxu0 0.0
  %1049 = vmatpush1.msra.mxu0 0.0
  %1050 = vmatprep.subr.mxu0 0.0
  %1051 = vmatpush1.msra.mxu0 0.0
  %1052 = vmatprep.subr.mxu0 0.0
  %1053 = vmatpush1.msra.mxu0 0.0
  %1054 = vmatprep.subr.mxu0 0.0
  %1055 = vmatpush1.msra.mxu0 0.0
  %1056 = vmatprep.subr.mxu0 0.0
  %1057 = vmatpush1.msra.mxu0 0.0
  %1058 = vmatprep.subr.mxu0 0.0
  %1059 = vmatpush1.msra.mxu0 0.0
  %1060 = vmatprep.subr.mxu0 0.0
  %1061 = vmatpush1.msra.mxu0 0.0
  %1062 = vmatprep.subr.mxu0 0.0
  %1063 = vmatpush1.msra.mxu0 0.0
  %1064 = vmatprep.subr.mxu0 0.0
  %1065 = vmatpush1.msra.mxu0 0.0
  %1066 = vmatprep.subr.mxu0 0.0
  %1067 = vmatpush1.msra.mxu0 0.0
  %1068 = vmatprep.subr.mxu0 0.0
  %1069 = vmatpush1.msra.mxu0 0.0
  %1070 = vmatprep.subr.mxu0 0.0
  %1071 = vmatpush1.msra.mxu0 0.0
  %1072 = vmatprep.subr.mxu0 0.0
  %1073 = vmatpush1.msra.mxu0 0.0
  %1074 = vmatprep.subr.mxu0 0.0
  %1075 = vmatpush1.msra.mxu0 0.0
  %1076 = vmatprep.subr.mxu0 0.0
  %1077 = vmatpush1.msra.mxu0 0.0
  %1078 = vmatprep.subr.mxu0 0.0
  %1079 = vmatpush1.msra.mxu0 0.0
  %1080 = vmatprep.subr.mxu0 0.0
  %1081 = vmatpush1.msra.mxu0 0.0
  %1082 = vmatprep.subr.mxu0 0.0
  %1083 = vmatpush1.msra.mxu0 0.0
  %1084 = vmatprep.subr.mxu0 0.0
  %1085 = vmatpush1.msra.mxu0 0.0
  %1086 = vmatprep.subr.mxu0 0.0
  %1087 = vmatpush1.msra.mxu0 0.0
  %1088 = vmatprep.subr.mxu0 0.0
  %1089 = vmatpush1.msra.mxu0 0.0
  %1090 = vmatprep.subr.mxu0 0.0
  %1091 = vmatpush1.msra.mxu0 0.0
  %1092 = vmatprep.subr.mxu0 0.0
  %1093 = vmatpush1.msra.mxu0 0.0
  %1094 = vmatprep.subr.mxu0 0.0
  %1095 = vmatpush1.msra.mxu0 0.0
  %1096 = vmatprep.subr.mxu0 0.0
  %1097 = vmatpush1.msra.mxu0 0.0
  %1098 = vmatprep.subr.mxu0 0.0
  %1099 = vmatpush1.msra.mxu0 0.0
  %1100 = vmatprep.mubr.f32.mxu0 0.0
  %v1101 = vand.u32 %v37, 4294901760
  %1102 = vmatmul.mubr.f32.gmra.mrb[0].mxu0 %v1101
  %v1103 = vpop.f32.mrb[0].mxu0
  %v1104 = vadd.f32 %v1002, %v1103
  %v1105 = vpop.f32.mrb[0].mxu0
  %v1106 = vadd.f32 %v1004, %v1105
  %1107 = vdwg.mxu0
  %v1108 = vand.u32 %v18, 4294901760
  %1109 = vmatprep.subr.mxu0 %v1108
  %v1110 = vand.u32 %v17, 4294901760
  %1111 = vmatpush1.msra.mxu0 %v1110
  %v1112 = vand.u32 %v22, 4294901760
  %1113 = vmatprep.subr.mxu0 %v1112
  %v1114 = vand.u32 %v21, 4294901760
  %1115 = vmatpush1.msra.mxu0 %v1114
  %v1116 = vand.u32 %v26, 4294901760
  %1117 = vmatprep.subr.mxu0 %v1116
  %v1118 = vand.u32 %v25, 4294901760
  %1119 = vmatpush1.msra.mxu0 %v1118
  %v1120 = vand.u32 %v30, 4294901760
  %1121 = vmatprep.subr.mxu0 %v1120
  %v1122 = vand.u32 %v29, 4294901760
  %1123 = vmatpush1.msra.mxu0 %v1122
  %v1124 = vand.u32 %v50, 4294901760
  %1125 = vmatprep.subr.mxu0 %v1124
  %v1126 = vand.u32 %v47, 4294901760
  %1127 = vmatpush1.msra.mxu0 %v1126
  %1128 = vmatprep.subr.mxu0 0.0
  %1129 = vmatpush1.msra.mxu0 0.0
  %1130 = vmatprep.subr.mxu0 0.0
  %1131 = vmatpush1.msra.mxu0 0.0
  %1132 = vmatprep.subr.mxu0 0.0
  %1133 = vmatpush1.msra.mxu0 0.0
  %1134 = vmatprep.subr.mxu0 0.0
  %1135 = vmatpush1.msra.mxu0 0.0
  %1136 = vmatprep.subr.mxu0 0.0
  %1137 = vmatpush1.msra.mxu0 0.0
  %1138 = vmatprep.subr.mxu0 0.0
  %1139 = vmatpush1.msra.mxu0 0.0
  %1140 = vmatprep.subr.mxu0 0.0
  %1141 = vmatpush1.msra.mxu0 0.0
  %1142 = vmatprep.subr.mxu0 0.0
  %1143 = vmatpush1.msra.mxu0 0.0
  %1144 = vmatprep.subr.mxu0 0.0
  %1145 = vmatpush1.msra.mxu0 0.0
  %1146 = vmatprep.subr.mxu0 0.0
  %1147 = vmatpush1.msra.mxu0 0.0
  %1148 = vmatprep.subr.mxu0 0.0
  %1149 = vmatpush1.msra.mxu0 0.0
  %1150 = vmatprep.subr.mxu0 0.0
  %1151 = vmatpush1.msra.mxu0 0.0
  %1152 = vmatprep.subr.mxu0 0.0
  %1153 = vmatpush1.msra.mxu0 0.0
  %1154 = vmatprep.subr.mxu0 0.0
  %1155 = vmatpush1.msra.mxu0 0.0
  %1156 = vmatprep.subr.mxu0 0.0
  %1157 = vmatpush1.msra.mxu0 0.0
  %1158 = vmatprep.subr.mxu0 0.0
  %1159 = vmatpush1.msra.mxu0 0.0
  %1160 = vmatprep.subr.mxu0 0.0
  %1161 = vmatpush1.msra.mxu0 0.0
  %1162 = vmatprep.subr.mxu0 0.0
  %1163 = vmatpush1.msra.mxu0 0.0
  %1164 = vmatprep.subr.mxu0 0.0
  %1165 = vmatpush1.msra.mxu0 0.0
  %1166 = vmatprep.subr.mxu0 0.0
  %1167 = vmatpush1.msra.mxu0 0.0
  %1168 = vmatprep.subr.mxu0 0.0
  %1169 = vmatpush1.msra.mxu0 0.0
  %1170 = vmatprep.subr.mxu0 0.0
  %1171 = vmatpush1.msra.mxu0 0.0
  %1172 = vmatprep.subr.mxu0 0.0
  %1173 = vmatpush1.msra.mxu0 0.0
  %1174 = vmatprep.subr.mxu0 0.0
  %1175 = vmatpush1.msra.mxu0 0.0
  %1176 = vmatprep.subr.mxu0 0.0
  %1177 = vmatpush1.msra.mxu0 0.0
  %1178 = vmatprep.subr.mxu0 0.0
  %1179 = vmatpush1.msra.mxu0 0.0
  %1180 = vmatprep.subr.mxu0 0.0
  %1181 = vmatpush1.msra.mxu0 0.0
  %1182 = vmatprep.mubr.f32.mxu0 0.0
  %v1183 = vand.u32 %v37, 4294901760
  %1184 = vmatmul.mubr.f32.gmra.mrb[0].mxu0 %v1183
  %v1185 = vpop.f32.mrb[0].mxu0
  %v1186 = vadd.f32 %v1104, %v1185
  %v1187 = vpop.f32.mrb[0].mxu0
  %v1188 = vadd.f32 %v1106, %v1187
  %1189 = vdwg.mxu0
  %1190 = vst [vmem:[%s2] sm:$0xff] %v617
  %1191 = vst [vmem:[%s2 + $0x8] sm:$0xff] %v619
  %1192 = vst [vmem:[%s2 + $0x10] sm:$0xff] %v1186
  %1193 = vst [vmem:[%s2 + $0x18] sm:$0xff] %v1188
  %v1194 = vadd.f32 %v617, %v619
  %v1195 = vadd.f32 %v1194, %v1186
  %v1196 = vadd.f32 %v1195, %v1188
  %1197 = vadd.xlane.f32.xlu0 %v1196
  %v1198 = vpop.xlane.xlu0 %1197
  %vm1199 = vcmask 7168
  %1200 = vst.msk [vmem:[%s3] sm:$0xff] %vm1199, %v1198
  %v1201 = vmul.f32 %v617, %v617
  %v1202 = vmul.f32 %v619, %v619
  %v1203 = vmul.f32 %v1186, %v1186
  %v1204 = vmul.f32 %v1188, %v1188
  %v1205 = vadd.f32 %v1201, %v1202
  %v1206 = vadd.f32 %v1205, %v1203
  %v1207 = vadd.f32 %v1206, %v1204
  %1208 = vadd.xlane.f32.xlu0 %v1207
  %v1209 = vpop.xlane.xlu0 %1208
  %1210 = vst.msk [vmem:[%s4] sm:$0xff] %vm1199, %v1209
  // Predicated region
  $region10: #{pua_forward.8} parent=0 // pred_check
    _
  $region11: #{pua_forward.8} parent=0 // pred_check_branch
    %1212 = sbr.rel (0) target = $region13
  $region12: #{pua_forward.8} parent=0 // pred_region
    _
  $region13: #{pua_forward.8} parent=0 // pred_fallthru
    _
  // Predicated region
  $region14: #{pua_forward.8} parent=0 // pred_check
    _
  $region15: #{pua_forward.8} parent=0 // pred_check_branch
    %1214 = sbr.rel (0) target = $region17
  $region16: #{pua_forward.8} parent=0 // pred_region
    _
  $region17: #{pua_forward.8} parent=0 // pred_fallthru
    _
  // Predicated region
  $region18: #{pua_forward.8} parent=0 // pred_check
    _
  $region19: #{pua_forward.8} parent=0 // pred_check_branch
    %1216 = sbr.rel (0) target = $region21
  $region20: #{pua_forward.8} parent=0 // pred_region
    _
  $region21: #{pua_forward.8} parent=0 // pred_fallthru
    _
  // Predicated region
  $region22: #{pua_forward.8} parent=0 // pred_check
    _
  $region23: #{pua_forward.8} parent=0 // pred_check_branch
    %1218 = sbr.rel (0) target = $region25
  $region24: #{pua_forward.8} parent=0 // pred_region
    _
  $region25: #{pua_forward.8} parent=0 // pred_fallthru
    _
  // Predicated region
  $region26: #{pua_forward.8} parent=0 // pred_check
    _
  $region27: #{pua_forward.8} parent=0 // pred_check_branch
    %1220 = sbr.rel (0) target = $region29
  $region28: #{pua_forward.8} parent=0 // pred_region
    _
  $region29: #{pua_forward.8} parent=0 // pred_fallthru
    _
  // Predicated region
  $region30: #{pua_forward.8} parent=0 // pred_check
    _
  $region31: #{pua_forward.8} parent=0 // pred_check_branch
    %1222 = sbr.rel (0) target = $region33
  $region32: #{pua_forward.8} parent=0 // pred_region
    _
  $region33: #{pua_forward.8} parent=0 // pred_fallthru
    _

// kernel: pua_forward.10
$region0: #{pua_forward.10}
  #allocation0 [shape = 'u32[]', space=smem, size = 0x4, offset = 0x4, fixed_abs, tag = 'smem constant byte address 0x4 - core index']
  #allocation1 [shape = 'u32[144,128]{1,0:T(1,128)}', space=vmem, size = 0x12000, scoped, tag = 'internal scratch']
  %s0 = inlined_call_operand.vmem [shape: f32[4,72], index: 0, kind: input, shape index: {}]
  %s1 = inlined_call_operand.vmem [shape: f32[72,128], index: 1, kind: input, shape index: {}]
  %s2 = inlined_call_operand.vmem [shape: f32[4,128], index: 2, kind: output, shape index: {0}]
  %s3 = inlined_call_operand.vmem [shape: f32[1,4,1], index: 3, kind: output, shape index: {1}]
  %s4 = inlined_call_operand.vmem [shape: f32[1,4,1], index: 4, kind: output, shape index: {2}]
  %5 = xla_tuple %s2, %s3, %s4
  %s6 = sld [smem:[#allocation0]]
  $region34: #{pua_forward.10} parent=0
    _
  %s8 = ssub.s32 1, %s6
  %s9 = scalar_select 0, %s8, %s6
  // Predicated region
  $region2: #{pua_forward.10} parent=0 // pred_check
    _
  $region3: #{pua_forward.10} parent=0 // pred_check_branch
    %11 = sbr.rel (0) target = $region5
  $region4: #{pua_forward.10} parent=0 // pred_region
    _
  $region5: #{pua_forward.10} parent=0 // pred_fallthru
    _
  // Predicated region
  $region6: #{pua_forward.10} parent=0 // pred_check
    _
  $region7: #{pua_forward.10} parent=0 // pred_check_branch
    %13 = sbr.rel (0) target = $region9
  $region8: #{pua_forward.10} parent=0 // pred_region
    _
  $region9: #{pua_forward.10} parent=0 // pred_fallthru
    _
  %v14 = vld [vmem:[%s0] sm:$0xf]
  %v15 = vld [vmem:[%s1] sm:$0xff]
  %v16 = vld [vmem:[%s1 + $0x8] sm:$0xff]
  %v17 = vld [vmem:[%s1 + $0x10] sm:$0xff]
  %v18 = vld [vmem:[%s1 + $0x18] sm:$0xff]
  %v19 = vld [vmem:[%s1 + $0x20] sm:$0xff]
  %v20 = vld [vmem:[%s1 + $0x28] sm:$0xff]
  %v21 = vld [vmem:[%s1 + $0x30] sm:$0xff]
  %v22 = vld [vmem:[%s1 + $0x38] sm:$0xff]
  %v23 = vld [vmem:[%s1 + $0x40] sm:$0xff]
  %vm24 = vcmask 588800
  %v26 = vsel %vm24, %v14, 0
  %28 = vmatprep.subr.mxu0 0.0
  %v29 = vand.u32 %v15, 4294901760
  %30 = vmatpush1.msra.mxu0 %v29
  %31 = vmatprep.subr.mxu0 0.0
  %v32 = vand.u32 %v16, 4294901760
  %33 = vmatpush1.msra.mxu0 %v32
  %34 = vmatprep.subr.mxu0 0.0
  %v35 = vand.u32 %v17, 4294901760
  %36 = vmatpush1.msra.mxu0 %v35
  %37 = vmatprep.subr.mxu0 0.0
  %v38 = vand.u32 %v18, 4294901760
  %39 = vmatpush1.msra.mxu0 %v38
  %40 = vmatprep.subr.mxu0 0.0
  %v41 = vand.u32 %v19, 4294901760
  %42 = vmatpush1.msra.mxu0 %v41
  %43 = vmatprep.subr.mxu0 0.0
  %v44 = vand.u32 %v20, 4294901760
  %45 = vmatpush1.msra.mxu0 %v44
  %46 = vmatprep.subr.mxu0 0.0
  %v47 = vand.u32 %v21, 4294901760
  %48 = vmatpush1.msra.mxu0 %v47
  %49 = vmatprep.subr.mxu0 0.0
  %v50 = vand.u32 %v22, 4294901760
  %51 = vmatpush1.msra.mxu0 %v50
  %52 = vmatprep.subr.mxu0 0.0
  %v53 = vand.u32 %v23, 4294901760
  %54 = vmatpush1.msra.mxu0 %v53
  %55 = vmatprep.subr.mxu0 0.0
  %56 = vmatpush1.msra.mxu0 0.0
  %57 = vmatprep.subr.mxu0 0.0
  %58 = vmatpush1.msra.mxu0 0.0
  %59 = vmatprep.subr.mxu0 0.0
  %60 = vmatpush1.msra.mxu0 0.0
  %61 = vmatprep.subr.mxu0 0.0
  %62 = vmatpush1.msra.mxu0 0.0
  %63 = vmatprep.subr.mxu0 0.0
  %64 = vmatpush1.msra.mxu0 0.0
  %65 = vmatprep.subr.mxu0 0.0
  %66 = vmatpush1.msra.mxu0 0.0
  %67 = vmatprep.subr.mxu0 0.0
  %68 = vmatpush1.msra.mxu0 0.0
  %69 = vmatprep.subr.mxu0 0.0
  %70 = vmatpush1.msra.mxu0 0.0
  %71 = vmatprep.subr.mxu0 0.0
  %72 = vmatpush1.msra.mxu0 0.0
  %73 = vmatprep.subr.mxu0 0.0
  %74 = vmatpush1.msra.mxu0 0.0
  %75 = vmatprep.subr.mxu0 0.0
  %76 = vmatpush1.msra.mxu0 0.0
  %77 = vmatprep.subr.mxu0 0.0
  %78 = vmatpush1.msra.mxu0 0.0
  %79 = vmatprep.subr.mxu0 0.0
  %80 = vmatpush1.msra.mxu0 0.0
  %81 = vmatprep.subr.mxu0 0.0
  %82 = vmatpush1.msra.mxu0 0.0
  %83 = vmatprep.subr.mxu0 0.0
  %84 = vmatpush1.msra.mxu0 0.0
  %85 = vmatprep.subr.mxu0 0.0
  %86 = vmatpush1.msra.mxu0 0.0
  %87 = vmatprep.subr.mxu0 0.0
  %88 = vmatpush1.msra.mxu0 0.0
  %89 = vmatprep.subr.mxu0 0.0
  %90 = vmatpush1.msra.mxu0 0.0
  %91 = vmatprep.subr.mxu0 0.0
  %92 = vmatpush1.msra.mxu0 0.0
  %93 = vmatprep.subr.mxu0 0.0
  %94 = vmatpush1.msra.mxu0 0.0
  %95 = vmatprep.subr.mxu0 0.0
  %96 = vmatpush1.msra.mxu0 0.0
  %97 = vmatprep.subr.mxu0 0.0
  %98 = vmatpush1.msra.mxu0 0.0
  %99 = vmatprep.subr.mxu0 0.0
  %100 = vmatpush1.msra.mxu0 0.0
  %101 = vmatprep.mubr.f32.mxu0 0.0
  %v102 = vand.u32 %v26, 4294901760
  %v103 = vsub.f32 %v26, %v102
  %v104 = vand.u32 %v103, 4294901760
  %v105 = vsub.f32 %v103, %v104
  %v106 = vand.u32 %v105, 4294901760
  %107 = vmatmul.mubr.f32.gmra.mrb[0].mxu0 %v106
  %v108 = vpop.f32.mrb[0].mxu0
  %v109 = vadd.f32 0.0, %v108
  %v110 = vpop.f32.mrb[0].mxu0
  %111 = vdwg.mxu0
  %112 = vmatprep.subr.mxu0 0.0
  %v113 = vand.u32 %v15, 4294901760
  %v114 = vsub.f32 %v15, %v113
  %v115 = vand.u32 %v114, 4294901760
  %v116 = vsub.f32 %v114, %v115
  %v117 = vand.u32 %v116, 4294901760
  %118 = vmatpush1.msra.mxu0 %v117
  %119 = vmatprep.subr.mxu0 0.0
  %v120 = vand.u32 %v16, 4294901760
  %v121 = vsub.f32 %v16, %v120
  %v122 = vand.u32 %v121, 4294901760
  %v123 = vsub.f32 %v121, %v122
  %v124 = vand.u32 %v123, 4294901760
  %125 = vmatpush1.msra.mxu0 %v124
  %126 = vmatprep.subr.mxu0 0.0
  %v127 = vand.u32 %v17, 4294901760
  %v128 = vsub.f32 %v17, %v127
  %v129 = vand.u32 %v128, 4294901760
  %v130 = vsub.f32 %v128, %v129
  %v131 = vand.u32 %v130, 4294901760
  %132 = vmatpush1.msra.mxu0 %v131
  %133 = vmatprep.subr.mxu0 0.0
  %v134 = vand.u32 %v18, 4294901760
  %v135 = vsub.f32 %v18, %v134
  %v136 = vand.u32 %v135, 4294901760
  %v137 = vsub.f32 %v135, %v136
  %v138 = vand.u32 %v137, 4294901760
  %139 = vmatpush1.msra.mxu0 %v138
  %140 = vmatprep.subr.mxu0 0.0
  %v141 = vand.u32 %v19, 4294901760
  %v142 = vsub.f32 %v19, %v141
  %v143 = vand.u32 %v142, 4294901760
  %v144 = vsub.f32 %v142, %v143
  %v145 = vand.u32 %v144, 4294901760
  %146 = vmatpush1.msra.mxu0 %v145
  %147 = vmatprep.subr.mxu0 0.0
  %v148 = vand.u32 %v20, 4294901760
  %v149 = vsub.f32 %v20, %v148
  %v150 = vand.u32 %v149, 4294901760
  %v151 = vsub.f32 %v149, %v150
  %v152 = vand.u32 %v151, 4294901760
  %153 = vmatpush1.msra.mxu0 %v152
  %154 = vmatprep.subr.mxu0 0.0
  %v155 = vand.u32 %v21, 4294901760
  %v156 = vsub.f32 %v21, %v155
  %v157 = vand.u32 %v156, 4294901760
  %v158 = vsub.f32 %v156, %v157
  %v159 = vand.u32 %v158, 4294901760
  %160 = vmatpush1.msra.mxu0 %v159
  %161 = vmatprep.subr.mxu0 0.0
  %v162 = vand.u32 %v22, 4294901760
  %v163 = vsub.f32 %v22, %v162
  %v164 = vand.u32 %v163, 4294901760
  %v165 = vsub.f32 %v163, %v164
  %v166 = vand.u32 %v165, 4294901760
  %167 = vmatpush1.msra.mxu0 %v166
  %168 = vmatprep.subr.mxu0 0.0
  %v169 = vand.u32 %v23, 4294901760
  %v170 = vsub.f32 %v23, %v169
  %v171 = vand.u32 %v170, 4294901760
  %v172 = vsub.f32 %v170, %v171
  %v173 = vand.u32 %v172, 4294901760
  %174 = vmatpush1.msra.mxu0 %v173
  %175 = vmatprep.subr.mxu0 0.0
  %176 = vmatpush1.msra.mxu0 0.0
  %177 = vmatprep.subr.mxu0 0.0
  %178 = vmatpush1.msra.mxu0 0.0
  %179 = vmatprep.subr.mxu0 0.0
  %180 = vmatpush1.msra.mxu0 0.0
  %181 = vmatprep.subr.mxu0 0.0
  %182 = vmatpush1.msra.mxu0 0.0
  %183 = vmatprep.subr.mxu0 0.0
  %184 = vmatpush1.msra.mxu0 0.0
  %185 = vmatprep.subr.mxu0 0.0
  %186 = vmatpush1.msra.mxu0 0.0
  %187 = vmatprep.subr.mxu0 0.0
  %188 = vmatpush1.msra.mxu0 0.0
  %189 = vmatprep.subr.mxu0 0.0
  %190 = vmatpush1.msra.mxu0 0.0
  %191 = vmatprep.subr.mxu0 0.0
  %192 = vmatpush1.msra.mxu0 0.0
  %193 = vmatprep.subr.mxu0 0.0
  %194 = vmatpush1.msra.mxu0 0.0
  %195 = vmatprep.subr.mxu0 0.0
  %196 = vmatpush1.msra.mxu0 0.0
  %197 = vmatprep.subr.mxu0 0.0
  %198 = vmatpush1.msra.mxu0 0.0
  %199 = vmatprep.subr.mxu0 0.0
  %200 = vmatpush1.msra.mxu0 0.0
  %201 = vmatprep.subr.mxu0 0.0
  %202 = vmatpush1.msra.mxu0 0.0
  %203 = vmatprep.subr.mxu0 0.0
  %204 = vmatpush1.msra.mxu0 0.0
  %205 = vmatprep.subr.mxu0 0.0
  %206 = vmatpush1.msra.mxu0 0.0
  %207 = vmatprep.subr.mxu0 0.0
  %208 = vmatpush1.msra.mxu0 0.0
  %209 = vmatprep.subr.mxu0 0.0
  %210 = vmatpush1.msra.mxu0 0.0
  %211 = vmatprep.subr.mxu0 0.0
  %212 = vmatpush1.msra.mxu0 0.0
  %213 = vmatprep.subr.mxu0 0.0
  %214 = vmatpush1.msra.mxu0 0.0
  %215 = vmatprep.subr.mxu0 0.0
  %216 = vmatpush1.msra.mxu0 0.0
  %217 = vmatprep.subr.mxu0 0.0
  %218 = vmatpush1.msra.mxu0 0.0
  %219 = vmatprep.subr.mxu0 0.0
  %220 = vmatpush1.msra.mxu0 0.0
  %221 = vmatprep.mubr.f32.mxu0 0.0
  %v222 = vand.u32 %v26, 4294901760
  %223 = vmatmul.mubr.f32.gmra.mrb[0].mxu0 %v222
  %v224 = vpop.f32.mrb[0].mxu0
  %v225 = vadd.f32 %v109, %v224
  %v226 = vpop.f32.mrb[0].mxu0
  %227 = vdwg.mxu0
  %228 = vmatprep.subr.mxu0 0.0
  %v229 = vand.u32 %v15, 4294901760
  %v230 = vsub.f32 %v15, %v229
  %231 = vmatpush1.msra.mxu0 %v230
  %232 = vmatprep.subr.mxu0 0.0
  %v233 = vand.u32 %v16, 4294901760
  %v234 = vsub.f32 %v16, %v233
  %235 = vmatpush1.msra.mxu0 %v234
  %236 = vmatprep.subr.mxu0 0.0
  %v237 = vand.u32 %v17, 4294901760
  %v238 = vsub.f32 %v17, %v237
  %239 = vmatpush1.msra.mxu0 %v238
  %240 = vmatprep.subr.mxu0 0.0
  %v241 = vand.u32 %v18, 4294901760
  %v242 = vsub.f32 %v18, %v241
  %243 = vmatpush1.msra.mxu0 %v242
  %244 = vmatprep.subr.mxu0 0.0
  %v245 = vand.u32 %v19, 4294901760
  %v246 = vsub.f32 %v19, %v245
  %247 = vmatpush1.msra.mxu0 %v246
  %248 = vmatprep.subr.mxu0 0.0
  %v249 = vand.u32 %v20, 4294901760
  %v250 = vsub.f32 %v20, %v249
  %251 = vmatpush1.msra.mxu0 %v250
  %252 = vmatprep.subr.mxu0 0.0
  %v253 = vand.u32 %v21, 4294901760
  %v254 = vsub.f32 %v21, %v253
  %255 = vmatpush1.msra.mxu0 %v254
  %256 = vmatprep.subr.mxu0 0.0
  %v257 = vand.u32 %v22, 4294901760
  %v258 = vsub.f32 %v22, %v257
  %259 = vmatpush1.msra.mxu0 %v258
  %260 = vmatprep.subr.mxu0 0.0
  %v261 = vand.u32 %v23, 4294901760
  %v262 = vsub.f32 %v23, %v261
  %263 = vmatpush1.msra.mxu0 %v262
  %264 = vmatprep.subr.mxu0 0.0
  %265 = vmatpush1.msra.mxu0 0.0
  %266 = vmatprep.subr.mxu0 0.0
  %267 = vmatpush1.msra.mxu0 0.0
  %268 = vmatprep.subr.mxu0 0.0
  %269 = vmatpush1.msra.mxu0 0.0
  %270 = vmatprep.subr.mxu0 0.0
  %271 = vmatpush1.msra.mxu0 0.0
  %272 = vmatprep.subr.mxu0 0.0
  %273 = vmatpush1.msra.mxu0 0.0
  %274 = vmatprep.subr.mxu0 0.0
  %275 = vmatpush1.msra.mxu0 0.0
  %276 = vmatprep.subr.mxu0 0.0
  %277 = vmatpush1.msra.mxu0 0.0
  %278 = vmatprep.subr.mxu0 0.0
  %279 = vmatpush1.msra.mxu0 0.0
  %280 = vmatprep.subr.mxu0 0.0
  %281 = vmatpush1.msra.mxu0 0.0
  %282 = vmatprep.subr.mxu0 0.0
  %283 = vmatpush1.msra.mxu0 0.0
  %284 = vmatprep.subr.mxu0 0.0
  %285 = vmatpush1.msra.mxu0 0.0
  %286 = vmatprep.subr.mxu0 0.0
  %287 = vmatpush1.msra.mxu0 0.0
  %288 = vmatprep.subr.mxu0 0.0
  %289 = vmatpush1.msra.mxu0 0.0
  %290 = vmatprep.subr.mxu0 0.0
  %291 = vmatpush1.msra.mxu0 0.0
  %292 = vmatprep.subr.mxu0 0.0
  %293 = vmatpush1.msra.mxu0 0.0
  %294 = vmatprep.subr.mxu0 0.0
  %295 = vmatpush1.msra.mxu0 0.0
  %296 = vmatprep.subr.mxu0 0.0
  %297 = vmatpush1.msra.mxu0 0.0
  %298 = vmatprep.subr.mxu0 0.0
  %299 = vmatpush1.msra.mxu0 0.0
  %300 = vmatprep.subr.mxu0 0.0
  %301 = vmatpush1.msra.mxu0 0.0
  %302 = vmatprep.subr.mxu0 0.0
  %303 = vmatpush1.msra.mxu0 0.0
  %304 = vmatprep.subr.mxu0 0.0
  %305 = vmatpush1.msra.mxu0 0.0
  %306 = vmatprep.subr.mxu0 0.0
  %307 = vmatpush1.msra.mxu0 0.0
  %308 = vmatprep.subr.mxu0 0.0
  %309 = vmatpush1.msra.mxu0 0.0
  %310 = vmatprep.mubr.f32.mxu0 0.0
  %v311 = vand.u32 %v26, 4294901760
  %v312 = vsub.f32 %v26, %v311
  %313 = vmatmul.mubr.f32.gmra.mrb[0].mxu0 %v312
  %v314 = vpop.f32.mrb[0].mxu0
  %v315 = vadd.f32 %v225, %v314
  %v316 = vpop.f32.mrb[0].mxu0
  %317 = vdwg.mxu0
  %318 = vmatprep.subr.mxu0 0.0
  %v319 = vand.u32 %v15, 4294901760
  %320 = vmatpush1.msra.mxu0 %v319
  %321 = vmatprep.subr.mxu0 0.0
  %v322 = vand.u32 %v16, 4294901760
  %323 = vmatpush1.msra.mxu0 %v322
  %324 = vmatprep.subr.mxu0 0.0
  %v325 = vand.u32 %v17, 4294901760
  %326 = vmatpush1.msra.mxu0 %v325
  %327 = vmatprep.subr.mxu0 0.0
  %v328 = vand.u32 %v18, 4294901760
  %329 = vmatpush1.msra.mxu0 %v328
  %330 = vmatprep.subr.mxu0 0.0
  %v331 = vand.u32 %v19, 4294901760
  %332 = vmatpush1.msra.mxu0 %v331
  %333 = vmatprep.subr.mxu0 0.0
  %v334 = vand.u32 %v20, 4294901760
  %335 = vmatpush1.msra.mxu0 %v334
  %336 = vmatprep.subr.mxu0 0.0
  %v337 = vand.u32 %v21, 4294901760
  %338 = vmatpush1.msra.mxu0 %v337
  %339 = vmatprep.subr.mxu0 0.0
  %v340 = vand.u32 %v22, 4294901760
  %341 = vmatpush1.msra.mxu0 %v340
  %342 = vmatprep.subr.mxu0 0.0
  %v343 = vand.u32 %v23, 4294901760
  %344 = vmatpush1.msra.mxu0 %v343
  %345 = vmatprep.subr.mxu0 0.0
  %346 = vmatpush1.msra.mxu0 0.0
  %347 = vmatprep.subr.mxu0 0.0
  %348 = vmatpush1.msra.mxu0 0.0
  %349 = vmatprep.subr.mxu0 0.0
  %350 = vmatpush1.msra.mxu0 0.0
  %351 = vmatprep.subr.mxu0 0.0
  %352 = vmatpush1.msra.mxu0 0.0
  %353 = vmatprep.subr.mxu0 0.0
  %354 = vmatpush1.msra.mxu0 0.0
  %355 = vmatprep.subr.mxu0 0.0
  %356 = vmatpush1.msra.mxu0 0.0
  %357 = vmatprep.subr.mxu0 0.0
  %358 = vmatpush1.msra.mxu0 0.0
  %359 = vmatprep.subr.mxu0 0.0
  %360 = vmatpush1.msra.mxu0 0.0
  %361 = vmatprep.subr.mxu0 0.0
  %362 = vmatpush1.msra.mxu0 0.0
  %363 = vmatprep.subr.mxu0 0.0
  %364 = vmatpush1.msra.mxu0 0.0
  %365 = vmatprep.subr.mxu0 0.0
  %366 = vmatpush1.msra.mxu0 0.0
  %367 = vmatprep.subr.mxu0 0.0
  %368 = vmatpush1.msra.mxu0 0.0
  %369 = vmatprep.subr.mxu0 0.0
  %370 = vmatpush1.msra.mxu0 0.0
  %371 = vmatprep.subr.mxu0 0.0
  %372 = vmatpush1.msra.mxu0 0.0
  %373 = vmatprep.subr.mxu0 0.0
  %374 = vmatpush1.msra.mxu0 0.0
  %375 = vmatprep.subr.mxu0 0.0
  %376 = vmatpush1.msra.mxu0 0.0
  %377 = vmatprep.subr.mxu0 0.0
  %378 = vmatpush1.msra.mxu0 0.0
  %379 = vmatprep.subr.mxu0 0.0
  %380 = vmatpush1.msra.mxu0 0.0
  %381 = vmatprep.subr.mxu0 0.0
  %382 = vmatpush1.msra.mxu0 0.0
  %383 = vmatprep.subr.mxu0 0.0
  %384 = vmatpush1.msra.mxu0 0.0
  %385 = vmatprep.subr.mxu0 0.0
  %386 = vmatpush1.msra.mxu0 0.0
  %387 = vmatprep.subr.mxu0 0.0
  %388 = vmatpush1.msra.mxu0 0.0
  %389 = vmatprep.subr.mxu0 0.0
  %390 = vmatpush1.msra.mxu0 0.0
  %391 = vmatprep.mubr.f32.mxu0 0.0
  %v392 = vand.u32 %v26, 4294901760
  %v393 = vsub.f32 %v26, %v392
  %v394 = vand.u32 %v393, 4294901760
  %395 = vmatmul.mubr.f32.gmra.mrb[0].mxu0 %v394
  %v396 = vpop.f32.mrb[0].mxu0
  %v397 = vadd.f32 %v315, %v396
  %v398 = vpop.f32.mrb[0].mxu0
  %399 = vdwg.mxu0
  %400 = vmatprep.subr.mxu0 0.0
  %v401 = vand.u32 %v15, 4294901760
  %v402 = vsub.f32 %v15, %v401
  %v403 = vand.u32 %v402, 4294901760
  %404 = vmatpush1.msra.mxu0 %v403
  %405 = vmatprep.subr.mxu0 0.0
  %v406 = vand.u32 %v16, 4294901760
  %v407 = vsub.f32 %v16, %v406
  %v408 = vand.u32 %v407, 4294901760
  %409 = vmatpush1.msra.mxu0 %v408
  %410 = vmatprep.subr.mxu0 0.0
  %v411 = vand.u32 %v17, 4294901760
  %v412 = vsub.f32 %v17, %v411
  %v413 = vand.u32 %v412, 4294901760
  %414 = vmatpush1.msra.mxu0 %v413
  %415 = vmatprep.subr.mxu0 0.0
  %v416 = vand.u32 %v18, 4294901760
  %v417 = vsub.f32 %v18, %v416
  %v418 = vand.u32 %v417, 4294901760
  %419 = vmatpush1.msra.mxu0 %v418
  %420 = vmatprep.subr.mxu0 0.0
  %v421 = vand.u32 %v19, 4294901760
  %v422 = vsub.f32 %v19, %v421
  %v423 = vand.u32 %v422, 4294901760
  %424 = vmatpush1.msra.mxu0 %v423
  %425 = vmatprep.subr.mxu0 0.0
  %v426 = vand.u32 %v20, 4294901760
  %v427 = vsub.f32 %v20, %v426
  %v428 = vand.u32 %v427, 4294901760
  %429 = vmatpush1.msra.mxu0 %v428
  %430 = vmatprep.subr.mxu0 0.0
  %v431 = vand.u32 %v21, 4294901760
  %v432 = vsub.f32 %v21, %v431
  %v433 = vand.u32 %v432, 4294901760
  %434 = vmatpush1.msra.mxu0 %v433
  %435 = vmatprep.subr.mxu0 0.0
  %v436 = vand.u32 %v22, 4294901760
  %v437 = vsub.f32 %v22, %v436
  %v438 = vand.u32 %v437, 4294901760
  %439 = vmatpush1.msra.mxu0 %v438
  %440 = vmatprep.subr.mxu0 0.0
  %v441 = vand.u32 %v23, 4294901760
  %v442 = vsub.f32 %v23, %v441
  %v443 = vand.u32 %v442, 4294901760
  %444 = vmatpush1.msra.mxu0 %v443
  %445 = vmatprep.subr.mxu0 0.0
  %446 = vmatpush1.msra.mxu0 0.0
  %447 = vmatprep.subr.mxu0 0.0
  %448 = vmatpush1.msra.mxu0 0.0
  %449 = vmatprep.subr.mxu0 0.0
  %450 = vmatpush1.msra.mxu0 0.0
  %451 = vmatprep.subr.mxu0 0.0
  %452 = vmatpush1.msra.mxu0 0.0
  %453 = vmatprep.subr.mxu0 0.0
  %454 = vmatpush1.msra.mxu0 0.0
  %455 = vmatprep.subr.mxu0 0.0
  %456 = vmatpush1.msra.mxu0 0.0
  %457 = vmatprep.subr.mxu0 0.0
  %458 = vmatpush1.msra.mxu0 0.0
  %459 = vmatprep.subr.mxu0 0.0
  %460 = vmatpush1.msra.mxu0 0.0
  %461 = vmatprep.subr.mxu0 0.0
  %462 = vmatpush1.msra.mxu0 0.0
  %463 = vmatprep.subr.mxu0 0.0
  %464 = vmatpush1.msra.mxu0 0.0
  %465 = vmatprep.subr.mxu0 0.0
  %466 = vmatpush1.msra.mxu0 0.0
  %467 = vmatprep.subr.mxu0 0.0
  %468 = vmatpush1.msra.mxu0 0.0
  %469 = vmatprep.subr.mxu0 0.0
  %470 = vmatpush1.msra.mxu0 0.0
  %471 = vmatprep.subr.mxu0 0.0
  %472 = vmatpush1.msra.mxu0 0.0
  %473 = vmatprep.subr.mxu0 0.0
  %474 = vmatpush1.msra.mxu0 0.0
  %475 = vmatprep.subr.mxu0 0.0
  %476 = vmatpush1.msra.mxu0 0.0
  %477 = vmatprep.subr.mxu0 0.0
  %478 = vmatpush1.msra.mxu0 0.0
  %479 = vmatprep.subr.mxu0 0.0
  %480 = vmatpush1.msra.mxu0 0.0
  %481 = vmatprep.subr.mxu0 0.0
  %482 = vmatpush1.msra.mxu0 0.0
  %483 = vmatprep.subr.mxu0 0.0
  %484 = vmatpush1.msra.mxu0 0.0
  %485 = vmatprep.subr.mxu0 0.0
  %486 = vmatpush1.msra.mxu0 0.0
  %487 = vmatprep.subr.mxu0 0.0
  %488 = vmatpush1.msra.mxu0 0.0
  %489 = vmatprep.subr.mxu0 0.0
  %490 = vmatpush1.msra.mxu0 0.0
  %491 = vmatprep.mubr.f32.mxu0 0.0
  %v492 = vand.u32 %v26, 4294901760
  %493 = vmatmul.mubr.f32.gmra.mrb[0].mxu0 %v492
  %v494 = vpop.f32.mrb[0].mxu0
  %v495 = vadd.f32 %v397, %v494
  %v496 = vpop.f32.mrb[0].mxu0
  %497 = vdwg.mxu0
  %498 = vmatprep.subr.mxu0 0.0
  %v499 = vand.u32 %v15, 4294901760
  %500 = vmatpush1.msra.mxu0 %v499
  %501 = vmatprep.subr.mxu0 0.0
  %v502 = vand.u32 %v16, 4294901760
  %503 = vmatpush1.msra.mxu0 %v502
  %504 = vmatprep.subr.mxu0 0.0
  %v505 = vand.u32 %v17, 4294901760
  %506 = vmatpush1.msra.mxu0 %v505
  %507 = vmatprep.subr.mxu0 0.0
  %v508 = vand.u32 %v18, 4294901760
  %509 = vmatpush1.msra.mxu0 %v508
  %510 = vmatprep.subr.mxu0 0.0
  %v511 = vand.u32 %v19, 4294901760
  %512 = vmatpush1.msra.mxu0 %v511
  %513 = vmatprep.subr.mxu0 0.0
  %v514 = vand.u32 %v20, 4294901760
  %515 = vmatpush1.msra.mxu0 %v514
  %516 = vmatprep.subr.mxu0 0.0
  %v517 = vand.u32 %v21, 4294901760
  %518 = vmatpush1.msra.mxu0 %v517
  %519 = vmatprep.subr.mxu0 0.0
  %v520 = vand.u32 %v22, 4294901760
  %521 = vmatpush1.msra.mxu0 %v520
  %522 = vmatprep.subr.mxu0 0.0
  %v523 = vand.u32 %v23, 4294901760
  %524 = vmatpush1.msra.mxu0 %v523
  %525 = vmatprep.subr.mxu0 0.0
  %526 = vmatpush1.msra.mxu0 0.0
  %527 = vmatprep.subr.mxu0 0.0
  %528 = vmatpush1.msra.mxu0 0.0
  %529 = vmatprep.subr.mxu0 0.0
  %530 = vmatpush1.msra.mxu0 0.0
  %531 = vmatprep.subr.mxu0 0.0
  %532 = vmatpush1.msra.mxu0 0.0
  %533 = vmatprep.subr.mxu0 0.0
  %534 = vmatpush1.msra.mxu0 0.0
  %535 = vmatprep.subr.mxu0 0.0
  %536 = vmatpush1.msra.mxu0 0.0
  %537 = vmatprep.subr.mxu0 0.0
  %538 = vmatpush1.msra.mxu0 0.0
  %539 = vmatprep.subr.mxu0 0.0
  %540 = vmatpush1.msra.mxu0 0.0
  %541 = vmatprep.subr.mxu0 0.0
  %542 = vmatpush1.msra.mxu0 0.0
  %543 = vmatprep.subr.mxu0 0.0
  %544 = vmatpush1.msra.mxu0 0.0
  %545 = vmatprep.subr.mxu0 0.0
  %546 = vmatpush1.msra.mxu0 0.0
  %547 = vmatprep.subr.mxu0 0.0
  %548 = vmatpush1.msra.mxu0 0.0
  %549 = vmatprep.subr.mxu0 0.0
  %550 = vmatpush1.msra.mxu0 0.0
  %551 = vmatprep.subr.mxu0 0.0
  %552 = vmatpush1.msra.mxu0 0.0
  %553 = vmatprep.subr.mxu0 0.0
  %554 = vmatpush1.msra.mxu0 0.0
  %555 = vmatprep.subr.mxu0 0.0
  %556 = vmatpush1.msra.mxu0 0.0
  %557 = vmatprep.subr.mxu0 0.0
  %558 = vmatpush1.msra.mxu0 0.0
  %559 = vmatprep.subr.mxu0 0.0
  %560 = vmatpush1.msra.mxu0 0.0
  %561 = vmatprep.subr.mxu0 0.0
  %562 = vmatpush1.msra.mxu0 0.0
  %563 = vmatprep.subr.mxu0 0.0
  %564 = vmatpush1.msra.mxu0 0.0
  %565 = vmatprep.subr.mxu0 0.0
  %566 = vmatpush1.msra.mxu0 0.0
  %567 = vmatprep.subr.mxu0 0.0
  %568 = vmatpush1.msra.mxu0 0.0
  %569 = vmatprep.subr.mxu0 0.0
  %570 = vmatpush1.msra.mxu0 0.0
  %571 = vmatprep.mubr.f32.mxu0 0.0
  %v572 = vand.u32 %v26, 4294901760
  %573 = vmatmul.mubr.f32.gmra.mrb[0].mxu0 %v572
  %v574 = vpop.f32.mrb[0].mxu0
  %v575 = vadd.f32 %v495, %v574
  %v576 = vpop.f32.mrb[0].mxu0
  %577 = vdwg.mxu0
  %578 = vst [vmem:[%s2] sm:$0xf] %v575
  %vm579 = vcmask 1043456
  %v580 = vsel %vm579, %v575, 0.0
  %581 = vadd.xlane.f32.xlu0 %v580
  %v582 = vpop.xlane.xlu0 %581
  %vm583 = vcmask 3072
  %584 = vst.msk [vmem:[%s3] sm:$0xf] %vm583, %v582
  %v585 = vmul.f32 %v575, %v575
  %v586 = vsel %vm579, %v585, 0.0
  %587 = vadd.xlane.f32.xlu0 %v586
  %v588 = vpop.xlane.xlu0 %587
  %589 = vst.msk [vmem:[%s4] sm:$0xf] %vm583, %v588
  // Predicated region
  $region10: #{pua_forward.10} parent=0 // pred_check
    _
  $region11: #{pua_forward.10} parent=0 // pred_check_branch
    %591 = sbr.rel (0) target = $region13
  $region12: #{pua_forward.10} parent=0 // pred_region
    _
  $region13: #{pua_forward.10} parent=0 // pred_fallthru
    _
  // Predicated region
  $region14: #{pua_forward.10} parent=0 // pred_check
    _
  $region15: #{pua_forward.10} parent=0 // pred_check_branch
    %593 = sbr.rel (0) target = $region17
  $region16: #{pua_forward.10} parent=0 // pred_region
    _
  $region17: #{pua_forward.10} parent=0 // pred_fallthru
    _
  // Predicated region
  $region18: #{pua_forward.10} parent=0 // pred_check
    _
  $region19: #{pua_forward.10} parent=0 // pred_check_branch
    %595 = sbr.rel (0) target = $region21
  $region20: #{pua_forward.10} parent=0 // pred_region
    _
  $region21: #{pua_forward.10} parent=0 // pred_fallthru
    _
  // Predicated region
  $region22: #{pua_forward.10} parent=0 // pred_check
    _
  $region23: #{pua_forward.10} parent=0 // pred_check_branch
    %597 = sbr.rel (0) target = $region25
  $region24: #{pua_forward.10} parent=0 // pred_region
    _
  $region25: #{pua_forward.10} parent=0 // pred_fallthru
    _
  // Predicated region
  $region26: #{pua_forward.10} parent=0 // pred_check
    _
  $region27: #{pua_forward.10} parent=0 // pred_check_branch
    %599 = sbr.rel (0) target = $region29
  $region28: #{pua_forward.10} parent=0 // pred_region
    _
  $region29: #{pua_forward.10} parent=0 // pred_fallthru
    _
  // Predicated region
  $region30: #{pua_forward.10} parent=0 // pred_check
    _
  $region31: #{pua_forward.10} parent=0 // pred_check_branch
    %601 = sbr.rel (0) target = $region33
  $region32: #{pua_forward.10} parent=0 // pred_region
    _
  $region33: #{pua_forward.10} parent=0 // pred_fallthru
    _

// kernel: pua_forward.11
$region0: #{pua_forward.11}
  #allocation0 [shape = 'u32[]', space=smem, size = 0x4, offset = 0x4, fixed_abs, tag = 'smem constant byte address 0x4 - core index']
  #allocation1 [shape = 'u32[144,128]{1,0:T(1,128)}', space=vmem, size = 0x12000, scoped, tag = 'internal scratch']
  %s0 = inlined_call_operand.vmem [shape: f32[4,128], index: 0, kind: input, shape index: {}]
  %s1 = inlined_call_operand.vmem [shape: f32[4,1], index: 1, kind: input, shape index: {}]
  %s2 = inlined_call_operand.vmem [shape: f32[4,1], index: 2, kind: input, shape index: {}]
  %s3 = inlined_call_operand.vmem [shape: f32[4,128], index: 3, kind: input, shape index: {}]
  %s4 = inlined_call_operand.vmem [shape: f32[4,128], index: 4, kind: output, shape index: {}]
  %s5 = sld [smem:[#allocation0]]
  $region26: #{pua_forward.11} parent=0
    _
  %s7 = ssub.s32 1, %s5
  %s8 = scalar_select 0, %s7, %s5
  // Predicated region
  $region2: #{pua_forward.11} parent=0 // pred_check
    _
  $region3: #{pua_forward.11} parent=0 // pred_check_branch
    %10 = sbr.rel (0) target = $region5
  $region4: #{pua_forward.11} parent=0 // pred_region
    _
  $region5: #{pua_forward.11} parent=0 // pred_fallthru
    _
  // Predicated region
  $region6: #{pua_forward.11} parent=0 // pred_check
    _
  $region7: #{pua_forward.11} parent=0 // pred_check_branch
    %12 = sbr.rel (0) target = $region9
  $region8: #{pua_forward.11} parent=0 // pred_region
    _
  $region9: #{pua_forward.11} parent=0 // pred_fallthru
    _
  // Predicated region
  $region10: #{pua_forward.11} parent=0 // pred_check
    _
  $region11: #{pua_forward.11} parent=0 // pred_check_branch
    %14 = sbr.rel (0) target = $region13
  $region12: #{pua_forward.11} parent=0 // pred_region
    _
  $region13: #{pua_forward.11} parent=0 // pred_fallthru
    _
  // Predicated region
  $region14: #{pua_forward.11} parent=0 // pred_check
    _
  $region15: #{pua_forward.11} parent=0 // pred_check_branch
    %16 = sbr.rel (0) target = $region17
  $region16: #{pua_forward.11} parent=0 // pred_region
    _
  $region17: #{pua_forward.11} parent=0 // pred_fallthru
    _
  %v17 = vld [vmem:[%s0] sm:$0xf]
  %v18 = vld [vmem:[%s1] sm:$0xf]
  %20 = vset.pattern.permute.xlu0 0
  %21 = vperm.xlu0 %20, %v18
  %v22 = vpop.permute.xlu0 %21
  %v24 = vmul.f32 %v17, %v22
  %v25 = vld [vmem:[%s2] sm:$0xf]
  %27 = vset.pattern.permute.xlu0 0
  %28 = vperm.xlu0 %27, %v25
  %v29 = vpop.permute.xlu0 %28
  %v31 = vadd.f32 %v24, %v29
  %vm32 = vcmp.ge.f32.partialorder %v31, 0.0
  %v33 = vmul.f32 %v31, 0.2
  %v34 = vsel %vm32, %v31, %v33
  %v35 = vld [vmem:[%s3] sm:$0xf]
  %v36 = vadd.f32 %v34, %v35
  %37 = vst [vmem:[%s4] sm:$0xf] %v36
  // Predicated region
  $region18: #{pua_forward.11} parent=0 // pred_check
    _
  $region19: #{pua_forward.11} parent=0 // pred_check_branch
    %39 = sbr.rel (0) target = $region21
  $region20: #{pua_forward.11} parent=0 // pred_region
    _
  $region21: #{pua_forward.11} parent=0 // pred_fallthru
    _
  // Predicated region
  $region22: #{pua_forward.11} parent=0 // pred_check
    _
  $region23: #{pua_forward.11} parent=0 // pred_check_branch
    %41 = sbr.rel (0) target = $region25
  $region24: #{pua_forward.11} parent=0 // pred_region
    _
  $region25: #{pua_forward.11} parent=0 // pred_fallthru
    _

</llo_original>
